<compile_context>
chip_gen: v5e
topology: v5e:2x2
jax: 0.10.0
libtpu: 0.0.40
codegen_flags: <defaults>
</compile_context>

<pallas_src>
import functools

import jax
import jax.numpy as jnp
from jax.experimental import pallas as pl
from jax.experimental.pallas import tpu as pltpu


def _double_conv_kernel(x_ref, w1_ref, b1_ref, w2_ref, b2_ref, o_ref,
                        *, H, W, TH, Cin, C1, C2):
    # x_ref : (1, H+4, W+4, Cin)  whole zero-padded (pad=2) image of one batch element. Its block
    #                             index depends only on n, so it is DMA'd once per batch element
    #                             and stays VMEM-resident across the row tiles.
    # w1_ref: (9*Cin, C1) bf16    3x3 taps flattened: row index = (dy*3 + dx)*Cin + c
    # b1_ref: (1, C1)     f32
    # w2_ref: (9*C1, C2)  bf16
    # b2_ref: (1, C2)     f32
    # o_ref : (1, TH, W*C2)       lane-dense output tile holding output rows [r*TH, r*TH+TH)
    r = pl.program_id(1)
    row0 = pl.multiple_of(r * TH, TH)

    # Output rows [r*TH, r*TH+TH) need intermediate rows [r*TH-1, r*TH+TH+1), which need input
    # rows [r*TH-2, r*TH+TH+2)  ==  rows [r*TH, r*TH+TH+4) of the pad-2 input.
    xw = x_ref[0, pl.ds(row0, TH + 4), :, :]                        # (TH+4, W+4, Cin) f32

    # ---- conv1 + bias + ReLU on the extended (TH+2, W+2) window: one K=9*Cin MXU matmul ----
    x9 = jnp.concatenate(
        [xw[dy:dy + TH + 2, dx:dx + W + 2, :]
         for dy in range(3) for dx in range(3)], axis=-1)           # (TH+2, W+2, 9*Cin)
    y1 = jnp.einsum("hwk,ko->hwo", x9.astype(jnp.bfloat16), w1_ref[...],
                    preferred_element_type=jnp.float32)             # (TH+2, W+2, C1) f32 acc
    y1 = jnp.maximum(y1 + b1_ref[...], 0.0)

    # Zero the positions that correspond to conv2's zero padding (outside the valid HxW
    # intermediate): extended row m is global intermediate row r*TH-1+m; extended cols 0 and W+1
    # are always padding.
    row_ids = jax.lax.broadcasted_iota(jnp.int32, (TH + 2, W + 2, 1), 0)
    col_ids = jax.lax.broadcasted_iota(jnp.int32, (TH + 2, W + 2, 1), 1)
    g_row = row0 - 1 + row_ids
    valid = (g_row >= 0) & (g_row < H) & (col_ids >= 1) & (col_ids <= W)
    y1 = jnp.where(valid, y1, 0.0)                                  # zero-padded intermediate

    # ---- conv2 + bias + ReLU: one K=9*C1 MXU matmul ----
    p2 = jnp.concatenate(
        [y1[dy:dy + TH, dx:dx + W, :]
         for dy in range(3) for dx in range(3)], axis=-1)           # (TH, W, 9*C1)
    y2 = jnp.einsum("hwk,ko->hwo", p2.astype(jnp.bfloat16), w2_ref[...],
                    preferred_element_type=jnp.float32)             # (TH, W, C2) f32 acc
    y2 = jnp.maximum(y2 + b2_ref[...], 0.0)

    # Lane-dense (TH, W*C2) slab: spatial column v occupies lanes [v*C2, (v+1)*C2). Built with a
    # lane concat (equivalent to reshape) so the block is written with a single dense store and the
    # HBM writeback DMA is unmasked.
    o_slab = jnp.concatenate([y2[:, v, :] for v in range(W)], axis=-1)   # (TH, W*C2)
    o_ref[0] = o_slab.astype(o_ref.dtype)


def double_conv(x_nchw, w1, b1, w2, b2):
    """Forward pass of DoubleConv (NCHW in/out, matching the PyTorch module)."""
    N, Cin, H, W = x_nchw.shape
    C1 = w1.shape[0]
    C2 = w2.shape[0]

    # Row-tile height: 8 matches the f32 sublane granularity and gives grid=(N, H//8) pipeline
    # steps. For large images, re-derive per generation (v7x: 64 MiB VMEM -> smaller tiles).
    TH = 8 if H % 8 == 0 else H

    x = jnp.transpose(x_nchw, (0, 2, 3, 1))                         # NCHW -> NHWC
    xpad = jnp.pad(x, ((0, 0), (2, 2), (2, 2), (0, 0)))             # pad=2 halo for the fused pair

    # (Cout, Cin, 3, 3) -> (3, 3, Cin, Cout) -> (9*Cin, Cout); bf16 = MXU-native operand dtype.
    w1m = jnp.transpose(w1, (2, 3, 1, 0)).reshape(9 * Cin, C1).astype(jnp.bfloat16)
    w2m = jnp.transpose(w2, (2, 3, 1, 0)).reshape(9 * C1, C2).astype(jnp.bfloat16)
    b1m = b1.reshape(1, C1).astype(jnp.float32)
    b2m = b2.reshape(1, C2).astype(jnp.float32)

    kernel = functools.partial(_double_conv_kernel, H=H, W=W, TH=TH,
                               Cin=Cin, C1=C1, C2=C2)

    out = pl.pallas_call(
        kernel,
        out_shape=jax.ShapeDtypeStruct((N, H, W * C2), x_nchw.dtype),
        grid_spec=pltpu.PrefetchScalarGridSpec(
            num_scalar_prefetch=0,
            grid=(N, H // TH),
            in_specs=[
                pl.BlockSpec((1, H + 4, W + 4, Cin), lambda n, r: (n, 0, 0, 0)),
                pl.BlockSpec((9 * Cin, C1), lambda n, r: (0, 0)),
                pl.BlockSpec((1, C1), lambda n, r: (0, 0)),
                pl.BlockSpec((9 * C1, C2), lambda n, r: (0, 0)),
                pl.BlockSpec((1, C2), lambda n, r: (0, 0)),
            ],
            out_specs=pl.BlockSpec((1, TH, W * C2), lambda n, r: (n, r, 0)),
        ),
        compiler_params=pltpu.CompilerParams(
            dimension_semantics=("parallel", "parallel"),
            vmem_limit_bytes=32 * 1024 * 1024,
        ),
    )(xpad, w1m, b1m, w2m, b2m)

    out = out.reshape(N, H, W, C2)                                  # lane-dense slab -> NHWC
    return jnp.transpose(out, (0, 3, 1, 2))                         # NHWC -> NCHW


def _reference(x_nchw, w1, b1, w2, b2):
    def conv(x, w, b):
        y = jax.lax.conv_general_dilated(
            x, w, window_strides=(1, 1), padding=((1, 1), (1, 1)),
            dimension_numbers=("NCHW", "OIHW", "NCHW"))
        return jax.nn.relu(y + b[None, :, None, None])
    return conv(conv(x_nchw, w1, b1), w2, b2)


if __name__ == "__main__":
    key = jax.random.PRNGKey(0)
    N, Cin, Cout, H, W = 2, 4, 8, 16, 16

    k_x, k_w1, k_b1, k_w2, k_b2 = jax.random.split(key, 5)
    x = jax.random.normal(k_x, (N, Cin, H, W), dtype=jnp.float32)
    # deterministic synthetic parameters (shapes per nn.Conv2d(in, out, 3, padding=1))
    w1 = 0.1 * jax.random.normal(k_w1, (Cout, Cin, 3, 3), dtype=jnp.float32)
    b1 = 0.1 * jax.random.normal(k_b1, (Cout,), dtype=jnp.float32)
    w2 = 0.1 * jax.random.normal(k_w2, (Cout, Cout, 3, 3), dtype=jnp.float32)
    b2 = 0.1 * jax.random.normal(k_b2, (Cout,), dtype=jnp.float32)

    out = jax.jit(double_conv)(x, w1, b1, w2, b2)
    out = jax.block_until_ready(out)

    ref = _reference(x, w1, b1, w2, b2)
    assert out.shape == (N, Cout, H, W)
    # bf16 MXU operands (f32 accumulation) -> loosened tolerance vs. the f32 reference.
    assert jnp.allclose(out, ref, atol=5e-2, rtol=5e-2)

    print("KERNEL_OK")
</pallas_src>

<mosaic_0001>
module attributes {stable_mosaic.version = 11 : i64} {
  func.func @_double_conv_kernel(%arg0: i32, %arg1: i32, %arg2: memref<1x20x20x4xf32, #tpu.memory_space<vmem>>, %arg3: memref<36x8xbf16, #tpu.memory_space<vmem>>, %arg4: memref<1x8xf32, #tpu.memory_space<vmem>>, %arg5: memref<72x8xbf16, #tpu.memory_space<vmem>>, %arg6: memref<1x8xf32, #tpu.memory_space<vmem>>, %arg7: memref<1x8x128xf32, #tpu.memory_space<vmem>>) attributes {dimension_semantics = [#tpu.dimension_semantics<parallel>, #tpu.dimension_semantics<parallel>], iteration_bounds = array<i64: 2, 2>, scalar_prefetch = 0 : i64, scratch_operands = 0 : i64, tpu.core_type = #tpu.core_type<tc>, window_params = [{transform_indices = @transform_0, window_bounds = array<i64: 1, 20, 20, 4>}, {pipeline_mode = #tpu.pipeline_mode<synchronous>, transform_indices = @transform_1, window_bounds = array<i64: 36, 8>}, {pipeline_mode = #tpu.pipeline_mode<synchronous>, transform_indices = @transform_2, window_bounds = array<i64: 1, 8>}, {pipeline_mode = #tpu.pipeline_mode<synchronous>, transform_indices = @transform_3, window_bounds = array<i64: 72, 8>}, {pipeline_mode = #tpu.pipeline_mode<synchronous>, transform_indices = @transform_4, window_bounds = array<i64: 1, 8>}, {transform_indices = @transform_5, window_bounds = array<i64: 1, 8, 128>}]} {
    %c8_i32 = arith.constant 8 : i32
    %0 = arith.muli %arg1, %c8_i32 : i32
    %1 = tpu.assume_multiple %0, 8 : i32
    %c0 = arith.constant 0 : index
    %2 = arith.index_cast %1 : i32 to index
    %c0_0 = arith.constant 0 : index
    %c0_1 = arith.constant 0 : index
    %3 = vector.load %arg2[%c0, %2, %c0_0, %c0_1] : memref<1x20x20x4xf32, #tpu.memory_space<vmem>>, vector<1x12x20x4xf32>
    %4 = vector.shape_cast %3 : vector<1x12x20x4xf32> to vector<12x20x4xf32>
    %5 = vector.extract_strided_slice %4 {offsets = [0, 0, 0], sizes = [10, 18, 4], strides = [1, 1, 1]} : vector<12x20x4xf32> to vector<10x18x4xf32>
    %6 = vector.extract_strided_slice %4 {offsets = [0, 1, 0], sizes = [10, 18, 4], strides = [1, 1, 1]} : vector<12x20x4xf32> to vector<10x18x4xf32>
    %7 = vector.extract_strided_slice %4 {offsets = [0, 2, 0], sizes = [10, 18, 4], strides = [1, 1, 1]} : vector<12x20x4xf32> to vector<10x18x4xf32>
    %8 = vector.extract_strided_slice %4 {offsets = [1, 0, 0], sizes = [10, 18, 4], strides = [1, 1, 1]} : vector<12x20x4xf32> to vector<10x18x4xf32>
    %9 = vector.extract_strided_slice %4 {offsets = [1, 1, 0], sizes = [10, 18, 4], strides = [1, 1, 1]} : vector<12x20x4xf32> to vector<10x18x4xf32>
    %10 = vector.extract_strided_slice %4 {offsets = [1, 2, 0], sizes = [10, 18, 4], strides = [1, 1, 1]} : vector<12x20x4xf32> to vector<10x18x4xf32>
    %11 = vector.extract_strided_slice %4 {offsets = [2, 0, 0], sizes = [10, 18, 4], strides = [1, 1, 1]} : vector<12x20x4xf32> to vector<10x18x4xf32>
    %12 = vector.extract_strided_slice %4 {offsets = [2, 1, 0], sizes = [10, 18, 4], strides = [1, 1, 1]} : vector<12x20x4xf32> to vector<10x18x4xf32>
    %13 = vector.extract_strided_slice %4 {offsets = [2, 2, 0], sizes = [10, 18, 4], strides = [1, 1, 1]} : vector<12x20x4xf32> to vector<10x18x4xf32>
    %14 = tpu.concatenate %5, %6, %7, %8, %9, %10, %11, %12, %13 in 2 : vector<10x18x4xf32>, vector<10x18x4xf32>, vector<10x18x4xf32>, vector<10x18x4xf32>, vector<10x18x4xf32>, vector<10x18x4xf32>, vector<10x18x4xf32>, vector<10x18x4xf32>, vector<10x18x4xf32> -> vector<10x18x36xf32>
    %15 = arith.truncf %14 : vector<10x18x36xf32> to vector<10x18x36xbf16>
    %c0_2 = arith.constant 0 : index
    %c0_3 = arith.constant 0 : index
    %16 = vector.load %arg3[%c0_2, %c0_3] : memref<36x8xbf16, #tpu.memory_space<vmem>>, vector<36x8xbf16>
    "tpu.trace_start"() <{level = 10 : i32, message = "hwk,ko->hwo"}> : () -> ()
    %cst = arith.constant dense<0.000000e+00> : vector<10x18x8xf32>
    %17 = tpu.matmul %15, %16, %cst {dimension_numbers = #tpu.dot_dimension_numbers<[2], [0], [0, 1], [1], [0, 0, 0, 1, 1, 1], [], []>} : vector<10x18x36xbf16>, vector<36x8xbf16>, vector<10x18x8xf32> -> vector<10x18x8xf32>
    "tpu.trace_stop"() : () -> ()
    %c0_4 = arith.constant 0 : index
    %c0_5 = arith.constant 0 : index
    %18 = vector.load %arg4[%c0_4, %c0_5] : memref<1x8xf32, #tpu.memory_space<vmem>>, vector<1x8xf32>
    %19 = vector.shape_cast %18 : vector<1x8xf32> to vector<1x1x8xf32>
    %20 = vector.broadcast %19 : vector<1x1x8xf32> to vector<10x18x8xf32>
    %21 = arith.addf %17, %20 : vector<10x18x8xf32>
    %cst_6 = arith.constant 0.000000e+00 : f32
    %22 = vector.broadcast %cst_6 : f32 to vector<10x18x8xf32>
    %23 = arith.maximumf %21, %22 : vector<10x18x8xf32>
    %24 = tpu.iota {dimensions = array<i32: 0>} : vector<10x18x1xi32>
    %25 = tpu.iota {dimensions = array<i32: 1>} : vector<10x18x1xi32>
    %c1_i32 = arith.constant 1 : i32
    %26 = arith.subi %1, %c1_i32 : i32
    %27 = vector.broadcast %26 : i32 to vector<10x18x1xi32>
    %28 = arith.addi %27, %24 : vector<10x18x1xi32>
    %c0_i32 = arith.constant 0 : i32
    %29 = vector.broadcast %c0_i32 : i32 to vector<10x18x1xi32>
    %30 = arith.cmpi sge, %28, %29 : vector<10x18x1xi32>
    %c16_i32 = arith.constant 16 : i32
    %31 = vector.broadcast %c16_i32 : i32 to vector<10x18x1xi32>
    %32 = arith.cmpi slt, %28, %31 : vector<10x18x1xi32>
    %33 = arith.andi %30, %32 : vector<10x18x1xi1>
    %c1_i32_7 = arith.constant 1 : i32
    %34 = vector.broadcast %c1_i32_7 : i32 to vector<10x18x1xi32>
    %35 = arith.cmpi sge, %25, %34 : vector<10x18x1xi32>
    %36 = arith.andi %33, %35 : vector<10x18x1xi1>
    %c16_i32_8 = arith.constant 16 : i32
    %37 = vector.broadcast %c16_i32_8 : i32 to vector<10x18x1xi32>
    %38 = arith.cmpi sle, %25, %37 : vector<10x18x1xi32>
    %39 = arith.andi %36, %38 : vector<10x18x1xi1>
    %cst_9 = arith.constant 0.000000e+00 : f32
    %40 = vector.shape_cast %39 : vector<10x18x1xi1> to vector<10x18x1xi1>
    %41 = vector.broadcast %40 : vector<10x18x1xi1> to vector<10x18x8xi1>
    %42 = vector.broadcast %cst_9 : f32 to vector<10x18x8xf32>
    %43 = arith.select %41, %23, %42 : vector<10x18x8xi1>, vector<10x18x8xf32>
    %44 = vector.extract_strided_slice %43 {offsets = [0, 0, 0], sizes = [8, 16, 8], strides = [1, 1, 1]} : vector<10x18x8xf32> to vector<8x16x8xf32>
    %45 = vector.extract_strided_slice %43 {offsets = [0, 1, 0], sizes = [8, 16, 8], strides = [1, 1, 1]} : vector<10x18x8xf32> to vector<8x16x8xf32>
    %46 = vector.extract_strided_slice %43 {offsets = [0, 2, 0], sizes = [8, 16, 8], strides = [1, 1, 1]} : vector<10x18x8xf32> to vector<8x16x8xf32>
    %47 = vector.extract_strided_slice %43 {offsets = [1, 0, 0], sizes = [8, 16, 8], strides = [1, 1, 1]} : vector<10x18x8xf32> to vector<8x16x8xf32>
    %48 = vector.extract_strided_slice %43 {offsets = [1, 1, 0], sizes = [8, 16, 8], strides = [1, 1, 1]} : vector<10x18x8xf32> to vector<8x16x8xf32>
    %49 = vector.extract_strided_slice %43 {offsets = [1, 2, 0], sizes = [8, 16, 8], strides = [1, 1, 1]} : vector<10x18x8xf32> to vector<8x16x8xf32>
    %50 = vector.extract_strided_slice %43 {offsets = [2, 0, 0], sizes = [8, 16, 8], strides = [1, 1, 1]} : vector<10x18x8xf32> to vector<8x16x8xf32>
    %51 = vector.extract_strided_slice %43 {offsets = [2, 1, 0], sizes = [8, 16, 8], strides = [1, 1, 1]} : vector<10x18x8xf32> to vector<8x16x8xf32>
    %52 = vector.extract_strided_slice %43 {offsets = [2, 2, 0], sizes = [8, 16, 8], strides = [1, 1, 1]} : vector<10x18x8xf32> to vector<8x16x8xf32>
    %53 = tpu.concatenate %44, %45, %46, %47, %48, %49, %50, %51, %52 in 2 : vector<8x16x8xf32>, vector<8x16x8xf32>, vector<8x16x8xf32>, vector<8x16x8xf32>, vector<8x16x8xf32>, vector<8x16x8xf32>, vector<8x16x8xf32>, vector<8x16x8xf32>, vector<8x16x8xf32> -> vector<8x16x72xf32>
    %54 = arith.truncf %53 : vector<8x16x72xf32> to vector<8x16x72xbf16>
    %c0_10 = arith.constant 0 : index
    %c0_11 = arith.constant 0 : index
    %55 = vector.load %arg5[%c0_10, %c0_11] : memref<72x8xbf16, #tpu.memory_space<vmem>>, vector<72x8xbf16>
    "tpu.trace_start"() <{level = 10 : i32, message = "hwk,ko->hwo"}> : () -> ()
    %cst_12 = arith.constant dense<0.000000e+00> : vector<8x16x8xf32>
    %56 = tpu.matmul %54, %55, %cst_12 {dimension_numbers = #tpu.dot_dimension_numbers<[2], [0], [0, 1], [1], [0, 0, 0, 1, 1, 1], [], []>} : vector<8x16x72xbf16>, vector<72x8xbf16>, vector<8x16x8xf32> -> vector<8x16x8xf32>
    "tpu.trace_stop"() : () -> ()
    %c0_13 = arith.constant 0 : index
    %c0_14 = arith.constant 0 : index
    %57 = vector.load %arg6[%c0_13, %c0_14] : memref<1x8xf32, #tpu.memory_space<vmem>>, vector<1x8xf32>
    %58 = vector.shape_cast %57 : vector<1x8xf32> to vector<1x1x8xf32>
    %59 = vector.broadcast %58 : vector<1x1x8xf32> to vector<8x16x8xf32>
    %60 = arith.addf %56, %59 : vector<8x16x8xf32>
    %cst_15 = arith.constant 0.000000e+00 : f32
    %61 = vector.broadcast %cst_15 : f32 to vector<8x16x8xf32>
    %62 = arith.maximumf %60, %61 : vector<8x16x8xf32>
    %63 = vector.extract_strided_slice %62 {offsets = [0, 0, 0], sizes = [8, 1, 8], strides = [1, 1, 1]} : vector<8x16x8xf32> to vector<8x1x8xf32>
    %64 = vector.shape_cast %63 : vector<8x1x8xf32> to vector<8x8xf32>
    %65 = vector.extract_strided_slice %62 {offsets = [0, 1, 0], sizes = [8, 1, 8], strides = [1, 1, 1]} : vector<8x16x8xf32> to vector<8x1x8xf32>
    %66 = vector.shape_cast %65 : vector<8x1x8xf32> to vector<8x8xf32>
    %67 = vector.extract_strided_slice %62 {offsets = [0, 2, 0], sizes = [8, 1, 8], strides = [1, 1, 1]} : vector<8x16x8xf32> to vector<8x1x8xf32>
    %68 = vector.shape_cast %67 : vector<8x1x8xf32> to vector<8x8xf32>
    %69 = vector.extract_strided_slice %62 {offsets = [0, 3, 0], sizes = [8, 1, 8], strides = [1, 1, 1]} : vector<8x16x8xf32> to vector<8x1x8xf32>
    %70 = vector.shape_cast %69 : vector<8x1x8xf32> to vector<8x8xf32>
    %71 = vector.extract_strided_slice %62 {offsets = [0, 4, 0], sizes = [8, 1, 8], strides = [1, 1, 1]} : vector<8x16x8xf32> to vector<8x1x8xf32>
    %72 = vector.shape_cast %71 : vector<8x1x8xf32> to vector<8x8xf32>
    %73 = vector.extract_strided_slice %62 {offsets = [0, 5, 0], sizes = [8, 1, 8], strides = [1, 1, 1]} : vector<8x16x8xf32> to vector<8x1x8xf32>
    %74 = vector.shape_cast %73 : vector<8x1x8xf32> to vector<8x8xf32>
    %75 = vector.extract_strided_slice %62 {offsets = [0, 6, 0], sizes = [8, 1, 8], strides = [1, 1, 1]} : vector<8x16x8xf32> to vector<8x1x8xf32>
    %76 = vector.shape_cast %75 : vector<8x1x8xf32> to vector<8x8xf32>
    %77 = vector.extract_strided_slice %62 {offsets = [0, 7, 0], sizes = [8, 1, 8], strides = [1, 1, 1]} : vector<8x16x8xf32> to vector<8x1x8xf32>
    %78 = vector.shape_cast %77 : vector<8x1x8xf32> to vector<8x8xf32>
    %79 = vector.extract_strided_slice %62 {offsets = [0, 8, 0], sizes = [8, 1, 8], strides = [1, 1, 1]} : vector<8x16x8xf32> to vector<8x1x8xf32>
    %80 = vector.shape_cast %79 : vector<8x1x8xf32> to vector<8x8xf32>
    %81 = vector.extract_strided_slice %62 {offsets = [0, 9, 0], sizes = [8, 1, 8], strides = [1, 1, 1]} : vector<8x16x8xf32> to vector<8x1x8xf32>
    %82 = vector.shape_cast %81 : vector<8x1x8xf32> to vector<8x8xf32>
    %83 = vector.extract_strided_slice %62 {offsets = [0, 10, 0], sizes = [8, 1, 8], strides = [1, 1, 1]} : vector<8x16x8xf32> to vector<8x1x8xf32>
    %84 = vector.shape_cast %83 : vector<8x1x8xf32> to vector<8x8xf32>
    %85 = vector.extract_strided_slice %62 {offsets = [0, 11, 0], sizes = [8, 1, 8], strides = [1, 1, 1]} : vector<8x16x8xf32> to vector<8x1x8xf32>
    %86 = vector.shape_cast %85 : vector<8x1x8xf32> to vector<8x8xf32>
    %87 = vector.extract_strided_slice %62 {offsets = [0, 12, 0], sizes = [8, 1, 8], strides = [1, 1, 1]} : vector<8x16x8xf32> to vector<8x1x8xf32>
    %88 = vector.shape_cast %87 : vector<8x1x8xf32> to vector<8x8xf32>
    %89 = vector.extract_strided_slice %62 {offsets = [0, 13, 0], sizes = [8, 1, 8], strides = [1, 1, 1]} : vector<8x16x8xf32> to vector<8x1x8xf32>
    %90 = vector.shape_cast %89 : vector<8x1x8xf32> to vector<8x8xf32>
    %91 = vector.extract_strided_slice %62 {offsets = [0, 14, 0], sizes = [8, 1, 8], strides = [1, 1, 1]} : vector<8x16x8xf32> to vector<8x1x8xf32>
    %92 = vector.shape_cast %91 : vector<8x1x8xf32> to vector<8x8xf32>
    %93 = vector.extract_strided_slice %62 {offsets = [0, 15, 0], sizes = [8, 1, 8], strides = [1, 1, 1]} : vector<8x16x8xf32> to vector<8x1x8xf32>
    %94 = vector.shape_cast %93 : vector<8x1x8xf32> to vector<8x8xf32>
    %95 = tpu.concatenate %64, %66, %68, %70, %72, %74, %76, %78, %80, %82, %84, %86, %88, %90, %92, %94 in 1 : vector<8x8xf32>, vector<8x8xf32>, vector<8x8xf32>, vector<8x8xf32>, vector<8x8xf32>, vector<8x8xf32>, vector<8x8xf32>, vector<8x8xf32>, vector<8x8xf32>, vector<8x8xf32>, vector<8x8xf32>, vector<8x8xf32>, vector<8x8xf32>, vector<8x8xf32>, vector<8x8xf32>, vector<8x8xf32> -> vector<8x128xf32>
    %c0_16 = arith.constant 0 : index
    %c0_17 = arith.constant 0 : index
    %c0_18 = arith.constant 0 : index
    %96 = vector.load %arg7[%c0_16, %c0_17, %c0_18] : memref<1x8x128xf32, #tpu.memory_space<vmem>>, vector<1x8x128xf32>
    %97 = vector.shape_cast %96 : vector<1x8x128xf32> to vector<8x128xf32>
    %98 = vector.shape_cast %95 : vector<8x128xf32> to vector<1x8x128xf32>
    tpu.vector_store %arg7[%c0_16, %c0_17, %c0_18], %98 {strides = array<i32>} : memref<1x8x128xf32, #tpu.memory_space<vmem>>, vector<1x8x128xf32>,
    return
  }
  func.func @transform_0(%arg0: i32, %arg1: i32) -> (i32, i32, i32, i32) {
    %c0_i32 = arith.constant 0 : i32
    %c0_i32_0 = arith.constant 0 : i32
    %c0_i32_1 = arith.constant 0 : i32
    %c0_i32_2 = arith.constant 0 : i32
    return %arg0, %c0_i32, %c0_i32_0, %c0_i32_1 : i32, i32, i32, i32
  }
  func.func @transform_1(%arg0: i32, %arg1: i32) -> (i32, i32) {
    %c0_i32 = arith.constant 0 : i32
    %c0_i32_0 = arith.constant 0 : i32
    %c0_i32_1 = arith.constant 0 : i32
    return %c0_i32, %c0_i32_0 : i32, i32
  }
  func.func @transform_2(%arg0: i32, %arg1: i32) -> (i32, i32) {
    %c0_i32 = arith.constant 0 : i32
    %c0_i32_0 = arith.constant 0 : i32
    %c0_i32_1 = arith.constant 0 : i32
    return %c0_i32, %c0_i32_0 : i32, i32
  }
  func.func @transform_3(%arg0: i32, %arg1: i32) -> (i32, i32) {
    %c0_i32 = arith.constant 0 : i32
    %c0_i32_0 = arith.constant 0 : i32
    %c0_i32_1 = arith.constant 0 : i32
    return %c0_i32, %c0_i32_0 : i32, i32
  }
  func.func @transform_4(%arg0: i32, %arg1: i32) -> (i32, i32) {
    %c0_i32 = arith.constant 0 : i32
    %c0_i32_0 = arith.constant 0 : i32
    %c0_i32_1 = arith.constant 0 : i32
    return %c0_i32, %c0_i32_0 : i32, i32
  }
  func.func @transform_5(%arg0: i32, %arg1: i32) -> (i32, i32, i32) {
    %c0_i32 = arith.constant 0 : i32
    %c0_i32_0 = arith.constant 0 : i32
    return %arg0, %arg1, %c0_i32 : i32, i32, i32
  }
}

</mosaic_0001>

<llo_original>
// kernel: double_conv.1
$region0: #{double_conv.1}
  #allocation0 [shape = 'u32[]', space=smem, size = 0x4, offset = 0x4, fixed_abs, tag = 'smem constant byte address 0x4 - core index']
  #allocation1 [shape = 'u32[72,128]{1,0:T(1,128)}', space=vmem, size = 0x9000, scoped, tag = 'internal scratch']
  %s0 = inlined_call_operand.vmem [shape: f32[2,20,20,4], index: 0, kind: input, shape index: {}]
  %s1 = inlined_call_operand.vmem [shape: bf16[36,8], index: 1, kind: input, shape index: {}]
  %s2 = inlined_call_operand.vmem [shape: f32[1,8], index: 2, kind: input, shape index: {}]
  %s3 = inlined_call_operand.vmem [shape: bf16[72,8], index: 3, kind: input, shape index: {}]
  %s4 = inlined_call_operand.vmem [shape: f32[1,8], index: 4, kind: input, shape index: {}]
  %s5 = inlined_call_operand.vmem [shape: f32[2,16,128], index: 5, kind: output, shape index: {}]
  %s6 = sld [smem:[#allocation0]]
  $region53: #{double_conv.1} parent=0
    _
  %s8 = ssub.s32 1, %s6
  %s9 = scalar_select 0, %s8, %s6
  loop: start=0, step=1, limit=6
  $region2: #{double_conv.1} parent=0 // loop_pre_header
    _
  $region3: #{double_conv.1} parent=0 // loop_header
    %s11 = sphi 0, %s15
    %p12 = scmp.ge.s32.totalorder %s11, 6
    %s18 = sphi 0, %s30
    %s19 = sphi 0, %s26
    %s20 = sphi 0, %s18
    %s21 = sphi 0, %s19
    %s22 = sphi 0, %s20
    %s23 = sphi 0, %s21
    %s33 = sphi 0, %s35
    %s36 = sphi 0, %s33
    %s37 = sphi 0, %s36
    %s53 = sphi 0, %s37
    %s57 = sphi 0, %s57
    %s59 = sphi 0, %s57
    %s60 = sphi 0, %s59
    %s74 = sphi 0, %s60
    %s78 = sphi 0, %s78
    %s80 = sphi 0, %s78
    %s81 = sphi 0, %s80
    %s95 = sphi 0, %s81
    %s99 = sphi 0, %s99
    %s101 = sphi 0, %s99
    %s102 = sphi 0, %s101
    %s116 = sphi 0, %s102
    %s120 = sphi 0, %s120
    %s122 = sphi 0, %s120
    %s123 = sphi 0, %s122
    %s137 = sphi 0, %s123
    %s145 = sphi 0, %s147
    %s148 = sphi 0, %s145
    %s149 = sphi 0, %s148
    %s165 = sphi 0, %s149
  $region4: #{double_conv.1} parent=0 // loop_header_branch
    %14 = sbr.rel (%p12) target = $region8
  $region5: #{double_conv.1} parent=0 // loop_body
    %s16 = ssub.s32 %s11, 1
    %s17 = ssub.s32 %s11, 2
    %s24 = sadd.s32 1, %s19
    %p25 = scmp.ge.s32.totalorder %s24, 2
    %s26 = scalar_select %p25, 0, %s24
    %s27 = sadd.s32 1, %s18
    %s28 = scalar_select %p25, %s27, %s18
    %p29 = scmp.ge.s32.totalorder %s28, 2
    %s30 = scalar_select %p29, 0, %s28
    %s31 = ssub.s32 %s18, %s30
    %p32 = scmp.eq.s32.totalorder %s31, 0
    %s34 = sadd.s32 %s33, 1
    %s35 = scalar_select %p32, %s33, %s34
    %p38 = pneg %p32
    %p39 = scmp.eq.s32.totalorder %s11, 3
    %p40 = por %p38, %p39
    %p41 = scmp.ne.s32.totalorder %s33, %s36
    %p42 = scmp.eq.s32.totalorder %s11, 0
    %p43 = por %p41, %p42
    %p44 = scmp.ne.s32.totalorder %s33, %s36
    %p45 = scmp.eq.s32.totalorder %s16, 3
    %p46 = por %p44, %p45
    %p47 = scmp.ne.s32.totalorder %s36, %s37
    %p48 = scmp.eq.s32.totalorder %s16, 0
    %p49 = por %p47, %p48
    %p50 = scmp.ne.s32.totalorder %s36, %s37
    %p51 = scmp.eq.s32.totalorder %s17, 3
    %p52 = por %p50, %p51
    %p54 = scmp.ne.s32.totalorder %s37, %s53
    %p55 = scmp.eq.s32.totalorder %s17, 0
    %p56 = por %p54, %p55
    %s58 = sadd.s32 %s57, 1
    %p61 = scmp.eq.s32.totalorder %s11, 3
    %p62 = scmp.ne.s32.totalorder %s57, %s59
    %p63 = scmp.eq.s32.totalorder %s11, 0
    %p64 = por %p62, %p63
    %p65 = scmp.ne.s32.totalorder %s57, %s59
    %p66 = scmp.eq.s32.totalorder %s16, 3
    %p67 = por %p65, %p66
    %p68 = scmp.ne.s32.totalorder %s59, %s60
    %p69 = scmp.eq.s32.totalorder %s16, 0
    %p70 = por %p68, %p69
    %p71 = scmp.ne.s32.totalorder %s59, %s60
    %p72 = scmp.eq.s32.totalorder %s17, 3
    %p73 = por %p71, %p72
    %p75 = scmp.ne.s32.totalorder %s60, %s74
    %p76 = scmp.eq.s32.totalorder %s17, 0
    %p77 = por %p75, %p76
    %s79 = sadd.s32 %s78, 1
    %p82 = scmp.eq.s32.totalorder %s11, 3
    %p83 = scmp.ne.s32.totalorder %s78, %s80
    %p84 = scmp.eq.s32.totalorder %s11, 0
    %p85 = por %p83, %p84
    %p86 = scmp.ne.s32.totalorder %s78, %s80
    %p87 = scmp.eq.s32.totalorder %s16, 3
    %p88 = por %p86, %p87
    %p89 = scmp.ne.s32.totalorder %s80, %s81
    %p90 = scmp.eq.s32.totalorder %s16, 0
    %p91 = por %p89, %p90
    %p92 = scmp.ne.s32.totalorder %s80, %s81
    %p93 = scmp.eq.s32.totalorder %s17, 3
    %p94 = por %p92, %p93
    %p96 = scmp.ne.s32.totalorder %s81, %s95
    %p97 = scmp.eq.s32.totalorder %s17, 0
    %p98 = por %p96, %p97
    %s100 = sadd.s32 %s99, 1
    %p103 = scmp.eq.s32.totalorder %s11, 3
    %p104 = scmp.ne.s32.totalorder %s99, %s101
    %p105 = scmp.eq.s32.totalorder %s11, 0
    %p106 = por %p104, %p105
    %p107 = scmp.ne.s32.totalorder %s99, %s101
    %p108 = scmp.eq.s32.totalorder %s16, 3
    %p109 = por %p107, %p108
    %p110 = scmp.ne.s32.totalorder %s101, %s102
    %p111 = scmp.eq.s32.totalorder %s16, 0
    %p112 = por %p110, %p111
    %p113 = scmp.ne.s32.totalorder %s101, %s102
    %p114 = scmp.eq.s32.totalorder %s17, 3
    %p115 = por %p113, %p114
    %p117 = scmp.ne.s32.totalorder %s102, %s116
    %p118 = scmp.eq.s32.totalorder %s17, 0
    %p119 = por %p117, %p118
    %s121 = sadd.s32 %s120, 1
    %p124 = scmp.eq.s32.totalorder %s11, 3
    %p125 = scmp.ne.s32.totalorder %s120, %s122
    %p126 = scmp.eq.s32.totalorder %s11, 0
    %p127 = por %p125, %p126
    %p128 = scmp.ne.s32.totalorder %s120, %s122
    %p129 = scmp.eq.s32.totalorder %s16, 3
    %p130 = por %p128, %p129
    %p131 = scmp.ne.s32.totalorder %s122, %s123
    %p132 = scmp.eq.s32.totalorder %s16, 0
    %p133 = por %p131, %p132
    %p134 = scmp.ne.s32.totalorder %s122, %s123
    %p135 = scmp.eq.s32.totalorder %s17, 3
    %p136 = por %p134, %p135
    %p138 = scmp.ne.s32.totalorder %s123, %s137
    %p139 = scmp.eq.s32.totalorder %s17, 0
    %p140 = por %p138, %p139
    %s141 = ssub.s32 %s18, %s30
    %s142 = ssub.s32 %s19, %s26
    %s143 = sor.u32 %s141, %s142
    %p144 = scmp.eq.s32.totalorder %s143, 0
    %s146 = sadd.s32 %s145, 1
    %s147 = scalar_select %p144, %s145, %s146
    %p150 = pneg %p144
    %p151 = scmp.eq.s32.totalorder %s11, 3
    %p152 = por %p150, %p151
    %p153 = scmp.ne.s32.totalorder %s145, %s148
    %p154 = scmp.eq.s32.totalorder %s11, 0
    %p155 = por %p153, %p154
    %p156 = scmp.ne.s32.totalorder %s145, %s148
    %p157 = scmp.eq.s32.totalorder %s16, 3
    %p158 = por %p156, %p157
    %p159 = scmp.ne.s32.totalorder %s148, %s149
    %p160 = scmp.eq.s32.totalorder %s16, 0
    %p161 = por %p159, %p160
    %p162 = scmp.ne.s32.totalorder %s148, %s149
    %p163 = scmp.eq.s32.totalorder %s17, 3
    %p164 = por %p162, %p163
    %p166 = scmp.ne.s32.totalorder %s149, %s165
    %p167 = scmp.eq.s32.totalorder %s17, 0
    %p168 = por %p166, %p167
    %p169 = scmp.le.s32.totalorder 1, %s11
    %p170 = scmp.lt.s32.totalorder %s11, 5
    %p171 = pnand %p169, %p170
    %p172 = pneg %p171
    // Predicated region
    $region9: #{double_conv.1} parent=5 // pred_check
      _
    $region10: #{double_conv.1} parent=5 // pred_check_branch
      %174 = sbr.rel (%p171) target = $region12
    $region11: #{double_conv.1} parent=5 // pred_region
      %s175 = ssub.s32 %s11, 1
      // Predicated region
      $region13: #{double_conv.1} parent=11 // pred_check
        %p176 = pneg %p70
      $region14: #{double_conv.1} parent=11 // pred_check_branch
        %178 = sbr.rel (%p176) target = $region16
      $region15: #{double_conv.1} parent=11 // pred_region
        _
      $region16: #{double_conv.1} parent=11 // pred_fallthru
        _
      // Predicated region
      $region17: #{double_conv.1} parent=11 // pred_check
        %p179 = pneg %p91
      $region18: #{double_conv.1} parent=11 // pred_check_branch
        %181 = sbr.rel (%p179) target = $region20
      $region19: #{double_conv.1} parent=11 // pred_region
        _
      $region20: #{double_conv.1} parent=11 // pred_fallthru
        _
      // Predicated region
      $region21: #{double_conv.1} parent=11 // pred_check
        %p182 = pneg %p112
      $region22: #{double_conv.1} parent=11 // pred_check_branch
        %184 = sbr.rel (%p182) target = $region24
      $region23: #{double_conv.1} parent=11 // pred_region
        _
      $region24: #{double_conv.1} parent=11 // pred_fallthru
        _
      // Predicated region
      $region25: #{double_conv.1} parent=11 // pred_check
        %p185 = pneg %p133
      $region26: #{double_conv.1} parent=11 // pred_check_branch
        %187 = sbr.rel (%p185) target = $region28
      $region27: #{double_conv.1} parent=11 // pred_region
        _
      $region28: #{double_conv.1} parent=11 // pred_fallthru
        _
    $region12: #{double_conv.1} parent=5 // pred_fallthru
      _
    %p188 = scmp.lt.s32.totalorder %s11, 4
    // Predicated region
    $region29: #{double_conv.1} parent=5 // pred_check
      %p189 = pneg %p188
    $region30: #{double_conv.1} parent=5 // pred_check_branch
      %191 = sbr.rel (%p189) target = $region32
    $region31: #{double_conv.1} parent=5 // pred_region
      // Predicated region
      $region33: #{double_conv.1} parent=31 // pred_check
        %p192 = pneg %p43
      $region34: #{double_conv.1} parent=31 // pred_check_branch
        %194 = sbr.rel (%p192) target = $region36
      $region35: #{double_conv.1} parent=31 // pred_region
        %p195 = scmp.lt.s32.totalorder %s18, 1
        %s196 = scalar_select %p195, %s18, 1
        %s197 = smul.addr %s196, 60
        %s198 = smul.addr %s197, 8
        %s199 = scalar_lea.vmem %s0, %s198
      $region36: #{double_conv.1} parent=31 // pred_fallthru
        _
    $region32: #{double_conv.1} parent=5 // pred_fallthru
      _
    %p200 = scmp.le.s32.totalorder 1, %s11
    %p201 = scmp.lt.s32.totalorder %s11, 5
    %p202 = pnand %p200, %p201
    %p203 = pneg %p202
    // Predicated region
    $region37: #{double_conv.1} parent=5 // pred_check
      _
    $region38: #{double_conv.1} parent=5 // pred_check_branch
      %205 = sbr.rel (%p202) target = $region40
    $region39: #{double_conv.1} parent=5 // pred_region
      %s206 = ssub.s32 %s11, 1
      %p207 = scmp.lt.s32.totalorder %s20, 1
      %s208 = scalar_select %p207, %s20, 1
      %s209 = smul.addr %s208, 60
      %s210 = smul.addr %s209, 8
      %s211 = scalar_lea.vmem %s0, %s210
      %p212 = pneg %p49
      %p213 = pneg %p46
      %p214 = pneg %p70
      %p215 = pneg %p67
      %p216 = pneg %p91
      %p217 = pneg %p88
      %p218 = pneg %p112
      %p219 = pneg %p109
      %p220 = pneg %p133
      %p221 = pneg %p130
      %p222 = pneg %p161
      %p223 = pneg %p158
      %p224 = scmp.lt.s32.totalorder %s20, 1
      %s225 = scalar_select %p224, %s20, 1
      %p226 = scmp.lt.s32.totalorder %s21, 1
      %s227 = scalar_select %p226, %s21, 1
      %s228 = smul.addr %s225, 2
      %s229 = sadd.s32 %s227, %s228
      %s230 = smul.addr %s229, 8
      %s231 = scalar_lea.vmem %s5, %s230
      %p232 = scmp.lt.s32.totalorder %s20, 1
      %s233 = scalar_select %p232, %s20, 1
      %s234 = smul.addr %s233, 60
      %s235 = smul.addr %s234, 8
      %s236 = scalar_lea.vmem %s0, %s235
      %p237 = scmp.lt.s32.totalorder %s20, 1
      %s238 = scalar_select %p237, %s20, 1
      %p239 = scmp.lt.s32.totalorder %s21, 1
      %s240 = scalar_select %p239, %s21, 1
      %s241 = smul.addr %s238, 2
      %s242 = sadd.s32 %s240, %s241
      %s243 = smul.addr %s242, 8
      %s244 = scalar_lea.vmem %s5, %s243
      %s246 = smul.u32 %s21, 8
      %s247 = smul.u32 %s246, 24
      %s248 = scalar_lea.vmem %s236, %s247
      %v249 = vld [vmem:[%s248] sm:$0xff]
      %v250 = vld [vmem:[%s248 + $0x8] sm:$0xff]
      %v251 = vld [vmem:[%s248 + $0x10] sm:$0xf]
      %v252 = vld [vmem:[%s248 + $0x18] sm:$0xff]
      %v253 = vld [vmem:[%s248 + $0x20] sm:$0xff]
      %v254 = vld [vmem:[%s248 + $0x28] sm:$0xf]
      %v255 = vld [vmem:[%s248 + $0x30] sm:$0xff]
      %v256 = vld [vmem:[%s248 + $0x38] sm:$0xff]
      %v257 = vld [vmem:[%s248 + $0x40] sm:$0xf]
      %v258 = vld [vmem:[%s248 + $0x48] sm:$0xff]
      %v259 = vld [vmem:[%s248 + $0x50] sm:$0xff]
      %v260 = vld [vmem:[%s248 + $0x58] sm:$0xf]
      %v261 = vld [vmem:[%s248 + $0x60] sm:$0xff]
      %v262 = vld [vmem:[%s248 + $0x68] sm:$0xff]
      %v263 = vld [vmem:[%s248 + $0x70] sm:$0xf]
      %v264 = vld [vmem:[%s248 + $0x78] sm:$0xff]
      %v265 = vld [vmem:[%s248 + $0x80] sm:$0xff]
      %v266 = vld [vmem:[%s248 + $0x88] sm:$0xf]
      %v267 = vld [vmem:[%s248 + $0x90] sm:$0xff]
      %v268 = vld [vmem:[%s248 + $0x98] sm:$0xff]
      %v269 = vld [vmem:[%s248 + $0xa0] sm:$0xf]
      %v270 = vld [vmem:[%s248 + $0xa8] sm:$0xff]
      %v271 = vld [vmem:[%s248 + $0xb0] sm:$0xff]
      %v272 = vld [vmem:[%s248 + $0xb8] sm:$0xf]
      %v273 = vld [vmem:[%s248 + $0xc0] sm:$0xff]
      %v274 = vld [vmem:[%s248 + $0xc8] sm:$0xff]
      %v275 = vld [vmem:[%s248 + $0xd0] sm:$0xf]
      %v276 = vld [vmem:[%s248 + $0xd8] sm:$0xff]
      %v277 = vld [vmem:[%s248 + $0xe0] sm:$0xff]
      %v278 = vld [vmem:[%s248 + $0xe8] sm:$0xf]
      %v279 = vld [vmem:[%s248 + $0xf0] sm:$0xff]
      %v280 = vld [vmem:[%s248 + $0xf8] sm:$0xff]
      %v281 = vld [vmem:[%s248 + $0x100] sm:$0xf]
      %v282 = vld [vmem:[%s248 + $0x108] sm:$0xff]
      %v283 = vld [vmem:[%s248 + $0x110] sm:$0xff]
      %v284 = vld [vmem:[%s248 + $0x118] sm:$0xf]
      %vm315 = vcmask 1046528
      %v316 = vrot.slane %v249, 1
      %v317 = vrot.slane %v250, 1
      %v318 = vsel %vm315, %v316, %v317
      %v319 = vrot.slane %v251, 1
      %v320 = vsel %vm315, %v317, %v319
      %v321 = vrot.slane %v252, 1
      %v322 = vrot.slane %v253, 1
      %v323 = vsel %vm315, %v321, %v322
      %v324 = vrot.slane %v254, 1
      %v325 = vsel %vm315, %v322, %v324
      %v326 = vrot.slane %v255, 1
      %v327 = vrot.slane %v256, 1
      %v328 = vsel %vm315, %v326, %v327
      %v329 = vrot.slane %v257, 1
      %v330 = vsel %vm315, %v327, %v329
      %v331 = vrot.slane %v258, 1
      %v332 = vrot.slane %v259, 1
      %v333 = vsel %vm315, %v331, %v332
      %v334 = vrot.slane %v260, 1
      %v335 = vsel %vm315, %v332, %v334
      %v336 = vrot.slane %v261, 1
      %v337 = vrot.slane %v262, 1
      %v338 = vsel %vm315, %v336, %v337
      %v339 = vrot.slane %v263, 1
      %v340 = vsel %vm315, %v337, %v339
      %v341 = vrot.slane %v264, 1
      %v342 = vrot.slane %v265, 1
      %v343 = vsel %vm315, %v341, %v342
      %v344 = vrot.slane %v266, 1
      %v345 = vsel %vm315, %v342, %v344
      %v346 = vrot.slane %v267, 1
      %v347 = vrot.slane %v268, 1
      %v348 = vsel %vm315, %v346, %v347
      %v349 = vrot.slane %v269, 1
      %v350 = vsel %vm315, %v347, %v349
      %v351 = vrot.slane %v270, 1
      %v352 = vrot.slane %v271, 1
      %v353 = vsel %vm315, %v351, %v352
      %v354 = vrot.slane %v272, 1
      %v355 = vsel %vm315, %v352, %v354
      %v356 = vrot.slane %v273, 1
      %v357 = vrot.slane %v274, 1
      %v358 = vsel %vm315, %v356, %v357
      %v359 = vrot.slane %v275, 1
      %v360 = vsel %vm315, %v357, %v359
      %v361 = vrot.slane %v276, 1
      %v362 = vrot.slane %v277, 1
      %v363 = vsel %vm315, %v361, %v362
      %v364 = vrot.slane %v278, 1
      %v365 = vsel %vm315, %v362, %v364
      %366 = vrot.lane.b32.xlu0 %v318, 4
      %v367 = vpop.permute.xlu0 %366
      %368 = vrot.lane.b32.xlu0 %v320, 4
      %v369 = vpop.permute.xlu0 %368
      %370 = vrot.lane.b32.xlu0 %v319, 4
      %v371 = vpop.permute.xlu0 %370
      %372 = vrot.lane.b32.xlu0 %v323, 4
      %v373 = vpop.permute.xlu0 %372
      %374 = vrot.lane.b32.xlu0 %v325, 4
      %v375 = vpop.permute.xlu0 %374
      %376 = vrot.lane.b32.xlu0 %v324, 4
      %v377 = vpop.permute.xlu0 %376
      %378 = vrot.lane.b32.xlu0 %v328, 4
      %v379 = vpop.permute.xlu0 %378
      %380 = vrot.lane.b32.xlu0 %v330, 4
      %v381 = vpop.permute.xlu0 %380
      %382 = vrot.lane.b32.xlu0 %v329, 4
      %v383 = vpop.permute.xlu0 %382
      %384 = vrot.lane.b32.xlu0 %v333, 4
      %v385 = vpop.permute.xlu0 %384
      %386 = vrot.lane.b32.xlu0 %v335, 4
      %v387 = vpop.permute.xlu0 %386
      %388 = vrot.lane.b32.xlu0 %v334, 4
      %v389 = vpop.permute.xlu0 %388
      %390 = vrot.lane.b32.xlu0 %v338, 4
      %v391 = vpop.permute.xlu0 %390
      %392 = vrot.lane.b32.xlu0 %v340, 4
      %v393 = vpop.permute.xlu0 %392
      %394 = vrot.lane.b32.xlu0 %v339, 4
      %v395 = vpop.permute.xlu0 %394
      %396 = vrot.lane.b32.xlu0 %v343, 4
      %v397 = vpop.permute.xlu0 %396
      %398 = vrot.lane.b32.xlu0 %v345, 4
      %v399 = vpop.permute.xlu0 %398
      %400 = vrot.lane.b32.xlu0 %v344, 4
      %v401 = vpop.permute.xlu0 %400
      %402 = vrot.lane.b32.xlu0 %v348, 4
      %v403 = vpop.permute.xlu0 %402
      %404 = vrot.lane.b32.xlu0 %v350, 4
      %v405 = vpop.permute.xlu0 %404
      %406 = vrot.lane.b32.xlu0 %v349, 4
      %v407 = vpop.permute.xlu0 %406
      %408 = vrot.lane.b32.xlu0 %v353, 4
      %v409 = vpop.permute.xlu0 %408
      %410 = vrot.lane.b32.xlu0 %v355, 4
      %v411 = vpop.permute.xlu0 %410
      %412 = vrot.lane.b32.xlu0 %v354, 4
      %v413 = vpop.permute.xlu0 %412
      %414 = vrot.lane.b32.xlu0 %v358, 4
      %v415 = vpop.permute.xlu0 %414
      %416 = vrot.lane.b32.xlu0 %v360, 4
      %v417 = vpop.permute.xlu0 %416
      %418 = vrot.lane.b32.xlu0 %v359, 4
      %v419 = vpop.permute.xlu0 %418
      %420 = vrot.lane.b32.xlu0 %v363, 4
      %v421 = vpop.permute.xlu0 %420
      %422 = vrot.lane.b32.xlu0 %v365, 4
      %v423 = vpop.permute.xlu0 %422
      %424 = vrot.lane.b32.xlu0 %v364, 4
      %v425 = vpop.permute.xlu0 %424
      %vm456 = vcmask 1045504
      %v457 = vrot.slane %v249, 2
      %v458 = vrot.slane %v250, 2
      %v459 = vsel %vm456, %v457, %v458
      %v460 = vrot.slane %v251, 2
      %v461 = vsel %vm456, %v458, %v460
      %v462 = vrot.slane %v252, 2
      %v463 = vrot.slane %v253, 2
      %v464 = vsel %vm456, %v462, %v463
      %v465 = vrot.slane %v254, 2
      %v466 = vsel %vm456, %v463, %v465
      %v467 = vrot.slane %v255, 2
      %v468 = vrot.slane %v256, 2
      %v469 = vsel %vm456, %v467, %v468
      %v470 = vrot.slane %v257, 2
      %v471 = vsel %vm456, %v468, %v470
      %v472 = vrot.slane %v258, 2
      %v473 = vrot.slane %v259, 2
      %v474 = vsel %vm456, %v472, %v473
      %v475 = vrot.slane %v260, 2
      %v476 = vsel %vm456, %v473, %v475
      %v477 = vrot.slane %v261, 2
      %v478 = vrot.slane %v262, 2
      %v479 = vsel %vm456, %v477, %v478
      %v480 = vrot.slane %v263, 2
      %v481 = vsel %vm456, %v478, %v480
      %v482 = vrot.slane %v264, 2
      %v483 = vrot.slane %v265, 2
      %v484 = vsel %vm456, %v482, %v483
      %v485 = vrot.slane %v266, 2
      %v486 = vsel %vm456, %v483, %v485
      %v487 = vrot.slane %v267, 2
      %v488 = vrot.slane %v268, 2
      %v489 = vsel %vm456, %v487, %v488
      %v490 = vrot.slane %v269, 2
      %v491 = vsel %vm456, %v488, %v490
      %v492 = vrot.slane %v270, 2
      %v493 = vrot.slane %v271, 2
      %v494 = vsel %vm456, %v492, %v493
      %v495 = vrot.slane %v272, 2
      %v496 = vsel %vm456, %v493, %v495
      %v497 = vrot.slane %v273, 2
      %v498 = vrot.slane %v274, 2
      %v499 = vsel %vm456, %v497, %v498
      %v500 = vrot.slane %v275, 2
      %v501 = vsel %vm456, %v498, %v500
      %v502 = vrot.slane %v276, 2
      %v503 = vrot.slane %v277, 2
      %v504 = vsel %vm456, %v502, %v503
      %v505 = vrot.slane %v278, 2
      %v506 = vsel %vm456, %v503, %v505
      %507 = vrot.lane.b32.xlu0 %v459, 8
      %v508 = vpop.permute.xlu0 %507
      %509 = vrot.lane.b32.xlu0 %v461, 8
      %v510 = vpop.permute.xlu0 %509
      %511 = vrot.lane.b32.xlu0 %v460, 8
      %v512 = vpop.permute.xlu0 %511
      %513 = vrot.lane.b32.xlu0 %v464, 8
      %v514 = vpop.permute.xlu0 %513
      %515 = vrot.lane.b32.xlu0 %v466, 8
      %v516 = vpop.permute.xlu0 %515
      %517 = vrot.lane.b32.xlu0 %v465, 8
      %v518 = vpop.permute.xlu0 %517
      %519 = vrot.lane.b32.xlu0 %v469, 8
      %v520 = vpop.permute.xlu0 %519
      %521 = vrot.lane.b32.xlu0 %v471, 8
      %v522 = vpop.permute.xlu0 %521
      %523 = vrot.lane.b32.xlu0 %v470, 8
      %v524 = vpop.permute.xlu0 %523
      %525 = vrot.lane.b32.xlu0 %v474, 8
      %v526 = vpop.permute.xlu0 %525
      %527 = vrot.lane.b32.xlu0 %v476, 8
      %v528 = vpop.permute.xlu0 %527
      %529 = vrot.lane.b32.xlu0 %v475, 8
      %v530 = vpop.permute.xlu0 %529
      %531 = vrot.lane.b32.xlu0 %v479, 8
      %v532 = vpop.permute.xlu0 %531
      %533 = vrot.lane.b32.xlu0 %v481, 8
      %v534 = vpop.permute.xlu0 %533
      %535 = vrot.lane.b32.xlu0 %v480, 8
      %v536 = vpop.permute.xlu0 %535
      %537 = vrot.lane.b32.xlu0 %v484, 8
      %v538 = vpop.permute.xlu0 %537
      %539 = vrot.lane.b32.xlu0 %v486, 8
      %v540 = vpop.permute.xlu0 %539
      %541 = vrot.lane.b32.xlu0 %v485, 8
      %v542 = vpop.permute.xlu0 %541
      %543 = vrot.lane.b32.xlu0 %v489, 8
      %v544 = vpop.permute.xlu0 %543
      %545 = vrot.lane.b32.xlu0 %v491, 8
      %v546 = vpop.permute.xlu0 %545
      %547 = vrot.lane.b32.xlu0 %v490, 8
      %v548 = vpop.permute.xlu0 %547
      %549 = vrot.lane.b32.xlu0 %v494, 8
      %v550 = vpop.permute.xlu0 %549
      %551 = vrot.lane.b32.xlu0 %v496, 8
      %v552 = vpop.permute.xlu0 %551
      %553 = vrot.lane.b32.xlu0 %v495, 8
      %v554 = vpop.permute.xlu0 %553
      %555 = vrot.lane.b32.xlu0 %v499, 8
      %v556 = vpop.permute.xlu0 %555
      %557 = vrot.lane.b32.xlu0 %v501, 8
      %v558 = vpop.permute.xlu0 %557
      %559 = vrot.lane.b32.xlu0 %v500, 8
      %v560 = vpop.permute.xlu0 %559
      %561 = vrot.lane.b32.xlu0 %v504, 8
      %v562 = vpop.permute.xlu0 %561
      %563 = vrot.lane.b32.xlu0 %v506, 8
      %v564 = vpop.permute.xlu0 %563
      %565 = vrot.lane.b32.xlu0 %v505, 8
      %v566 = vpop.permute.xlu0 %565
      %600 = vrot.lane.b32.xlu0 %v252, 12
      %v601 = vpop.permute.xlu0 %600
      %602 = vrot.lane.b32.xlu0 %v253, 12
      %v603 = vpop.permute.xlu0 %602
      %604 = vrot.lane.b32.xlu0 %v254, 12
      %v605 = vpop.permute.xlu0 %604
      %606 = vrot.lane.b32.xlu0 %v255, 12
      %v607 = vpop.permute.xlu0 %606
      %608 = vrot.lane.b32.xlu0 %v256, 12
      %v609 = vpop.permute.xlu0 %608
      %610 = vrot.lane.b32.xlu0 %v257, 12
      %v611 = vpop.permute.xlu0 %610
      %612 = vrot.lane.b32.xlu0 %v258, 12
      %v613 = vpop.permute.xlu0 %612
      %614 = vrot.lane.b32.xlu0 %v259, 12
      %v615 = vpop.permute.xlu0 %614
      %616 = vrot.lane.b32.xlu0 %v260, 12
      %v617 = vpop.permute.xlu0 %616
      %618 = vrot.lane.b32.xlu0 %v261, 12
      %v619 = vpop.permute.xlu0 %618
      %620 = vrot.lane.b32.xlu0 %v262, 12
      %v621 = vpop.permute.xlu0 %620
      %622 = vrot.lane.b32.xlu0 %v263, 12
      %v623 = vpop.permute.xlu0 %622
      %624 = vrot.lane.b32.xlu0 %v264, 12
      %v625 = vpop.permute.xlu0 %624
      %626 = vrot.lane.b32.xlu0 %v265, 12
      %v627 = vpop.permute.xlu0 %626
      %628 = vrot.lane.b32.xlu0 %v266, 12
      %v629 = vpop.permute.xlu0 %628
      %630 = vrot.lane.b32.xlu0 %v267, 12
      %v631 = vpop.permute.xlu0 %630
      %632 = vrot.lane.b32.xlu0 %v268, 12
      %v633 = vpop.permute.xlu0 %632
      %634 = vrot.lane.b32.xlu0 %v269, 12
      %v635 = vpop.permute.xlu0 %634
      %636 = vrot.lane.b32.xlu0 %v270, 12
      %v637 = vpop.permute.xlu0 %636
      %638 = vrot.lane.b32.xlu0 %v271, 12
      %v639 = vpop.permute.xlu0 %638
      %640 = vrot.lane.b32.xlu0 %v272, 12
      %v641 = vpop.permute.xlu0 %640
      %642 = vrot.lane.b32.xlu0 %v273, 12
      %v643 = vpop.permute.xlu0 %642
      %644 = vrot.lane.b32.xlu0 %v274, 12
      %v645 = vpop.permute.xlu0 %644
      %646 = vrot.lane.b32.xlu0 %v275, 12
      %v647 = vpop.permute.xlu0 %646
      %648 = vrot.lane.b32.xlu0 %v276, 12
      %v649 = vpop.permute.xlu0 %648
      %650 = vrot.lane.b32.xlu0 %v277, 12
      %v651 = vpop.permute.xlu0 %650
      %652 = vrot.lane.b32.xlu0 %v278, 12
      %v653 = vpop.permute.xlu0 %652
      %654 = vrot.lane.b32.xlu0 %v279, 12
      %v655 = vpop.permute.xlu0 %654
      %656 = vrot.lane.b32.xlu0 %v280, 12
      %v657 = vpop.permute.xlu0 %656
      %658 = vrot.lane.b32.xlu0 %v281, 12
      %v659 = vpop.permute.xlu0 %658
      %v690 = vrot.slane %v279, 1
      %v691 = vrot.slane %v280, 1
      %v692 = vsel %vm315, %v690, %v691
      %v693 = vrot.slane %v281, 1
      %v694 = vsel %vm315, %v691, %v693
      %695 = vrot.lane.b32.xlu0 %v323, 16
      %v696 = vpop.permute.xlu0 %695
      %697 = vrot.lane.b32.xlu0 %v325, 16
      %v698 = vpop.permute.xlu0 %697
      %699 = vrot.lane.b32.xlu0 %v324, 16
      %v700 = vpop.permute.xlu0 %699
      %701 = vrot.lane.b32.xlu0 %v328, 16
      %v702 = vpop.permute.xlu0 %701
      %703 = vrot.lane.b32.xlu0 %v330, 16
      %v704 = vpop.permute.xlu0 %703
      %705 = vrot.lane.b32.xlu0 %v329, 16
      %v706 = vpop.permute.xlu0 %705
      %707 = vrot.lane.b32.xlu0 %v333, 16
      %v708 = vpop.permute.xlu0 %707
      %709 = vrot.lane.b32.xlu0 %v335, 16
      %v710 = vpop.permute.xlu0 %709
      %711 = vrot.lane.b32.xlu0 %v334, 16
      %v712 = vpop.permute.xlu0 %711
      %713 = vrot.lane.b32.xlu0 %v338, 16
      %v714 = vpop.permute.xlu0 %713
      %715 = vrot.lane.b32.xlu0 %v340, 16
      %v716 = vpop.permute.xlu0 %715
      %717 = vrot.lane.b32.xlu0 %v339, 16
      %v718 = vpop.permute.xlu0 %717
      %719 = vrot.lane.b32.xlu0 %v343, 16
      %v720 = vpop.permute.xlu0 %719
      %721 = vrot.lane.b32.xlu0 %v345, 16
      %v722 = vpop.permute.xlu0 %721
      %723 = vrot.lane.b32.xlu0 %v344, 16
      %v724 = vpop.permute.xlu0 %723
      %725 = vrot.lane.b32.xlu0 %v348, 16
      %v726 = vpop.permute.xlu0 %725
      %727 = vrot.lane.b32.xlu0 %v350, 16
      %v728 = vpop.permute.xlu0 %727
      %729 = vrot.lane.b32.xlu0 %v349, 16
      %v730 = vpop.permute.xlu0 %729
      %731 = vrot.lane.b32.xlu0 %v353, 16
      %v732 = vpop.permute.xlu0 %731
      %733 = vrot.lane.b32.xlu0 %v355, 16
      %v734 = vpop.permute.xlu0 %733
      %735 = vrot.lane.b32.xlu0 %v354, 16
      %v736 = vpop.permute.xlu0 %735
      %737 = vrot.lane.b32.xlu0 %v358, 16
      %v738 = vpop.permute.xlu0 %737
      %739 = vrot.lane.b32.xlu0 %v360, 16
      %v740 = vpop.permute.xlu0 %739
      %741 = vrot.lane.b32.xlu0 %v359, 16
      %v742 = vpop.permute.xlu0 %741
      %743 = vrot.lane.b32.xlu0 %v363, 16
      %v744 = vpop.permute.xlu0 %743
      %745 = vrot.lane.b32.xlu0 %v365, 16
      %v746 = vpop.permute.xlu0 %745
      %747 = vrot.lane.b32.xlu0 %v364, 16
      %v748 = vpop.permute.xlu0 %747
      %749 = vrot.lane.b32.xlu0 %v692, 16
      %v750 = vpop.permute.xlu0 %749
      %751 = vrot.lane.b32.xlu0 %v694, 16
      %v752 = vpop.permute.xlu0 %751
      %753 = vrot.lane.b32.xlu0 %v693, 16
      %v754 = vpop.permute.xlu0 %753
      %v785 = vrot.slane %v279, 2
      %v786 = vrot.slane %v280, 2
      %v787 = vsel %vm456, %v785, %v786
      %v788 = vrot.slane %v281, 2
      %v789 = vsel %vm456, %v786, %v788
      %790 = vrot.lane.b32.xlu0 %v464, 20
      %v791 = vpop.permute.xlu0 %790
      %792 = vrot.lane.b32.xlu0 %v466, 20
      %v793 = vpop.permute.xlu0 %792
      %794 = vrot.lane.b32.xlu0 %v465, 20
      %v795 = vpop.permute.xlu0 %794
      %796 = vrot.lane.b32.xlu0 %v469, 20
      %v797 = vpop.permute.xlu0 %796
      %798 = vrot.lane.b32.xlu0 %v471, 20
      %v799 = vpop.permute.xlu0 %798
      %800 = vrot.lane.b32.xlu0 %v470, 20
      %v801 = vpop.permute.xlu0 %800
      %802 = vrot.lane.b32.xlu0 %v474, 20
      %v803 = vpop.permute.xlu0 %802
      %804 = vrot.lane.b32.xlu0 %v476, 20
      %v805 = vpop.permute.xlu0 %804
      %806 = vrot.lane.b32.xlu0 %v475, 20
      %v807 = vpop.permute.xlu0 %806
      %808 = vrot.lane.b32.xlu0 %v479, 20
      %v809 = vpop.permute.xlu0 %808
      %810 = vrot.lane.b32.xlu0 %v481, 20
      %v811 = vpop.permute.xlu0 %810
      %812 = vrot.lane.b32.xlu0 %v480, 20
      %v813 = vpop.permute.xlu0 %812
      %814 = vrot.lane.b32.xlu0 %v484, 20
      %v815 = vpop.permute.xlu0 %814
      %816 = vrot.lane.b32.xlu0 %v486, 20
      %v817 = vpop.permute.xlu0 %816
      %818 = vrot.lane.b32.xlu0 %v485, 20
      %v819 = vpop.permute.xlu0 %818
      %820 = vrot.lane.b32.xlu0 %v489, 20
      %v821 = vpop.permute.xlu0 %820
      %822 = vrot.lane.b32.xlu0 %v491, 20
      %v823 = vpop.permute.xlu0 %822
      %824 = vrot.lane.b32.xlu0 %v490, 20
      %v825 = vpop.permute.xlu0 %824
      %826 = vrot.lane.b32.xlu0 %v494, 20
      %v827 = vpop.permute.xlu0 %826
      %828 = vrot.lane.b32.xlu0 %v496, 20
      %v829 = vpop.permute.xlu0 %828
      %830 = vrot.lane.b32.xlu0 %v495, 20
      %v831 = vpop.permute.xlu0 %830
      %832 = vrot.lane.b32.xlu0 %v499, 20
      %v833 = vpop.permute.xlu0 %832
      %834 = vrot.lane.b32.xlu0 %v501, 20
      %v835 = vpop.permute.xlu0 %834
      %836 = vrot.lane.b32.xlu0 %v500, 20
      %v837 = vpop.permute.xlu0 %836
      %838 = vrot.lane.b32.xlu0 %v504, 20
      %v839 = vpop.permute.xlu0 %838
      %840 = vrot.lane.b32.xlu0 %v506, 20
      %v841 = vpop.permute.xlu0 %840
      %842 = vrot.lane.b32.xlu0 %v505, 20
      %v843 = vpop.permute.xlu0 %842
      %844 = vrot.lane.b32.xlu0 %v787, 20
      %v845 = vpop.permute.xlu0 %844
      %846 = vrot.lane.b32.xlu0 %v789, 20
      %v847 = vpop.permute.xlu0 %846
      %848 = vrot.lane.b32.xlu0 %v788, 20
      %v849 = vpop.permute.xlu0 %848
      %883 = vrot.lane.b32.xlu0 %v255, 24
      %v884 = vpop.permute.xlu0 %883
      %885 = vrot.lane.b32.xlu0 %v256, 24
      %v886 = vpop.permute.xlu0 %885
      %887 = vrot.lane.b32.xlu0 %v257, 24
      %v888 = vpop.permute.xlu0 %887
      %889 = vrot.lane.b32.xlu0 %v258, 24
      %v890 = vpop.permute.xlu0 %889
      %891 = vrot.lane.b32.xlu0 %v259, 24
      %v892 = vpop.permute.xlu0 %891
      %893 = vrot.lane.b32.xlu0 %v260, 24
      %v894 = vpop.permute.xlu0 %893
      %895 = vrot.lane.b32.xlu0 %v261, 24
      %v896 = vpop.permute.xlu0 %895
      %897 = vrot.lane.b32.xlu0 %v262, 24
      %v898 = vpop.permute.xlu0 %897
      %899 = vrot.lane.b32.xlu0 %v263, 24
      %v900 = vpop.permute.xlu0 %899
      %901 = vrot.lane.b32.xlu0 %v264, 24
      %v902 = vpop.permute.xlu0 %901
      %903 = vrot.lane.b32.xlu0 %v265, 24
      %v904 = vpop.permute.xlu0 %903
      %905 = vrot.lane.b32.xlu0 %v266, 24
      %v906 = vpop.permute.xlu0 %905
      %907 = vrot.lane.b32.xlu0 %v267, 24
      %v908 = vpop.permute.xlu0 %907
      %909 = vrot.lane.b32.xlu0 %v268, 24
      %v910 = vpop.permute.xlu0 %909
      %911 = vrot.lane.b32.xlu0 %v269, 24
      %v912 = vpop.permute.xlu0 %911
      %913 = vrot.lane.b32.xlu0 %v270, 24
      %v914 = vpop.permute.xlu0 %913
      %915 = vrot.lane.b32.xlu0 %v271, 24
      %v916 = vpop.permute.xlu0 %915
      %917 = vrot.lane.b32.xlu0 %v272, 24
      %v918 = vpop.permute.xlu0 %917
      %919 = vrot.lane.b32.xlu0 %v273, 24
      %v920 = vpop.permute.xlu0 %919
      %921 = vrot.lane.b32.xlu0 %v274, 24
      %v922 = vpop.permute.xlu0 %921
      %923 = vrot.lane.b32.xlu0 %v275, 24
      %v924 = vpop.permute.xlu0 %923
      %925 = vrot.lane.b32.xlu0 %v276, 24
      %v926 = vpop.permute.xlu0 %925
      %927 = vrot.lane.b32.xlu0 %v277, 24
      %v928 = vpop.permute.xlu0 %927
      %929 = vrot.lane.b32.xlu0 %v278, 24
      %v930 = vpop.permute.xlu0 %929
      %931 = vrot.lane.b32.xlu0 %v279, 24
      %v932 = vpop.permute.xlu0 %931
      %933 = vrot.lane.b32.xlu0 %v280, 24
      %v934 = vpop.permute.xlu0 %933
      %935 = vrot.lane.b32.xlu0 %v281, 24
      %v936 = vpop.permute.xlu0 %935
      %937 = vrot.lane.b32.xlu0 %v282, 24
      %v938 = vpop.permute.xlu0 %937
      %939 = vrot.lane.b32.xlu0 %v283, 24
      %v940 = vpop.permute.xlu0 %939
      %941 = vrot.lane.b32.xlu0 %v284, 24
      %v942 = vpop.permute.xlu0 %941
      %v973 = vrot.slane %v282, 1
      %v974 = vrot.slane %v283, 1
      %v975 = vsel %vm315, %v973, %v974
      %v976 = vrot.slane %v284, 1
      %v977 = vsel %vm315, %v974, %v976
      %978 = vrot.lane.b32.xlu0 %v328, 28
      %v979 = vpop.permute.xlu0 %978
      %980 = vrot.lane.b32.xlu0 %v330, 28
      %v981 = vpop.permute.xlu0 %980
      %982 = vrot.lane.b32.xlu0 %v329, 28
      %v983 = vpop.permute.xlu0 %982
      %984 = vrot.lane.b32.xlu0 %v333, 28
      %v985 = vpop.permute.xlu0 %984
      %986 = vrot.lane.b32.xlu0 %v335, 28
      %v987 = vpop.permute.xlu0 %986
      %988 = vrot.lane.b32.xlu0 %v334, 28
      %v989 = vpop.permute.xlu0 %988
      %990 = vrot.lane.b32.xlu0 %v338, 28
      %v991 = vpop.permute.xlu0 %990
      %992 = vrot.lane.b32.xlu0 %v340, 28
      %v993 = vpop.permute.xlu0 %992
      %994 = vrot.lane.b32.xlu0 %v339, 28
      %v995 = vpop.permute.xlu0 %994
      %996 = vrot.lane.b32.xlu0 %v343, 28
      %v997 = vpop.permute.xlu0 %996
      %998 = vrot.lane.b32.xlu0 %v345, 28
      %v999 = vpop.permute.xlu0 %998
      %1000 = vrot.lane.b32.xlu0 %v344, 28
      %v1001 = vpop.permute.xlu0 %1000
      %1002 = vrot.lane.b32.xlu0 %v348, 28
      %v1003 = vpop.permute.xlu0 %1002
      %1004 = vrot.lane.b32.xlu0 %v350, 28
      %v1005 = vpop.permute.xlu0 %1004
      %1006 = vrot.lane.b32.xlu0 %v349, 28
      %v1007 = vpop.permute.xlu0 %1006
      %1008 = vrot.lane.b32.xlu0 %v353, 28
      %v1009 = vpop.permute.xlu0 %1008
      %1010 = vrot.lane.b32.xlu0 %v355, 28
      %v1011 = vpop.permute.xlu0 %1010
      %1012 = vrot.lane.b32.xlu0 %v354, 28
      %v1013 = vpop.permute.xlu0 %1012
      %1014 = vrot.lane.b32.xlu0 %v358, 28
      %v1015 = vpop.permute.xlu0 %1014
      %1016 = vrot.lane.b32.xlu0 %v360, 28
      %v1017 = vpop.permute.xlu0 %1016
      %1018 = vrot.lane.b32.xlu0 %v359, 28
      %v1019 = vpop.permute.xlu0 %1018
      %1020 = vrot.lane.b32.xlu0 %v363, 28
      %v1021 = vpop.permute.xlu0 %1020
      %1022 = vrot.lane.b32.xlu0 %v365, 28
      %v1023 = vpop.permute.xlu0 %1022
      %1024 = vrot.lane.b32.xlu0 %v364, 28
      %v1025 = vpop.permute.xlu0 %1024
      %1026 = vrot.lane.b32.xlu0 %v692, 28
      %v1027 = vpop.permute.xlu0 %1026
      %1028 = vrot.lane.b32.xlu0 %v694, 28
      %v1029 = vpop.permute.xlu0 %1028
      %1030 = vrot.lane.b32.xlu0 %v693, 28
      %v1031 = vpop.permute.xlu0 %1030
      %1032 = vrot.lane.b32.xlu0 %v975, 28
      %v1033 = vpop.permute.xlu0 %1032
      %1034 = vrot.lane.b32.xlu0 %v977, 28
      %v1035 = vpop.permute.xlu0 %1034
      %1036 = vrot.lane.b32.xlu0 %v976, 28
      %v1037 = vpop.permute.xlu0 %1036
      %v1068 = vrot.slane %v282, 2
      %v1069 = vrot.slane %v283, 2
      %v1070 = vsel %vm456, %v1068, %v1069
      %v1071 = vrot.slane %v284, 2
      %v1072 = vsel %vm456, %v1069, %v1071
      %1073 = vrot.lane.b32.xlu0 %v469, 32
      %v1074 = vpop.permute.xlu0 %1073
      %1075 = vrot.lane.b32.xlu0 %v471, 32
      %v1076 = vpop.permute.xlu0 %1075
      %1077 = vrot.lane.b32.xlu0 %v470, 32
      %v1078 = vpop.permute.xlu0 %1077
      %1079 = vrot.lane.b32.xlu0 %v474, 32
      %v1080 = vpop.permute.xlu0 %1079
      %1081 = vrot.lane.b32.xlu0 %v476, 32
      %v1082 = vpop.permute.xlu0 %1081
      %1083 = vrot.lane.b32.xlu0 %v475, 32
      %v1084 = vpop.permute.xlu0 %1083
      %1085 = vrot.lane.b32.xlu0 %v479, 32
      %v1086 = vpop.permute.xlu0 %1085
      %1087 = vrot.lane.b32.xlu0 %v481, 32
      %v1088 = vpop.permute.xlu0 %1087
      %1089 = vrot.lane.b32.xlu0 %v480, 32
      %v1090 = vpop.permute.xlu0 %1089
      %1091 = vrot.lane.b32.xlu0 %v484, 32
      %v1092 = vpop.permute.xlu0 %1091
      %1093 = vrot.lane.b32.xlu0 %v486, 32
      %v1094 = vpop.permute.xlu0 %1093
      %1095 = vrot.lane.b32.xlu0 %v485, 32
      %v1096 = vpop.permute.xlu0 %1095
      %1097 = vrot.lane.b32.xlu0 %v489, 32
      %v1098 = vpop.permute.xlu0 %1097
      %1099 = vrot.lane.b32.xlu0 %v491, 32
      %v1100 = vpop.permute.xlu0 %1099
      %1101 = vrot.lane.b32.xlu0 %v490, 32
      %v1102 = vpop.permute.xlu0 %1101
      %1103 = vrot.lane.b32.xlu0 %v494, 32
      %v1104 = vpop.permute.xlu0 %1103
      %1105 = vrot.lane.b32.xlu0 %v496, 32
      %v1106 = vpop.permute.xlu0 %1105
      %1107 = vrot.lane.b32.xlu0 %v495, 32
      %v1108 = vpop.permute.xlu0 %1107
      %1109 = vrot.lane.b32.xlu0 %v499, 32
      %v1110 = vpop.permute.xlu0 %1109
      %1111 = vrot.lane.b32.xlu0 %v501, 32
      %v1112 = vpop.permute.xlu0 %1111
      %1113 = vrot.lane.b32.xlu0 %v500, 32
      %v1114 = vpop.permute.xlu0 %1113
      %1115 = vrot.lane.b32.xlu0 %v504, 32
      %v1116 = vpop.permute.xlu0 %1115
      %1117 = vrot.lane.b32.xlu0 %v506, 32
      %v1118 = vpop.permute.xlu0 %1117
      %1119 = vrot.lane.b32.xlu0 %v505, 32
      %v1120 = vpop.permute.xlu0 %1119
      %1121 = vrot.lane.b32.xlu0 %v787, 32
      %v1122 = vpop.permute.xlu0 %1121
      %1123 = vrot.lane.b32.xlu0 %v789, 32
      %v1124 = vpop.permute.xlu0 %1123
      %1125 = vrot.lane.b32.xlu0 %v788, 32
      %v1126 = vpop.permute.xlu0 %1125
      %1127 = vrot.lane.b32.xlu0 %v1070, 32
      %v1128 = vpop.permute.xlu0 %1127
      %1129 = vrot.lane.b32.xlu0 %v1072, 32
      %v1130 = vpop.permute.xlu0 %1129
      %1131 = vrot.lane.b32.xlu0 %v1071, 32
      %v1132 = vpop.permute.xlu0 %1131
      %vm1163 = vcmask 31744
      %v1164 = vsel %vm1163, %v249, %v367
      %v1165 = vsel %vm1163, %v250, %v369
      %v1166 = vsel %vm1163, %v251, %v371
      %v1167 = vsel %vm1163, %v252, %v373
      %v1168 = vsel %vm1163, %v253, %v375
      %v1169 = vsel %vm1163, %v254, %v377
      %v1170 = vsel %vm1163, %v255, %v379
      %v1171 = vsel %vm1163, %v256, %v381
      %v1172 = vsel %vm1163, %v257, %v383
      %v1173 = vsel %vm1163, %v258, %v385
      %v1174 = vsel %vm1163, %v259, %v387
      %v1175 = vsel %vm1163, %v260, %v389
      %v1176 = vsel %vm1163, %v261, %v391
      %v1177 = vsel %vm1163, %v262, %v393
      %v1178 = vsel %vm1163, %v263, %v395
      %v1179 = vsel %vm1163, %v264, %v397
      %v1180 = vsel %vm1163, %v265, %v399
      %v1181 = vsel %vm1163, %v266, %v401
      %v1182 = vsel %vm1163, %v267, %v403
      %v1183 = vsel %vm1163, %v268, %v405
      %v1184 = vsel %vm1163, %v269, %v407
      %v1185 = vsel %vm1163, %v270, %v409
      %v1186 = vsel %vm1163, %v271, %v411
      %v1187 = vsel %vm1163, %v272, %v413
      %v1188 = vsel %vm1163, %v273, %v415
      %v1189 = vsel %vm1163, %v274, %v417
      %v1190 = vsel %vm1163, %v275, %v419
      %v1191 = vsel %vm1163, %v276, %v421
      %v1192 = vsel %vm1163, %v277, %v423
      %v1193 = vsel %vm1163, %v278, %v425
      %vm1194 = vcmask 64512
      %v1195 = vsel %vm1194, %v1164, %v508
      %v1196 = vsel %vm1194, %v1165, %v510
      %v1197 = vsel %vm1194, %v1166, %v512
      %v1198 = vsel %vm1194, %v1167, %v514
      %v1199 = vsel %vm1194, %v1168, %v516
      %v1200 = vsel %vm1194, %v1169, %v518
      %v1201 = vsel %vm1194, %v1170, %v520
      %v1202 = vsel %vm1194, %v1171, %v522
      %v1203 = vsel %vm1194, %v1172, %v524
      %v1204 = vsel %vm1194, %v1173, %v526
      %v1205 = vsel %vm1194, %v1174, %v528
      %v1206 = vsel %vm1194, %v1175, %v530
      %v1207 = vsel %vm1194, %v1176, %v532
      %v1208 = vsel %vm1194, %v1177, %v534
      %v1209 = vsel %vm1194, %v1178, %v536
      %v1210 = vsel %vm1194, %v1179, %v538
      %v1211 = vsel %vm1194, %v1180, %v540
      %v1212 = vsel %vm1194, %v1181, %v542
      %v1213 = vsel %vm1194, %v1182, %v544
      %v1214 = vsel %vm1194, %v1183, %v546
      %v1215 = vsel %vm1194, %v1184, %v548
      %v1216 = vsel %vm1194, %v1185, %v550
      %v1217 = vsel %vm1194, %v1186, %v552
      %v1218 = vsel %vm1194, %v1187, %v554
      %v1219 = vsel %vm1194, %v1188, %v556
      %v1220 = vsel %vm1194, %v1189, %v558
      %v1221 = vsel %vm1194, %v1190, %v560
      %v1222 = vsel %vm1194, %v1191, %v562
      %v1223 = vsel %vm1194, %v1192, %v564
      %v1224 = vsel %vm1194, %v1193, %v566
      %vm1225 = vcmask 97280
      %v1226 = vsel %vm1225, %v1195, %v601
      %v1227 = vsel %vm1225, %v1196, %v603
      %v1228 = vsel %vm1225, %v1197, %v605
      %v1229 = vsel %vm1225, %v1198, %v607
      %v1230 = vsel %vm1225, %v1199, %v609
      %v1231 = vsel %vm1225, %v1200, %v611
      %v1232 = vsel %vm1225, %v1201, %v613
      %v1233 = vsel %vm1225, %v1202, %v615
      %v1234 = vsel %vm1225, %v1203, %v617
      %v1235 = vsel %vm1225, %v1204, %v619
      %v1236 = vsel %vm1225, %v1205, %v621
      %v1237 = vsel %vm1225, %v1206, %v623
      %v1238 = vsel %vm1225, %v1207, %v625
      %v1239 = vsel %vm1225, %v1208, %v627
      %v1240 = vsel %vm1225, %v1209, %v629
      %v1241 = vsel %vm1225, %v1210, %v631
      %v1242 = vsel %vm1225, %v1211, %v633
      %v1243 = vsel %vm1225, %v1212, %v635
      %v1244 = vsel %vm1225, %v1213, %v637
      %v1245 = vsel %vm1225, %v1214, %v639
      %v1246 = vsel %vm1225, %v1215, %v641
      %v1247 = vsel %vm1225, %v1216, %v643
      %v1248 = vsel %vm1225, %v1217, %v645
      %v1249 = vsel %vm1225, %v1218, %v647
      %v1250 = vsel %vm1225, %v1219, %v649
      %v1251 = vsel %vm1225, %v1220, %v651
      %v1252 = vsel %vm1225, %v1221, %v653
      %v1253 = vsel %vm1225, %v1222, %v655
      %v1254 = vsel %vm1225, %v1223, %v657
      %v1255 = vsel %vm1225, %v1224, %v659
      %vm1256 = vcmask 130048
      %v1257 = vsel %vm1256, %v1226, %v696
      %v1258 = vsel %vm1256, %v1227, %v698
      %v1259 = vsel %vm1256, %v1228, %v700
      %v1260 = vsel %vm1256, %v1229, %v702
      %v1261 = vsel %vm1256, %v1230, %v704
      %v1262 = vsel %vm1256, %v1231, %v706
      %v1263 = vsel %vm1256, %v1232, %v708
      %v1264 = vsel %vm1256, %v1233, %v710
      %v1265 = vsel %vm1256, %v1234, %v712
      %v1266 = vsel %vm1256, %v1235, %v714
      %v1267 = vsel %vm1256, %v1236, %v716
      %v1268 = vsel %vm1256, %v1237, %v718
      %v1269 = vsel %vm1256, %v1238, %v720
      %v1270 = vsel %vm1256, %v1239, %v722
      %v1271 = vsel %vm1256, %v1240, %v724
      %v1272 = vsel %vm1256, %v1241, %v726
      %v1273 = vsel %vm1256, %v1242, %v728
      %v1274 = vsel %vm1256, %v1243, %v730
      %v1275 = vsel %vm1256, %v1244, %v732
      %v1276 = vsel %vm1256, %v1245, %v734
      %v1277 = vsel %vm1256, %v1246, %v736
      %v1278 = vsel %vm1256, %v1247, %v738
      %v1279 = vsel %vm1256, %v1248, %v740
      %v1280 = vsel %vm1256, %v1249, %v742
      %v1281 = vsel %vm1256, %v1250, %v744
      %v1282 = vsel %vm1256, %v1251, %v746
      %v1283 = vsel %vm1256, %v1252, %v748
      %v1284 = vsel %vm1256, %v1253, %v750
      %v1285 = vsel %vm1256, %v1254, %v752
      %v1286 = vsel %vm1256, %v1255, %v754
      %vm1287 = vcmask 162816
      %v1288 = vsel %vm1287, %v1257, %v791
      %v1289 = vsel %vm1287, %v1258, %v793
      %v1290 = vsel %vm1287, %v1259, %v795
      %v1291 = vsel %vm1287, %v1260, %v797
      %v1292 = vsel %vm1287, %v1261, %v799
      %v1293 = vsel %vm1287, %v1262, %v801
      %v1294 = vsel %vm1287, %v1263, %v803
      %v1295 = vsel %vm1287, %v1264, %v805
      %v1296 = vsel %vm1287, %v1265, %v807
      %v1297 = vsel %vm1287, %v1266, %v809
      %v1298 = vsel %vm1287, %v1267, %v811
      %v1299 = vsel %vm1287, %v1268, %v813
      %v1300 = vsel %vm1287, %v1269, %v815
      %v1301 = vsel %vm1287, %v1270, %v817
      %v1302 = vsel %vm1287, %v1271, %v819
      %v1303 = vsel %vm1287, %v1272, %v821
      %v1304 = vsel %vm1287, %v1273, %v823
      %v1305 = vsel %vm1287, %v1274, %v825
      %v1306 = vsel %vm1287, %v1275, %v827
      %v1307 = vsel %vm1287, %v1276, %v829
      %v1308 = vsel %vm1287, %v1277, %v831
      %v1309 = vsel %vm1287, %v1278, %v833
      %v1310 = vsel %vm1287, %v1279, %v835
      %v1311 = vsel %vm1287, %v1280, %v837
      %v1312 = vsel %vm1287, %v1281, %v839
      %v1313 = vsel %vm1287, %v1282, %v841
      %v1314 = vsel %vm1287, %v1283, %v843
      %v1315 = vsel %vm1287, %v1284, %v845
      %v1316 = vsel %vm1287, %v1285, %v847
      %v1317 = vsel %vm1287, %v1286, %v849
      %vm1318 = vcmask 195584
      %v1319 = vsel %vm1318, %v1288, %v884
      %v1320 = vsel %vm1318, %v1289, %v886
      %v1321 = vsel %vm1318, %v1290, %v888
      %v1322 = vsel %vm1318, %v1291, %v890
      %v1323 = vsel %vm1318, %v1292, %v892
      %v1324 = vsel %vm1318, %v1293, %v894
      %v1325 = vsel %vm1318, %v1294, %v896
      %v1326 = vsel %vm1318, %v1295, %v898
      %v1327 = vsel %vm1318, %v1296, %v900
      %v1328 = vsel %vm1318, %v1297, %v902
      %v1329 = vsel %vm1318, %v1298, %v904
      %v1330 = vsel %vm1318, %v1299, %v906
      %v1331 = vsel %vm1318, %v1300, %v908
      %v1332 = vsel %vm1318, %v1301, %v910
      %v1333 = vsel %vm1318, %v1302, %v912
      %v1334 = vsel %vm1318, %v1303, %v914
      %v1335 = vsel %vm1318, %v1304, %v916
      %v1336 = vsel %vm1318, %v1305, %v918
      %v1337 = vsel %vm1318, %v1306, %v920
      %v1338 = vsel %vm1318, %v1307, %v922
      %v1339 = vsel %vm1318, %v1308, %v924
      %v1340 = vsel %vm1318, %v1309, %v926
      %v1341 = vsel %vm1318, %v1310, %v928
      %v1342 = vsel %vm1318, %v1311, %v930
      %v1343 = vsel %vm1318, %v1312, %v932
      %v1344 = vsel %vm1318, %v1313, %v934
      %v1345 = vsel %vm1318, %v1314, %v936
      %v1346 = vsel %vm1318, %v1315, %v938
      %v1347 = vsel %vm1318, %v1316, %v940
      %v1348 = vsel %vm1318, %v1317, %v942
      %vm1349 = vcmask 228352
      %v1350 = vsel %vm1349, %v1319, %v979
      %v1351 = vsel %vm1349, %v1320, %v981
      %v1352 = vsel %vm1349, %v1321, %v983
      %v1353 = vsel %vm1349, %v1322, %v985
      %v1354 = vsel %vm1349, %v1323, %v987
      %v1355 = vsel %vm1349, %v1324, %v989
      %v1356 = vsel %vm1349, %v1325, %v991
      %v1357 = vsel %vm1349, %v1326, %v993
      %v1358 = vsel %vm1349, %v1327, %v995
      %v1359 = vsel %vm1349, %v1328, %v997
      %v1360 = vsel %vm1349, %v1329, %v999
      %v1361 = vsel %vm1349, %v1330, %v1001
      %v1362 = vsel %vm1349, %v1331, %v1003
      %v1363 = vsel %vm1349, %v1332, %v1005
      %v1364 = vsel %vm1349, %v1333, %v1007
      %v1365 = vsel %vm1349, %v1334, %v1009
      %v1366 = vsel %vm1349, %v1335, %v1011
      %v1367 = vsel %vm1349, %v1336, %v1013
      %v1368 = vsel %vm1349, %v1337, %v1015
      %v1369 = vsel %vm1349, %v1338, %v1017
      %v1370 = vsel %vm1349, %v1339, %v1019
      %v1371 = vsel %vm1349, %v1340, %v1021
      %v1372 = vsel %vm1349, %v1341, %v1023
      %v1373 = vsel %vm1349, %v1342, %v1025
      %v1374 = vsel %vm1349, %v1343, %v1027
      %v1375 = vsel %vm1349, %v1344, %v1029
      %v1376 = vsel %vm1349, %v1345, %v1031
      %v1377 = vsel %vm1349, %v1346, %v1033
      %v1378 = vsel %vm1349, %v1347, %v1035
      %v1379 = vsel %vm1349, %v1348, %v1037
      %vm1380 = vcmask 261120
      %v1381 = vsel %vm1380, %v1350, %v1074
      %v1382 = vsel %vm1380, %v1351, %v1076
      %v1383 = vsel %vm1380, %v1352, %v1078
      %v1384 = vsel %vm1380, %v1353, %v1080
      %v1385 = vsel %vm1380, %v1354, %v1082
      %v1386 = vsel %vm1380, %v1355, %v1084
      %v1387 = vsel %vm1380, %v1356, %v1086
      %v1388 = vsel %vm1380, %v1357, %v1088
      %v1389 = vsel %vm1380, %v1358, %v1090
      %v1390 = vsel %vm1380, %v1359, %v1092
      %v1391 = vsel %vm1380, %v1360, %v1094
      %v1392 = vsel %vm1380, %v1361, %v1096
      %v1393 = vsel %vm1380, %v1362, %v1098
      %v1394 = vsel %vm1380, %v1363, %v1100
      %v1395 = vsel %vm1380, %v1364, %v1102
      %v1396 = vsel %vm1380, %v1365, %v1104
      %v1397 = vsel %vm1380, %v1366, %v1106
      %v1398 = vsel %vm1380, %v1367, %v1108
      %v1399 = vsel %vm1380, %v1368, %v1110
      %v1400 = vsel %vm1380, %v1369, %v1112
      %v1401 = vsel %vm1380, %v1370, %v1114
      %v1402 = vsel %vm1380, %v1371, %v1116
      %v1403 = vsel %vm1380, %v1372, %v1118
      %v1404 = vsel %vm1380, %v1373, %v1120
      %v1405 = vsel %vm1380, %v1374, %v1122
      %v1406 = vsel %vm1380, %v1375, %v1124
      %v1407 = vsel %vm1380, %v1376, %v1126
      %v1408 = vsel %vm1380, %v1377, %v1128
      %v1409 = vsel %vm1380, %v1378, %v1130
      %v1410 = vsel %vm1380, %v1379, %v1132
      %v1411 = vpack.c.bf16 %v1381, %v1381
      %v1412 = vpack.c.bf16 %v1382, %v1382
      %v1413 = vpack.c.bf16 %v1383, %v1383
      %v1414 = vpack.c.bf16 %v1384, %v1384
      %v1415 = vpack.c.bf16 %v1385, %v1385
      %v1416 = vpack.c.bf16 %v1386, %v1386
      %v1417 = vpack.c.bf16 %v1387, %v1387
      %v1418 = vpack.c.bf16 %v1388, %v1388
      %v1419 = vpack.c.bf16 %v1389, %v1389
      %v1420 = vpack.c.bf16 %v1390, %v1390
      %v1421 = vpack.c.bf16 %v1391, %v1391
      %v1422 = vpack.c.bf16 %v1392, %v1392
      %v1423 = vpack.c.bf16 %v1393, %v1393
      %v1424 = vpack.c.bf16 %v1394, %v1394
      %v1425 = vpack.c.bf16 %v1395, %v1395
      %v1426 = vpack.c.bf16 %v1396, %v1396
      %v1427 = vpack.c.bf16 %v1397, %v1397
      %v1428 = vpack.c.bf16 %v1398, %v1398
      %v1429 = vpack.c.bf16 %v1399, %v1399
      %v1430 = vpack.c.bf16 %v1400, %v1400
      %v1431 = vpack.c.bf16 %v1401, %v1401
      %v1432 = vpack.c.bf16 %v1402, %v1402
      %v1433 = vpack.c.bf16 %v1403, %v1403
      %v1434 = vpack.c.bf16 %v1404, %v1404
      %v1435 = vpack.c.bf16 %v1405, %v1405
      %v1436 = vpack.c.bf16 %v1406, %v1406
      %v1437 = vpack.c.bf16 %v1407, %v1407
      %v1438 = vpack.c.bf16 %v1408, %v1408
      %v1439 = vpack.c.bf16 %v1409, %v1409
      %v1440 = vpack.c.bf16 %v1410, %v1410
      %v1441 = vld [vmem:[%s1] sm:$0xf]
      %v1442 = vld [vmem:[%s1 + $0x4] sm:$0xf]
      %v1443 = vld [vmem:[%s1 + $0x8] sm:$0xf]
      %v1444 = vld [vmem:[%s1 + $0xc] sm:$0xf]
      %v1445 = vld [vmem:[%s1 + $0x10] sm:$0x3]
      %v1446 = vld [vmem:[%s2] sm:$0x1]
      %v1448 = vperm.slane %v1446, 0
      %v1479 = vrot.slane %v1411, 3
      %v1480 = vrot.slane %v1412, 3
      %v1481 = vrot.slane %v1413, 3
      %v1482 = vrot.slane %v1414, 3
      %v1483 = vrot.slane %v1415, 3
      %v1484 = vrot.slane %v1416, 3
      %v1485 = vrot.slane %v1417, 3
      %v1486 = vrot.slane %v1418, 3
      %v1487 = vrot.slane %v1419, 3
      %v1488 = vrot.slane %v1420, 3
      %v1489 = vrot.slane %v1421, 3
      %v1490 = vrot.slane %v1422, 3
      %v1491 = vrot.slane %v1423, 3
      %v1492 = vrot.slane %v1424, 3
      %v1493 = vrot.slane %v1425, 3
      %v1494 = vrot.slane %v1426, 3
      %v1495 = vrot.slane %v1427, 3
      %v1496 = vrot.slane %v1428, 3
      %v1497 = vrot.slane %v1429, 3
      %v1498 = vrot.slane %v1430, 3
      %v1499 = vrot.slane %v1431, 3
      %v1500 = vrot.slane %v1432, 3
      %v1501 = vrot.slane %v1433, 3
      %v1502 = vrot.slane %v1434, 3
      %v1503 = vrot.slane %v1435, 3
      %v1504 = vrot.slane %v1436, 3
      %v1505 = vrot.slane %v1437, 3
      %v1506 = vrot.slane %v1438, 3
      %v1507 = vrot.slane %v1439, 3
      %v1508 = vrot.slane %v1440, 3
      %vm1509 = vcmask 1040384
      %v1512 = vsel %vm1509, %v1411, %v1479
      %vm1513 = vcmask 1041409
      %v1514 = vsel %vm1513, %v1411, %v1479
      %v1516 = vrot.slane %v1514, 1
      %vm1517 = vcmask 1042434
      %v1518 = vsel %vm1517, %v1411, %v1479
      %v1520 = vrot.slane %v1518, 2
      %vm1521 = vcmask 1043459
      %v1522 = vsel %vm1521, %v1411, %v1479
      %v1524 = vrot.slane %v1522, 3
      %v1527 = vsel %vm1509, %v1412, %v1480
      %v1528 = vsel %vm1513, %v1412, %v1480
      %v1530 = vrot.slane %v1528, 1
      %v1531 = vsel %vm1517, %v1412, %v1480
      %v1533 = vrot.slane %v1531, 2
      %v1534 = vsel %vm1521, %v1412, %v1480
      %v1536 = vrot.slane %v1534, 3
      %v1539 = vsel %vm1509, %v1413, %v1481
      %v1542 = vsel %vm1509, %v1414, %v1482
      %v1543 = vsel %vm1513, %v1414, %v1482
      %v1545 = vrot.slane %v1543, 1
      %v1546 = vsel %vm1517, %v1414, %v1482
      %v1548 = vrot.slane %v1546, 2
      %v1549 = vsel %vm1521, %v1414, %v1482
      %v1551 = vrot.slane %v1549, 3
      %v1554 = vsel %vm1509, %v1415, %v1483
      %v1555 = vsel %vm1513, %v1415, %v1483
      %v1557 = vrot.slane %v1555, 1
      %v1558 = vsel %vm1517, %v1415, %v1483
      %v1560 = vrot.slane %v1558, 2
      %v1561 = vsel %vm1521, %v1415, %v1483
      %v1563 = vrot.slane %v1561, 3
      %v1566 = vsel %vm1509, %v1416, %v1484
      %v1569 = vsel %vm1509, %v1417, %v1485
      %v1570 = vsel %vm1513, %v1417, %v1485
      %v1572 = vrot.slane %v1570, 1
      %v1573 = vsel %vm1517, %v1417, %v1485
      %v1575 = vrot.slane %v1573, 2
      %v1576 = vsel %vm1521, %v1417, %v1485
      %v1578 = vrot.slane %v1576, 3
      %v1581 = vsel %vm1509, %v1418, %v1486
      %v1582 = vsel %vm1513, %v1418, %v1486
      %v1584 = vrot.slane %v1582, 1
      %v1585 = vsel %vm1517, %v1418, %v1486
      %v1587 = vrot.slane %v1585, 2
      %v1588 = vsel %vm1521, %v1418, %v1486
      %v1590 = vrot.slane %v1588, 3
      %v1593 = vsel %vm1509, %v1419, %v1487
      %v1596 = vsel %vm1509, %v1420, %v1488
      %v1597 = vsel %vm1513, %v1420, %v1488
      %v1599 = vrot.slane %v1597, 1
      %v1600 = vsel %vm1517, %v1420, %v1488
      %v1602 = vrot.slane %v1600, 2
      %v1603 = vsel %vm1521, %v1420, %v1488
      %v1605 = vrot.slane %v1603, 3
      %v1608 = vsel %vm1509, %v1421, %v1489
      %v1609 = vsel %vm1513, %v1421, %v1489
      %v1611 = vrot.slane %v1609, 1
      %v1612 = vsel %vm1517, %v1421, %v1489
      %v1614 = vrot.slane %v1612, 2
      %v1615 = vsel %vm1521, %v1421, %v1489
      %v1617 = vrot.slane %v1615, 3
      %v1620 = vsel %vm1509, %v1422, %v1490
      %v1623 = vsel %vm1509, %v1423, %v1491
      %v1624 = vsel %vm1513, %v1423, %v1491
      %v1626 = vrot.slane %v1624, 1
      %v1627 = vsel %vm1517, %v1423, %v1491
      %v1629 = vrot.slane %v1627, 2
      %v1630 = vsel %vm1521, %v1423, %v1491
      %v1632 = vrot.slane %v1630, 3
      %v1635 = vsel %vm1509, %v1424, %v1492
      %v1636 = vsel %vm1513, %v1424, %v1492
      %v1638 = vrot.slane %v1636, 1
      %v1639 = vsel %vm1517, %v1424, %v1492
      %v1641 = vrot.slane %v1639, 2
      %v1642 = vsel %vm1521, %v1424, %v1492
      %v1644 = vrot.slane %v1642, 3
      %v1647 = vsel %vm1509, %v1425, %v1493
      %v1650 = vsel %vm1509, %v1426, %v1494
      %v1651 = vsel %vm1513, %v1426, %v1494
      %v1653 = vrot.slane %v1651, 1
      %v1654 = vsel %vm1517, %v1426, %v1494
      %v1656 = vrot.slane %v1654, 2
      %v1657 = vsel %vm1521, %v1426, %v1494
      %v1659 = vrot.slane %v1657, 3
      %v1662 = vsel %vm1509, %v1427, %v1495
      %v1663 = vsel %vm1513, %v1427, %v1495
      %v1665 = vrot.slane %v1663, 1
      %v1666 = vsel %vm1517, %v1427, %v1495
      %v1668 = vrot.slane %v1666, 2
      %v1669 = vsel %vm1521, %v1427, %v1495
      %v1671 = vrot.slane %v1669, 3
      %v1674 = vsel %vm1509, %v1428, %v1496
      %v1677 = vsel %vm1509, %v1429, %v1497
      %v1678 = vsel %vm1513, %v1429, %v1497
      %v1680 = vrot.slane %v1678, 1
      %v1681 = vsel %vm1517, %v1429, %v1497
      %v1683 = vrot.slane %v1681, 2
      %v1684 = vsel %vm1521, %v1429, %v1497
      %v1686 = vrot.slane %v1684, 3
      %v1689 = vsel %vm1509, %v1430, %v1498
      %v1690 = vsel %vm1513, %v1430, %v1498
      %v1692 = vrot.slane %v1690, 1
      %v1693 = vsel %vm1517, %v1430, %v1498
      %v1695 = vrot.slane %v1693, 2
      %v1696 = vsel %vm1521, %v1430, %v1498
      %v1698 = vrot.slane %v1696, 3
      %v1701 = vsel %vm1509, %v1431, %v1499
      %v1704 = vsel %vm1509, %v1432, %v1500
      %v1705 = vsel %vm1513, %v1432, %v1500
      %v1707 = vrot.slane %v1705, 1
      %v1708 = vsel %vm1517, %v1432, %v1500
      %v1710 = vrot.slane %v1708, 2
      %v1711 = vsel %vm1521, %v1432, %v1500
      %v1713 = vrot.slane %v1711, 3
      %v1716 = vsel %vm1509, %v1433, %v1501
      %v1717 = vsel %vm1513, %v1433, %v1501
      %v1719 = vrot.slane %v1717, 1
      %v1720 = vsel %vm1517, %v1433, %v1501
      %v1722 = vrot.slane %v1720, 2
      %v1723 = vsel %vm1521, %v1433, %v1501
      %v1725 = vrot.slane %v1723, 3
      %v1728 = vsel %vm1509, %v1434, %v1502
      %v1731 = vsel %vm1509, %v1435, %v1503
      %v1732 = vsel %vm1513, %v1435, %v1503
      %v1734 = vrot.slane %v1732, 1
      %v1735 = vsel %vm1517, %v1435, %v1503
      %v1737 = vrot.slane %v1735, 2
      %v1738 = vsel %vm1521, %v1435, %v1503
      %v1740 = vrot.slane %v1738, 3
      %v1743 = vsel %vm1509, %v1436, %v1504
      %v1744 = vsel %vm1513, %v1436, %v1504
      %v1746 = vrot.slane %v1744, 1
      %v1747 = vsel %vm1517, %v1436, %v1504
      %v1749 = vrot.slane %v1747, 2
      %v1750 = vsel %vm1521, %v1436, %v1504
      %v1752 = vrot.slane %v1750, 3
      %v1755 = vsel %vm1509, %v1437, %v1505
      %v1758 = vsel %vm1509, %v1438, %v1506
      %v1759 = vsel %vm1513, %v1438, %v1506
      %v1761 = vrot.slane %v1759, 1
      %v1762 = vsel %vm1517, %v1438, %v1506
      %v1764 = vrot.slane %v1762, 2
      %v1765 = vsel %vm1521, %v1438, %v1506
      %v1767 = vrot.slane %v1765, 3
      %v1770 = vsel %vm1509, %v1439, %v1507
      %v1771 = vsel %vm1513, %v1439, %v1507
      %v1773 = vrot.slane %v1771, 1
      %v1774 = vsel %vm1517, %v1439, %v1507
      %v1776 = vrot.slane %v1774, 2
      %v1777 = vsel %vm1521, %v1439, %v1507
      %v1779 = vrot.slane %v1777, 3
      %v1782 = vsel %vm1509, %v1440, %v1508
      %v1783 = vrot.slane %v1448, 2
      %v1784 = vrot.slane %v1448, 4
      %v1785 = vrot.slane %v1448, 6
      %1786 = vst [vmem:[#allocation1] ss:$9 sm:$0xff] %v1512
      %s1788 = scalar_lea.vmem [#allocation1], 1
      %1789 = vst [vmem:[%s1788] ss:$9 sm:$0xff] %v1516
      %s1791 = scalar_lea.vmem [#allocation1], 2
      %1792 = vst [vmem:[%s1791] ss:$9 sm:$0xff] %v1520
      %s1794 = scalar_lea.vmem [#allocation1], 3
      %1795 = vst [vmem:[%s1794] ss:$9 sm:$0xff] %v1524
      %s1796 = scalar_lea.vmem [#allocation1], 4
      %1797 = vst [vmem:[%s1796] ss:$9 sm:$0xff] %v1527
      %s1799 = scalar_lea.vmem [#allocation1], 5
      %1800 = vst [vmem:[%s1799] ss:$9 sm:$0xff] %v1530
      %s1802 = scalar_lea.vmem [#allocation1], 6
      %1803 = vst [vmem:[%s1802] ss:$9 sm:$0xff] %v1533
      %s1805 = scalar_lea.vmem [#allocation1], 7
      %1806 = vst [vmem:[%s1805] ss:$9 sm:$0xff] %v1536
      %v1807 = vld [vmem:[#allocation1] sm:$0xff]
      %1808 = vst [vmem:[#allocation1] ss:$9 sm:$0xff] %v1539
      %1809 = vst [vmem:[%s1788] ss:$9 sm:$0xff] %v1542
      %1811 = vst [vmem:[%s1791] ss:$9 sm:$0xff] %v1545
      %1813 = vst [vmem:[%s1794] ss:$9 sm:$0xff] %v1548
      %1815 = vst [vmem:[%s1796] ss:$9 sm:$0xff] %v1551
      %1816 = vst [vmem:[%s1799] ss:$9 sm:$0xff] %v1554
      %1818 = vst [vmem:[%s1802] ss:$9 sm:$0xff] %v1557
      %1820 = vst [vmem:[%s1805] ss:$9 sm:$0xff] %v1560
      %v1821 = vld [vmem:[#allocation1] sm:$0xff]
      %1823 = vst [vmem:[#allocation1] ss:$9 sm:$0xff] %v1563
      %1824 = vst [vmem:[%s1788] ss:$9 sm:$0xff] %v1566
      %1825 = vst [vmem:[%s1791] ss:$9 sm:$0xff] %v1569
      %1827 = vst [vmem:[%s1794] ss:$9 sm:$0xff] %v1572
      %1829 = vst [vmem:[%s1796] ss:$9 sm:$0xff] %v1575
      %1831 = vst [vmem:[%s1799] ss:$9 sm:$0xff] %v1578
      %1832 = vst [vmem:[%s1802] ss:$9 sm:$0xff] %v1581
      %1834 = vst [vmem:[%s1805] ss:$9 sm:$0xff] %v1584
      %v1835 = vld [vmem:[#allocation1] sm:$0xff]
      %1837 = vst [vmem:[#allocation1] ss:$9 sm:$0xff] %v1587
      %1839 = vst [vmem:[%s1788] ss:$9 sm:$0xff] %v1590
      %1840 = vst [vmem:[%s1791] ss:$9 sm:$0xff] %v1593
      %1841 = vst [vmem:[%s1794] ss:$9 sm:$0xff] %v1596
      %1843 = vst [vmem:[%s1796] ss:$9 sm:$0xff] %v1599
      %1845 = vst [vmem:[%s1799] ss:$9 sm:$0xff] %v1602
      %1847 = vst [vmem:[%s1802] ss:$9 sm:$0xff] %v1605
      %1848 = vst [vmem:[%s1805] ss:$9 sm:$0xff] %v1608
      %v1849 = vld [vmem:[#allocation1] sm:$0xff]
      %1851 = vst [vmem:[#allocation1] ss:$9 sm:$0xff] %v1611
      %1853 = vst [vmem:[%s1788] ss:$9 sm:$0xff] %v1614
      %1855 = vst [vmem:[%s1791] ss:$9 sm:$0xff] %v1617
      %1856 = vst [vmem:[%s1794] ss:$9 sm:$0xff] %v1620
      %1857 = vst [vmem:[%s1796] ss:$9 sm:$0xff] %v1623
      %1859 = vst [vmem:[%s1799] ss:$9 sm:$0xff] %v1626
      %1861 = vst [vmem:[%s1802] ss:$9 sm:$0xff] %v1629
      %1863 = vst [vmem:[%s1805] ss:$9 sm:$0xff] %v1632
      %v1864 = vld [vmem:[#allocation1] sm:$0xff]
      %1865 = vst [vmem:[#allocation1] ss:$9 sm:$0xff] %v1635
      %1867 = vst [vmem:[%s1788] ss:$9 sm:$0xff] %v1638
      %1869 = vst [vmem:[%s1791] ss:$9 sm:$0xff] %v1641
      %1871 = vst [vmem:[%s1794] ss:$9 sm:$0xff] %v1644
      %1872 = vst [vmem:[%s1796] ss:$9 sm:$0xff] %v1647
      %1873 = vst [vmem:[%s1799] ss:$9 sm:$0xff] %v1650
      %1875 = vst [vmem:[%s1802] ss:$9 sm:$0xff] %v1653
      %1877 = vst [vmem:[%s1805] ss:$9 sm:$0xff] %v1656
      %v1878 = vld [vmem:[#allocation1] sm:$0xff]
      %1880 = vst [vmem:[#allocation1] ss:$9 sm:$0xff] %v1659
      %1881 = vst [vmem:[%s1788] ss:$9 sm:$0xff] %v1662
      %1883 = vst [vmem:[%s1791] ss:$9 sm:$0xff] %v1665
      %1885 = vst [vmem:[%s1794] ss:$9 sm:$0xff] %v1668
      %1887 = vst [vmem:[%s1796] ss:$9 sm:$0xff] %v1671
      %1888 = vst [vmem:[%s1799] ss:$9 sm:$0xff] %v1674
      %1889 = vst [vmem:[%s1802] ss:$9 sm:$0xff] %v1677
      %1891 = vst [vmem:[%s1805] ss:$9 sm:$0xff] %v1680
      %v1892 = vld [vmem:[#allocation1] sm:$0xff]
      %1894 = vst [vmem:[#allocation1] ss:$9 sm:$0xff] %v1683
      %1896 = vst [vmem:[%s1788] ss:$9 sm:$0xff] %v1686
      %1897 = vst [vmem:[%s1791] ss:$9 sm:$0xff] %v1689
      %1899 = vst [vmem:[%s1794] ss:$9 sm:$0xff] %v1692
      %1901 = vst [vmem:[%s1796] ss:$9 sm:$0xff] %v1695
      %1903 = vst [vmem:[%s1799] ss:$9 sm:$0xff] %v1698
      %1904 = vst [vmem:[%s1802] ss:$9 sm:$0xff] %v1701
      %1905 = vst [vmem:[%s1805] ss:$9 sm:$0xff] %v1704
      %v1906 = vld [vmem:[#allocation1] sm:$0xff]
      %1908 = vst [vmem:[#allocation1] ss:$9 sm:$0xff] %v1707
      %1910 = vst [vmem:[%s1788] ss:$9 sm:$0xff] %v1710
      %1912 = vst [vmem:[%s1791] ss:$9 sm:$0xff] %v1713
      %1913 = vst [vmem:[%s1794] ss:$9 sm:$0xff] %v1716
      %1915 = vst [vmem:[%s1796] ss:$9 sm:$0xff] %v1719
      %1917 = vst [vmem:[%s1799] ss:$9 sm:$0xff] %v1722
      %1919 = vst [vmem:[%s1802] ss:$9 sm:$0xff] %v1725
      %1920 = vst [vmem:[%s1805] ss:$9 sm:$0xff] %v1728
      %v1921 = vld [vmem:[#allocation1] sm:$0xff]
      %1922 = vst [vmem:[#allocation1] ss:$9 sm:$0xff] %v1731
      %1924 = vst [vmem:[%s1788] ss:$9 sm:$0xff] %v1734
      %1926 = vst [vmem:[%s1791] ss:$9 sm:$0xff] %v1737
      %1928 = vst [vmem:[%s1794] ss:$9 sm:$0xff] %v1740
      %1929 = vst [vmem:[%s1796] ss:$9 sm:$0xff] %v1743
      %1931 = vst [vmem:[%s1799] ss:$9 sm:$0xff] %v1746
      %1933 = vst [vmem:[%s1802] ss:$9 sm:$0xff] %v1749
      %1935 = vst [vmem:[%s1805] ss:$9 sm:$0xff] %v1752
      %v1936 = vld [vmem:[#allocation1] sm:$0xff]
      %1937 = vst [vmem:[#allocation1] ss:$9 sm:$0xff] %v1755
      %1938 = vst [vmem:[%s1788] ss:$9 sm:$0xff] %v1758
      %1940 = vst [vmem:[%s1791] ss:$9 sm:$0xff] %v1761
      %1942 = vst [vmem:[%s1794] ss:$9 sm:$0xff] %v1764
      %1944 = vst [vmem:[%s1796] ss:$9 sm:$0xff] %v1767
      %1945 = vst [vmem:[%s1799] ss:$9 sm:$0xff] %v1770
      %1947 = vst [vmem:[%s1802] ss:$9 sm:$0xff] %v1773
      %1949 = vst [vmem:[%s1805] ss:$9 sm:$0xff] %v1776
      %v1950 = vld [vmem:[#allocation1] sm:$0xff]
      %1952 = vst [vmem:[#allocation1] ss:$9 sm:$0xff] %v1779
      %1953 = vst [vmem:[%s1788] ss:$9 sm:$0xff] %v1782
      %v1954 = vld [vmem:[#allocation1] sm:$0xff]
      %v1960 = vunpack.c.l.b16 %v1441
      %v1961 = vunpack.c.l.b16 %v1442
      %v1962 = vunpack.c.l.b16 %v1443
      %v1963 = vunpack.c.l.b16 %v1444
      %v1964 = vunpack.c.l.b16 %v1445
      %v1965 = vpack.c.b16 %v1961, %v1960
      %v1966 = vpack.c.b16 %v1963, %v1962
      %v1967 = vpack.c.b16 %v1964, %v1964
      %1970 = vst [vmem:[#allocation1] ss:$4 sm:$0xff] %v1448
      %s1971 = scalar_lea.vmem [#allocation1], 1
      %1972 = vst [vmem:[%s1971] ss:$4 sm:$0xff] %v1783
      %s1973 = scalar_lea.vmem [#allocation1], 2
      %1974 = vst [vmem:[%s1973] ss:$4 sm:$0xff] %v1784
      %s1975 = scalar_lea.vmem [#allocation1], 3
      %1976 = vst [vmem:[%s1975] ss:$4 sm:$0xff] %v1785
      %s1977 = scalar_lea.vmem [#allocation1], 32
      %1978 = vst [vmem:[%s1977] ss:$4 sm:$0xff] %v1448
      %s1979 = scalar_lea.vmem [#allocation1], 33
      %1980 = vst [vmem:[%s1979] ss:$4 sm:$0xff] %v1783
      %s1981 = scalar_lea.vmem [#allocation1], 34
      %1982 = vst [vmem:[%s1981] ss:$4 sm:$0xff] %v1784
      %s1983 = scalar_lea.vmem [#allocation1], 35
      %1984 = vst [vmem:[%s1983] ss:$4 sm:$0xff] %v1785
      %v1985 = vld.sshfl [vmem:[#allocation1] sm:$0xff pattern:$0x73625140]
      %v1986 = vld.sshfl [vmem:[#allocation1 + $0x20] sm:$0xff pattern:$0x73625140]
      %1987 = vst [vmem:[#allocation1] ss:$4 sm:$0xff] %v1448
      %1988 = vst [vmem:[%s1971] ss:$4 sm:$0xff] %v1448
      %1989 = vst [vmem:[%s1973] ss:$4 sm:$0xff] %v1783
      %1990 = vst [vmem:[%s1975] ss:$4 sm:$0xff] %v1784
      %1991 = vst [vmem:[%s1977] ss:$4 sm:$0xff] %v1785
      %1992 = vst [vmem:[%s1979] ss:$4 sm:$0xff] %v1448
      %1993 = vst [vmem:[%s1981] ss:$4 sm:$0xff] %v1783
      %1994 = vst [vmem:[%s1983] ss:$4 sm:$0xff] %v1784
      %v1995 = vld.sshfl [vmem:[#allocation1] sm:$0xff pattern:$0x73625140]
      %v1996 = vld.sshfl [vmem:[#allocation1 + $0x20] sm:$0xff pattern:$0x73625140]
      %1997 = vst [vmem:[#allocation1] ss:$4 sm:$0xff] %v1785
      %1998 = vst [vmem:[%s1971] ss:$4 sm:$0xff] %v1448
      %1999 = vst [vmem:[%s1973] ss:$4 sm:$0xff] %v1448
      %2000 = vst [vmem:[%s1975] ss:$4 sm:$0xff] %v1783
      %2001 = vst [vmem:[%s1977] ss:$4 sm:$0xff] %v1784
      %2002 = vst [vmem:[%s1979] ss:$4 sm:$0xff] %v1785
      %2003 = vst [vmem:[%s1981] ss:$4 sm:$0xff] %v1448
      %2004 = vst [vmem:[%s1983] ss:$4 sm:$0xff] %v1783
      %v2005 = vld.sshfl [vmem:[#allocation1] sm:$0xff pattern:$0x73625140]
      %v2006 = vld.sshfl [vmem:[#allocation1 + $0x20] sm:$0xff pattern:$0x73625140]
      %2007 = vst [vmem:[#allocation1] ss:$4 sm:$0xff] %v1784
      %2008 = vst [vmem:[%s1971] ss:$4 sm:$0xff] %v1785
      %2009 = vst [vmem:[%s1973] ss:$4 sm:$0xff] %v1448
      %2010 = vst [vmem:[%s1975] ss:$4 sm:$0xff] %v1448
      %2011 = vst [vmem:[%s1977] ss:$4 sm:$0xff] %v1783
      %2012 = vst [vmem:[%s1979] ss:$4 sm:$0xff] %v1784
      %2013 = vst [vmem:[%s1981] ss:$4 sm:$0xff] %v1785
      %2014 = vst [vmem:[%s1983] ss:$4 sm:$0xff] %v1448
      %v2015 = vld.sshfl [vmem:[#allocation1] sm:$0xff pattern:$0x73625140]
      %v2016 = vld.sshfl [vmem:[#allocation1 + $0x20] sm:$0xff pattern:$0x73625140]
      %2017 = vst [vmem:[#allocation1] ss:$4 sm:$0xff] %v1783
      %2018 = vst [vmem:[%s1971] ss:$4 sm:$0xff] %v1784
      %2019 = vst [vmem:[%s1973] ss:$4 sm:$0xff] %v1785
      %2020 = vst [vmem:[%s1975] ss:$4 sm:$0xff] %v1448
      %2021 = vst [vmem:[%s1977] ss:$4 sm:$0xff] %v1448
      %2022 = vst [vmem:[%s1979] ss:$4 sm:$0xff] %v1783
      %2023 = vst [vmem:[%s1981] ss:$4 sm:$0xff] %v1784
      %2024 = vst [vmem:[%s1983] ss:$4 sm:$0xff] %v1785
      %v2025 = vld.sshfl [vmem:[#allocation1] sm:$0xff pattern:$0x73625140]
      %v2026 = vld.sshfl [vmem:[#allocation1 + $0x20] sm:$0xff pattern:$0x73625140]
      %2027 = vst [vmem:[#allocation1] ss:$4 sm:$0xff] %v1448
      %2028 = vst [vmem:[%s1971] ss:$4 sm:$0xff] %v1783
      %2029 = vst [vmem:[%s1973] ss:$4 sm:$0xff] %v1784
      %2030 = vst [vmem:[%s1975] ss:$4 sm:$0xff] %v1785
      %2031 = vst [vmem:[%s1977] ss:$4 sm:$0xff] %v1448
      %2032 = vst [vmem:[%s1979] ss:$4 sm:$0xff] %v1448
      %2033 = vst [vmem:[%s1981] ss:$4 sm:$0xff] %v1783
      %2034 = vst [vmem:[%s1983] ss:$4 sm:$0xff] %v1784
      %v2035 = vld.sshfl [vmem:[#allocation1] sm:$0xff pattern:$0x73625140]
      %v2036 = vld.sshfl [vmem:[#allocation1 + $0x20] sm:$0xff pattern:$0x73625140]
      %2037 = vst [vmem:[#allocation1] ss:$4 sm:$0xff] %v1785
      %2038 = vst [vmem:[%s1971] ss:$4 sm:$0xff] %v1448
      %2039 = vst [vmem:[%s1973] ss:$4 sm:$0xff] %v1783
      %2040 = vst [vmem:[%s1975] ss:$4 sm:$0xff] %v1784
      %2041 = vst [vmem:[%s1977] ss:$4 sm:$0xff] %v1785
      %2042 = vst [vmem:[%s1979] ss:$4 sm:$0xff] %v1448
      %2043 = vst [vmem:[%s1981] ss:$4 sm:$0xff] %v1448
      %2044 = vst [vmem:[%s1983] ss:$4 sm:$0xff] %v1783
      %v2045 = vld.sshfl [vmem:[#allocation1] sm:$0xff pattern:$0x73625140]
      %v2046 = vld.sshfl [vmem:[#allocation1 + $0x20] sm:$0xff pattern:$0x73625140]
      %2047 = vst [vmem:[#allocation1] ss:$4 sm:$0xff] %v1784
      %2048 = vst [vmem:[%s1971] ss:$4 sm:$0xff] %v1785
      %2049 = vst [vmem:[%s1973] ss:$4 sm:$0xff] %v1448
      %2050 = vst [vmem:[%s1975] ss:$4 sm:$0xff] %v1783
      %2051 = vst [vmem:[%s1977] ss:$4 sm:$0xff] %v1784
      %2052 = vst [vmem:[%s1979] ss:$4 sm:$0xff] %v1785
      %2053 = vst [vmem:[%s1981] ss:$4 sm:$0xff] %v1448
      %2054 = vst [vmem:[%s1983] ss:$4 sm:$0xff] %v1448
      %v2055 = vld.sshfl [vmem:[#allocation1] sm:$0xff pattern:$0x73625140]
      %v2056 = vld.sshfl [vmem:[#allocation1 + $0x20] sm:$0xff pattern:$0x73625140]
      %2057 = vst [vmem:[#allocation1] ss:$4 sm:$0xff] %v1783
      %2058 = vst [vmem:[%s1971] ss:$4 sm:$0xff] %v1784
      %2059 = vst [vmem:[%s1973] ss:$4 sm:$0xff] %v1785
      %2060 = vst [vmem:[%s1975] ss:$4 sm:$0xff] %v1448
      %2061 = vst [vmem:[%s1977] ss:$4 sm:$0xff] %v1783
      %2062 = vst [vmem:[%s1979] ss:$4 sm:$0xff] %v1784
      %2063 = vst [vmem:[%s1981] ss:$4 sm:$0xff] %v1785
      %2064 = vst [vmem:[%s1983] ss:$4 sm:$0xff] %v1448
      %v2065 = vld.sshfl [vmem:[#allocation1] sm:$0xff pattern:$0x73625140]
      %v2066 = vld.sshfl [vmem:[#allocation1 + $0x20] sm:$0xff pattern:$0x73625140]
      %2067 = vst [vmem:[#allocation1] ss:$4 sm:$0xff] %v1448
      %2068 = vst [vmem:[%s1971] ss:$4 sm:$0xff] %v1783
      %2069 = vst [vmem:[%s1973] ss:$4 sm:$0xff] %v1784
      %2070 = vst [vmem:[%s1975] ss:$4 sm:$0xff] %v1785
      %2071 = vst [vmem:[%s1977] ss:$4 sm:$0xff] %v1448
      %2072 = vst [vmem:[%s1979] ss:$4 sm:$0xff] %v1783
      %2073 = vst [vmem:[%s1981] ss:$4 sm:$0xff] %v1784
      %2074 = vst [vmem:[%s1983] ss:$4 sm:$0xff] %v1785
      %v2075 = vld.sshfl [vmem:[#allocation1] sm:$0xff pattern:$0x73625140]
      %v2076 = vld.sshfl [vmem:[#allocation1 + $0x20] sm:$0xff pattern:$0x73625140]
      %2077 = vst [vmem:[#allocation1] ss:$4 sm:$0xff] %v1448
      %2078 = vst [vmem:[%s1971] ss:$4 sm:$0xff] %v1448
      %2079 = vst [vmem:[%s1973] ss:$4 sm:$0xff] %v1783
      %2080 = vst [vmem:[%s1975] ss:$4 sm:$0xff] %v1784
      %2081 = vst [vmem:[%s1977] ss:$4 sm:$0xff] %v1785
      %2082 = vst [vmem:[%s1979] ss:$4 sm:$0xff] %v1448
      %2083 = vst [vmem:[%s1981] ss:$4 sm:$0xff] %v1783
      %2084 = vst [vmem:[%s1983] ss:$4 sm:$0xff] %v1784
      %v2085 = vld.sshfl [vmem:[#allocation1] sm:$0xff pattern:$0x73625140]
      %v2086 = vld.sshfl [vmem:[#allocation1 + $0x20] sm:$0xff pattern:$0x73625140]
      %2087 = vst [vmem:[#allocation1] ss:$4 sm:$0xff] %v1785
      %2088 = vst [vmem:[%s1971] ss:$4 sm:$0xff] %v1448
      %v2089 = vld.sshfl [vmem:[#allocation1] sm:$0xff pattern:$0x73625140]
      %vm2113 = vcmask 293888
      %v2114 = vsel %vm2113, %v1807, 0
      %v2116 = vsel %vm2113, %v1821, 0
      %v2118 = vsel %vm2113, %v1835, 0
      %v2120 = vsel %vm2113, %v1849, 0
      %v2122 = vsel %vm2113, %v1864, 0
      %v2124 = vsel %vm2113, %v1878, 0
      %v2126 = vsel %vm2113, %v1892, 0
      %v2128 = vsel %vm2113, %v1906, 0
      %v2130 = vsel %vm2113, %v1921, 0
      %v2132 = vsel %vm2113, %v1936, 0
      %v2134 = vsel %vm2113, %v1950, 0
      %v2136 = vsel %vm2113, %v1954, 0
      %vm2138 = vcmask 1041408
      %v2140 = vsel %vm2138, %v1967, 0
      %2142 = vmatpush.bf16.msra.mxu0 0
      %2143 = vmatpush.bf16.msra.mxu0 0
      %2144 = vmatpush.bf16.msra.mxu0 0
      %2145 = vmatpush.bf16.msra.mxu0 0
      %2146 = vmatpush.bf16.msra.mxu0 0
      %2147 = vmatpush.bf16.msra.mxu0 %v2140
      %2148 = vmatpush.bf16.msra.mxu0 %v1966
      %2149 = vmatpush.bf16.msra.mxu0 %v1965
      %2150 = vmatmul.bf16.gmra.mxu0 %v2114
      %v2151 = vpop.f32.mrf.mxu0
      %v2152 = vadd.f32 %v1985, %v2151
      %v2153 = vpop.f32.mrf.mxu0
      %v2154 = vadd.f32 %v1986, %v2153
      %2155 = vmatmul.bf16.gmra.mxu0 %v2116
      %v2156 = vpop.f32.mrf.mxu0
      %v2157 = vadd.f32 %v1995, %v2156
      %v2158 = vpop.f32.mrf.mxu0
      %v2159 = vadd.f32 %v1996, %v2158
      %2160 = vmatmul.bf16.gmra.mxu0 %v2118
      %v2161 = vpop.f32.mrf.mxu0
      %v2162 = vadd.f32 %v2005, %v2161
      %v2163 = vpop.f32.mrf.mxu0
      %v2164 = vadd.f32 %v2006, %v2163
      %2165 = vmatmul.bf16.gmra.mxu0 %v2120
      %v2166 = vpop.f32.mrf.mxu0
      %v2167 = vadd.f32 %v2015, %v2166
      %v2168 = vpop.f32.mrf.mxu0
      %v2169 = vadd.f32 %v2016, %v2168
      %2170 = vmatmul.bf16.gmra.mxu0 %v2122
      %v2171 = vpop.f32.mrf.mxu0
      %v2172 = vadd.f32 %v2025, %v2171
      %v2173 = vpop.f32.mrf.mxu0
      %v2174 = vadd.f32 %v2026, %v2173
      %2175 = vmatmul.bf16.gmra.mxu0 %v2124
      %v2176 = vpop.f32.mrf.mxu0
      %v2177 = vadd.f32 %v2035, %v2176
      %v2178 = vpop.f32.mrf.mxu0
      %v2179 = vadd.f32 %v2036, %v2178
      %2180 = vmatmul.bf16.gmra.mxu0 %v2126
      %v2181 = vpop.f32.mrf.mxu0
      %v2182 = vadd.f32 %v2045, %v2181
      %v2183 = vpop.f32.mrf.mxu0
      %v2184 = vadd.f32 %v2046, %v2183
      %2185 = vmatmul.bf16.gmra.mxu0 %v2128
      %v2186 = vpop.f32.mrf.mxu0
      %v2187 = vadd.f32 %v2055, %v2186
      %v2188 = vpop.f32.mrf.mxu0
      %v2189 = vadd.f32 %v2056, %v2188
      %2190 = vmatmul.bf16.gmra.mxu0 %v2130
      %v2191 = vpop.f32.mrf.mxu0
      %v2192 = vadd.f32 %v2065, %v2191
      %v2193 = vpop.f32.mrf.mxu0
      %v2194 = vadd.f32 %v2066, %v2193
      %2195 = vmatmul.bf16.gmra.mxu0 %v2132
      %v2196 = vpop.f32.mrf.mxu0
      %v2197 = vadd.f32 %v2075, %v2196
      %v2198 = vpop.f32.mrf.mxu0
      %v2199 = vadd.f32 %v2076, %v2198
      %2200 = vmatmul.bf16.gmra.mxu0 %v2134
      %v2201 = vpop.f32.mrf.mxu0
      %v2202 = vadd.f32 %v2085, %v2201
      %v2203 = vpop.f32.mrf.mxu0
      %v2204 = vadd.f32 %v2086, %v2203
      %2205 = vmatmul.bf16.gmra.mxu0 %v2136
      %v2206 = vpop.f32.mrf.mxu0
      %v2207 = vadd.f32 %v2089, %v2206
      %v2208 = vpop.f32.mrf.mxu0
      %2209 = vdwg.mxu0
      %v2233 = vrot.slane %v2152, 2
      %v2234 = vrot.slane %v2152, 4
      %v2235 = vrot.slane %v2152, 6
      %v2236 = vrot.slane %v2154, 2
      %v2237 = vrot.slane %v2154, 4
      %v2238 = vrot.slane %v2154, 6
      %v2239 = vrot.slane %v2157, 2
      %v2240 = vrot.slane %v2157, 4
      %v2241 = vrot.slane %v2157, 6
      %v2242 = vrot.slane %v2159, 2
      %v2243 = vrot.slane %v2159, 4
      %v2244 = vrot.slane %v2159, 6
      %v2245 = vrot.slane %v2162, 2
      %v2246 = vrot.slane %v2162, 4
      %v2247 = vrot.slane %v2162, 6
      %v2248 = vrot.slane %v2164, 2
      %v2249 = vrot.slane %v2164, 4
      %v2250 = vrot.slane %v2164, 6
      %v2251 = vrot.slane %v2167, 2
      %v2252 = vrot.slane %v2167, 4
      %v2253 = vrot.slane %v2167, 6
      %v2254 = vrot.slane %v2169, 2
      %v2255 = vrot.slane %v2169, 4
      %v2256 = vrot.slane %v2169, 6
      %v2257 = vrot.slane %v2172, 2
      %v2258 = vrot.slane %v2172, 4
      %v2259 = vrot.slane %v2172, 6
      %v2260 = vrot.slane %v2174, 2
      %v2261 = vrot.slane %v2174, 4
      %v2262 = vrot.slane %v2174, 6
      %v2263 = vrot.slane %v2177, 2
      %v2264 = vrot.slane %v2177, 4
      %v2265 = vrot.slane %v2177, 6
      %v2266 = vrot.slane %v2179, 2
      %v2267 = vrot.slane %v2179, 4
      %v2268 = vrot.slane %v2179, 6
      %v2269 = vrot.slane %v2182, 2
      %v2270 = vrot.slane %v2182, 4
      %v2271 = vrot.slane %v2182, 6
      %v2272 = vrot.slane %v2184, 2
      %v2273 = vrot.slane %v2184, 4
      %v2274 = vrot.slane %v2184, 6
      %v2275 = vrot.slane %v2187, 2
      %v2276 = vrot.slane %v2187, 4
      %v2277 = vrot.slane %v2187, 6
      %v2278 = vrot.slane %v2189, 2
      %v2279 = vrot.slane %v2189, 4
      %v2280 = vrot.slane %v2189, 6
      %v2281 = vrot.slane %v2192, 2
      %v2282 = vrot.slane %v2192, 4
      %v2283 = vrot.slane %v2192, 6
      %v2284 = vrot.slane %v2194, 2
      %v2285 = vrot.slane %v2194, 4
      %v2286 = vrot.slane %v2194, 6
      %v2287 = vrot.slane %v2197, 2
      %v2288 = vrot.slane %v2197, 4
      %v2289 = vrot.slane %v2197, 6
      %v2290 = vrot.slane %v2199, 2
      %v2291 = vrot.slane %v2199, 4
      %v2292 = vrot.slane %v2199, 6
      %v2293 = vrot.slane %v2202, 2
      %v2294 = vrot.slane %v2202, 4
      %v2295 = vrot.slane %v2202, 6
      %v2296 = vrot.slane %v2204, 2
      %v2297 = vrot.slane %v2204, 4
      %v2298 = vrot.slane %v2204, 6
      %v2299 = vrot.slane %v2207, 2
      %v2367 = vmax.f32 %v2152, 0.0
      %v2368 = vmax.f32 %v2233, 0.0
      %v2369 = vmax.f32 %v2234, 0.0
      %v2370 = vmax.f32 %v2235, 0.0
      %v2371 = vmax.f32 %v2154, 0.0
      %v2372 = vmax.f32 %v2236, 0.0
      %v2373 = vmax.f32 %v2237, 0.0
      %v2374 = vmax.f32 %v2238, 0.0
      %v2375 = vmax.f32 %v2157, 0.0
      %v2376 = vmax.f32 %v2239, 0.0
      %v2377 = vmax.f32 %v2240, 0.0
      %v2378 = vmax.f32 %v2241, 0.0
      %v2379 = vmax.f32 %v2159, 0.0
      %v2380 = vmax.f32 %v2242, 0.0
      %v2381 = vmax.f32 %v2243, 0.0
      %v2382 = vmax.f32 %v2244, 0.0
      %v2383 = vmax.f32 %v2162, 0.0
      %v2384 = vmax.f32 %v2245, 0.0
      %v2385 = vmax.f32 %v2246, 0.0
      %v2386 = vmax.f32 %v2247, 0.0
      %v2387 = vmax.f32 %v2164, 0.0
      %v2388 = vmax.f32 %v2248, 0.0
      %v2389 = vmax.f32 %v2249, 0.0
      %v2390 = vmax.f32 %v2250, 0.0
      %v2391 = vmax.f32 %v2167, 0.0
      %v2392 = vmax.f32 %v2251, 0.0
      %v2393 = vmax.f32 %v2252, 0.0
      %v2394 = vmax.f32 %v2253, 0.0
      %v2395 = vmax.f32 %v2169, 0.0
      %v2396 = vmax.f32 %v2254, 0.0
      %v2397 = vmax.f32 %v2255, 0.0
      %v2398 = vmax.f32 %v2256, 0.0
      %v2399 = vmax.f32 %v2172, 0.0
      %v2400 = vmax.f32 %v2257, 0.0
      %v2401 = vmax.f32 %v2258, 0.0
      %v2402 = vmax.f32 %v2259, 0.0
      %v2403 = vmax.f32 %v2174, 0.0
      %v2404 = vmax.f32 %v2260, 0.0
      %v2405 = vmax.f32 %v2261, 0.0
      %v2406 = vmax.f32 %v2262, 0.0
      %v2407 = vmax.f32 %v2177, 0.0
      %v2408 = vmax.f32 %v2263, 0.0
      %v2409 = vmax.f32 %v2264, 0.0
      %v2410 = vmax.f32 %v2265, 0.0
      %v2411 = vmax.f32 %v2179, 0.0
      %v2412 = vmax.f32 %v2266, 0.0
      %v2413 = vmax.f32 %v2267, 0.0
      %v2414 = vmax.f32 %v2268, 0.0
      %v2415 = vmax.f32 %v2182, 0.0
      %v2416 = vmax.f32 %v2269, 0.0
      %v2417 = vmax.f32 %v2270, 0.0
      %v2418 = vmax.f32 %v2271, 0.0
      %v2419 = vmax.f32 %v2184, 0.0
      %v2420 = vmax.f32 %v2272, 0.0
      %v2421 = vmax.f32 %v2273, 0.0
      %v2422 = vmax.f32 %v2274, 0.0
      %v2423 = vmax.f32 %v2187, 0.0
      %v2424 = vmax.f32 %v2275, 0.0
      %v2425 = vmax.f32 %v2276, 0.0
      %v2426 = vmax.f32 %v2277, 0.0
      %v2427 = vmax.f32 %v2189, 0.0
      %v2428 = vmax.f32 %v2278, 0.0
      %v2429 = vmax.f32 %v2279, 0.0
      %v2430 = vmax.f32 %v2280, 0.0
      %v2431 = vmax.f32 %v2192, 0.0
      %v2432 = vmax.f32 %v2281, 0.0
      %v2433 = vmax.f32 %v2282, 0.0
      %v2434 = vmax.f32 %v2283, 0.0
      %v2435 = vmax.f32 %v2194, 0.0
      %v2436 = vmax.f32 %v2284, 0.0
      %v2437 = vmax.f32 %v2285, 0.0
      %v2438 = vmax.f32 %v2286, 0.0
      %v2439 = vmax.f32 %v2197, 0.0
      %v2440 = vmax.f32 %v2287, 0.0
      %v2441 = vmax.f32 %v2288, 0.0
      %v2442 = vmax.f32 %v2289, 0.0
      %v2443 = vmax.f32 %v2199, 0.0
      %v2444 = vmax.f32 %v2290, 0.0
      %v2445 = vmax.f32 %v2291, 0.0
      %v2446 = vmax.f32 %v2292, 0.0
      %v2447 = vmax.f32 %v2202, 0.0
      %v2448 = vmax.f32 %v2293, 0.0
      %v2449 = vmax.f32 %v2294, 0.0
      %v2450 = vmax.f32 %v2295, 0.0
      %v2451 = vmax.f32 %v2204, 0.0
      %v2452 = vmax.f32 %v2296, 0.0
      %v2453 = vmax.f32 %v2297, 0.0
      %v2454 = vmax.f32 %v2298, 0.0
      %v2455 = vmax.f32 %v2207, 0.0
      %v2456 = vmax.f32 %v2299, 0.0
      %v2457 = vlaneseq
      %v2458 = vshrl.u32 %v2457, 7
      %v2459 = vadd.s32 %v2458, 8
      %v2460 = vadd.s32 %v2458, 16
      %s2461 = ssub.s32 %s246, 1
      %v2462 = vstv %s2461
      %v2463 = vadd.s32 %v2462, 1
      %v2464 = vadd.s32 %v2462, 2
      %v2465 = vadd.s32 %v2462, 3
      %v2466 = vadd.s32 %v2462, 4
      %v2467 = vadd.s32 %v2462, 5
      %v2468 = vadd.s32 %v2462, 6
      %v2469 = vadd.s32 %v2462, 7
      %v2470 = vadd.s32 %v2462, 8
      %v2471 = vadd.s32 %v2462, 9
      %vm2472 = vcmp.ge.s32.totalorder %v2462, 0
      %vm2473 = vcmp.ge.s32.totalorder %v2463, 0
      %vm2474 = vcmp.ge.s32.totalorder %v2464, 0
      %vm2475 = vcmp.ge.s32.totalorder %v2465, 0
      %vm2476 = vcmp.ge.s32.totalorder %v2466, 0
      %vm2477 = vcmp.ge.s32.totalorder %v2467, 0
      %vm2478 = vcmp.ge.s32.totalorder %v2468, 0
      %vm2479 = vcmp.ge.s32.totalorder %v2469, 0
      %vm2480 = vcmp.ge.s32.totalorder %v2470, 0
      %vm2481 = vcmp.ge.s32.totalorder %v2471, 0
      %vm2482 = vcmp.lt.s32.totalorder %v2462, 16
      %vm2483 = vcmp.lt.s32.totalorder %v2463, 16
      %vm2484 = vcmp.lt.s32.totalorder %v2464, 16
      %vm2485 = vcmp.lt.s32.totalorder %v2465, 16
      %vm2486 = vcmp.lt.s32.totalorder %v2466, 16
      %vm2487 = vcmp.lt.s32.totalorder %v2467, 16
      %vm2488 = vcmp.lt.s32.totalorder %v2468, 16
      %vm2489 = vcmp.lt.s32.totalorder %v2469, 16
      %vm2490 = vcmp.lt.s32.totalorder %v2470, 16
      %vm2491 = vcmp.lt.s32.totalorder %v2471, 16
      %vm2492 = vmand %vm2472, %vm2482
      %vm2493 = vmand %vm2473, %vm2483
      %vm2494 = vmand %vm2474, %vm2484
      %vm2495 = vmand %vm2475, %vm2485
      %vm2496 = vmand %vm2476, %vm2486
      %vm2497 = vmand %vm2477, %vm2487
      %vm2498 = vmand %vm2478, %vm2488
      %vm2499 = vmand %vm2479, %vm2489
      %vm2500 = vmand %vm2480, %vm2490
      %vm2501 = vmand %vm2481, %vm2491
      %vm2502 = vcmp.ge.s32.totalorder %v2458, 1
      %vm2503 = vcmp.ge.s32.totalorder %v2459, 1
      %vm2504 = vcmp.ge.s32.totalorder %v2460, 1
      %vm2505 = vmand %vm2492, %vm2502
      %vm2506 = vmand %vm2492, %vm2503
      %vm2507 = vmand %vm2492, %vm2504
      %vm2508 = vmand %vm2493, %vm2502
      %vm2509 = vmand %vm2493, %vm2503
      %vm2510 = vmand %vm2493, %vm2504
      %vm2511 = vmand %vm2494, %vm2502
      %vm2512 = vmand %vm2494, %vm2503
      %vm2513 = vmand %vm2494, %vm2504
      %vm2514 = vmand %vm2495, %vm2502
      %vm2515 = vmand %vm2495, %vm2503
      %vm2516 = vmand %vm2495, %vm2504
      %vm2517 = vmand %vm2496, %vm2502
      %vm2518 = vmand %vm2496, %vm2503
      %vm2519 = vmand %vm2496, %vm2504
      %vm2520 = vmand %vm2497, %vm2502
      %vm2521 = vmand %vm2497, %vm2503
      %vm2522 = vmand %vm2497, %vm2504
      %vm2523 = vmand %vm2498, %vm2502
      %vm2524 = vmand %vm2498, %vm2503
      %vm2525 = vmand %vm2498, %vm2504
      %vm2526 = vmand %vm2499, %vm2502
      %vm2527 = vmand %vm2499, %vm2503
      %vm2528 = vmand %vm2499, %vm2504
      %vm2529 = vmand %vm2500, %vm2502
      %vm2530 = vmand %vm2500, %vm2503
      %vm2531 = vmand %vm2500, %vm2504
      %vm2532 = vmand %vm2501, %vm2502
      %vm2533 = vmand %vm2501, %vm2503
      %vm2534 = vmand %vm2501, %vm2504
      %vm2535 = vcmp.le.s32.totalorder %v2458, 16
      %vm2536 = vcmp.le.s32.totalorder %v2459, 16
      %vm2537 = vcmp.le.s32.totalorder %v2460, 16
      %vm2538 = vmand %vm2505, %vm2535
      %vm2539 = vmand %vm2506, %vm2536
      %vm2540 = vmand %vm2507, %vm2537
      %vm2541 = vmand %vm2508, %vm2535
      %vm2542 = vmand %vm2509, %vm2536
      %vm2543 = vmand %vm2510, %vm2537
      %vm2544 = vmand %vm2511, %vm2535
      %vm2545 = vmand %vm2512, %vm2536
      %vm2546 = vmand %vm2513, %vm2537
      %vm2547 = vmand %vm2514, %vm2535
      %vm2548 = vmand %vm2515, %vm2536
      %vm2549 = vmand %vm2516, %vm2537
      %vm2550 = vmand %vm2517, %vm2535
      %vm2551 = vmand %vm2518, %vm2536
      %vm2552 = vmand %vm2519, %vm2537
      %vm2553 = vmand %vm2520, %vm2535
      %vm2554 = vmand %vm2521, %vm2536
      %vm2555 = vmand %vm2522, %vm2537
      %vm2556 = vmand %vm2523, %vm2535
      %vm2557 = vmand %vm2524, %vm2536
      %vm2558 = vmand %vm2525, %vm2537
      %vm2559 = vmand %vm2526, %vm2535
      %vm2560 = vmand %vm2527, %vm2536
      %vm2561 = vmand %vm2528, %vm2537
      %vm2562 = vmand %vm2529, %vm2535
      %vm2563 = vmand %vm2530, %vm2536
      %vm2564 = vmand %vm2531, %vm2537
      %vm2565 = vmand %vm2532, %vm2535
      %vm2566 = vmand %vm2533, %vm2536
      %vm2567 = vmand %vm2534, %vm2537
      %v2568 = vsel %vm2538, 1, 0
      %v2569 = vsel %vm2539, 1, 0
      %v2570 = vsel %vm2540, 1, 0
      %v2571 = vsel %vm2541, 1, 0
      %v2572 = vsel %vm2542, 1, 0
      %v2573 = vsel %vm2543, 1, 0
      %v2574 = vsel %vm2544, 1, 0
      %v2575 = vsel %vm2545, 1, 0
      %v2576 = vsel %vm2546, 1, 0
      %v2577 = vsel %vm2547, 1, 0
      %v2578 = vsel %vm2548, 1, 0
      %v2579 = vsel %vm2549, 1, 0
      %v2580 = vsel %vm2550, 1, 0
      %v2581 = vsel %vm2551, 1, 0
      %v2582 = vsel %vm2552, 1, 0
      %v2583 = vsel %vm2553, 1, 0
      %v2584 = vsel %vm2554, 1, 0
      %v2585 = vsel %vm2555, 1, 0
      %v2586 = vsel %vm2556, 1, 0
      %v2587 = vsel %vm2557, 1, 0
      %v2588 = vsel %vm2558, 1, 0
      %v2589 = vsel %vm2559, 1, 0
      %v2590 = vsel %vm2560, 1, 0
      %v2591 = vsel %vm2561, 1, 0
      %v2592 = vsel %vm2562, 1, 0
      %v2593 = vsel %vm2563, 1, 0
      %v2594 = vsel %vm2564, 1, 0
      %v2595 = vsel %vm2565, 1, 0
      %v2596 = vsel %vm2566, 1, 0
      %v2597 = vsel %vm2567, 1, 0
      %vm2598 = vcmp.eq.s32.totalorder %v2568, 1
      %vm2599 = vcmp.eq.s32.totalorder %v2569, 1
      %vm2600 = vcmp.eq.s32.totalorder %v2570, 1
      %vm2601 = vcmp.eq.s32.totalorder %v2571, 1
      %vm2602 = vcmp.eq.s32.totalorder %v2572, 1
      %vm2603 = vcmp.eq.s32.totalorder %v2573, 1
      %vm2604 = vcmp.eq.s32.totalorder %v2574, 1
      %vm2605 = vcmp.eq.s32.totalorder %v2575, 1
      %vm2606 = vcmp.eq.s32.totalorder %v2576, 1
      %vm2607 = vcmp.eq.s32.totalorder %v2577, 1
      %vm2608 = vcmp.eq.s32.totalorder %v2578, 1
      %vm2609 = vcmp.eq.s32.totalorder %v2579, 1
      %vm2610 = vcmp.eq.s32.totalorder %v2580, 1
      %vm2611 = vcmp.eq.s32.totalorder %v2581, 1
      %vm2612 = vcmp.eq.s32.totalorder %v2582, 1
      %vm2613 = vcmp.eq.s32.totalorder %v2583, 1
      %vm2614 = vcmp.eq.s32.totalorder %v2584, 1
      %vm2615 = vcmp.eq.s32.totalorder %v2585, 1
      %vm2616 = vcmp.eq.s32.totalorder %v2586, 1
      %vm2617 = vcmp.eq.s32.totalorder %v2587, 1
      %vm2618 = vcmp.eq.s32.totalorder %v2588, 1
      %vm2619 = vcmp.eq.s32.totalorder %v2589, 1
      %vm2620 = vcmp.eq.s32.totalorder %v2590, 1
      %vm2621 = vcmp.eq.s32.totalorder %v2591, 1
      %vm2622 = vcmp.eq.s32.totalorder %v2592, 1
      %vm2623 = vcmp.eq.s32.totalorder %v2593, 1
      %vm2624 = vcmp.eq.s32.totalorder %v2594, 1
      %vm2625 = vcmp.eq.s32.totalorder %v2595, 1
      %vm2626 = vcmp.eq.s32.totalorder %v2596, 1
      %vm2627 = vcmp.eq.s32.totalorder %v2597, 1
      %2718 = vst [vmem:[#allocation1] ss:$4 sm:$0xff] %v2367
      %s2719 = scalar_lea.vmem [#allocation1], 1
      %2720 = vst [vmem:[%s2719] ss:$4 sm:$0xff] %v2368
      %s2721 = scalar_lea.vmem [#allocation1], 2
      %2722 = vst [vmem:[%s2721] ss:$4 sm:$0xff] %v2369
      %s2723 = scalar_lea.vmem [#allocation1], 3
      %2724 = vst [vmem:[%s2723] ss:$4 sm:$0xff] %v2370
      %s2725 = scalar_lea.vmem [#allocation1], 32
      %2726 = vst [vmem:[%s2725] ss:$4 sm:$0xff] %v2371
      %s2727 = scalar_lea.vmem [#allocation1], 33
      %2728 = vst [vmem:[%s2727] ss:$4 sm:$0xff] %v2372
      %s2729 = scalar_lea.vmem [#allocation1], 34
      %2730 = vst [vmem:[%s2729] ss:$4 sm:$0xff] %v2373
      %s2731 = scalar_lea.vmem [#allocation1], 35
      %2732 = vst [vmem:[%s2731] ss:$4 sm:$0xff] %v2374
      %v2733 = vld.sshfl [vmem:[#allocation1] sm:$0xff pattern:$0x73625140]
      %v2734 = vld.sshfl [vmem:[#allocation1 + $0x20] sm:$0xff pattern:$0x73625140]
      %2735 = vst [vmem:[#allocation1] ss:$4 sm:$0xff] %v2375
      %v2736 = vld.sshfl [vmem:[#allocation1] sm:$0xff pattern:$0x73625140]
      %2737 = vst [vmem:[%s2725] ss:$4 sm:$0xff] %v2376
      %2738 = vst [vmem:[%s2727] ss:$4 sm:$0xff] %v2377
      %2739 = vst [vmem:[%s2729] ss:$4 sm:$0xff] %v2378
      %2740 = vst [vmem:[%s2731] ss:$4 sm:$0xff] %v2379
      %v2741 = vld.sshfl [vmem:[#allocation1 + $0x20] sm:$0xff pattern:$0x73625140]
      %2742 = vst [vmem:[#allocation1] ss:$4 sm:$0xff] %v2380
      %2743 = vst [vmem:[%s2719] ss:$4 sm:$0xff] %v2381
      %2744 = vst [vmem:[%s2721] ss:$4 sm:$0xff] %v2382
      %2745 = vst [vmem:[%s2723] ss:$4 sm:$0xff] %v2383
      %2746 = vst [vmem:[%s2725] ss:$4 sm:$0xff] %v2384
      %v2747 = vld.sshfl [vmem:[#allocation1] sm:$0xff pattern:$0x73625140]
      %v2748 = vld.sshfl [vmem:[#allocation1 + $0x20] sm:$0xff pattern:$0x73625140]
      %2749 = vst [vmem:[#allocation1] ss:$4 sm:$0xff] %v2385
      %2750 = vst [vmem:[%s2719] ss:$4 sm:$0xff] %v2386
      %2751 = vst [vmem:[%s2721] ss:$4 sm:$0xff] %v2387
      %2752 = vst [vmem:[%s2723] ss:$4 sm:$0xff] %v2388
      %2753 = vst [vmem:[%s2725] ss:$4 sm:$0xff] %v2389
      %2754 = vst [vmem:[%s2727] ss:$4 sm:$0xff] %v2390
      %2755 = vst [vmem:[%s2729] ss:$4 sm:$0xff] %v2391
      %2756 = vst [vmem:[%s2731] ss:$4 sm:$0xff] %v2392
      %v2757 = vld.sshfl [vmem:[#allocation1] sm:$0xff pattern:$0x73625140]
      %v2758 = vld.sshfl [vmem:[#allocation1 + $0x20] sm:$0xff pattern:$0x73625140]
      %2759 = vst [vmem:[#allocation1] ss:$4 sm:$0xff] %v2393
      %v2760 = vld.sshfl [vmem:[#allocation1] sm:$0xff pattern:$0x73625140]
      %2761 = vst [vmem:[%s2725] ss:$4 sm:$0xff] %v2394
      %2762 = vst [vmem:[%s2727] ss:$4 sm:$0xff] %v2395
      %2763 = vst [vmem:[%s2729] ss:$4 sm:$0xff] %v2396
      %2764 = vst [vmem:[%s2731] ss:$4 sm:$0xff] %v2397
      %v2765 = vld.sshfl [vmem:[#allocation1 + $0x20] sm:$0xff pattern:$0x73625140]
      %2766 = vst [vmem:[#allocation1] ss:$4 sm:$0xff] %v2398
      %2767 = vst [vmem:[%s2719] ss:$4 sm:$0xff] %v2399
      %2768 = vst [vmem:[%s2721] ss:$4 sm:$0xff] %v2400
      %2769 = vst [vmem:[%s2723] ss:$4 sm:$0xff] %v2401
      %2770 = vst [vmem:[%s2725] ss:$4 sm:$0xff] %v2402
      %v2771 = vld.sshfl [vmem:[#allocation1] sm:$0xff pattern:$0x73625140]
      %v2772 = vld.sshfl [vmem:[#allocation1 + $0x20] sm:$0xff pattern:$0x73625140]
      %2773 = vst [vmem:[#allocation1] ss:$4 sm:$0xff] %v2403
      %2774 = vst [vmem:[%s2719] ss:$4 sm:$0xff] %v2404
      %2775 = vst [vmem:[%s2721] ss:$4 sm:$0xff] %v2405
      %2776 = vst [vmem:[%s2723] ss:$4 sm:$0xff] %v2406
      %2777 = vst [vmem:[%s2725] ss:$4 sm:$0xff] %v2407
      %2778 = vst [vmem:[%s2727] ss:$4 sm:$0xff] %v2408
      %2779 = vst [vmem:[%s2729] ss:$4 sm:$0xff] %v2409
      %2780 = vst [vmem:[%s2731] ss:$4 sm:$0xff] %v2410
      %v2781 = vld.sshfl [vmem:[#allocation1] sm:$0xff pattern:$0x73625140]
      %v2782 = vld.sshfl [vmem:[#allocation1 + $0x20] sm:$0xff pattern:$0x73625140]
      %2783 = vst [vmem:[#allocation1] ss:$4 sm:$0xff] %v2411
      %v2784 = vld.sshfl [vmem:[#allocation1] sm:$0xff pattern:$0x73625140]
      %2785 = vst [vmem:[%s2725] ss:$4 sm:$0xff] %v2412
      %2786 = vst [vmem:[%s2727] ss:$4 sm:$0xff] %v2413
      %2787 = vst [vmem:[%s2729] ss:$4 sm:$0xff] %v2414
      %2788 = vst [vmem:[%s2731] ss:$4 sm:$0xff] %v2415
      %v2789 = vld.sshfl [vmem:[#allocation1 + $0x20] sm:$0xff pattern:$0x73625140]
      %2790 = vst [vmem:[#allocation1] ss:$4 sm:$0xff] %v2416
      %2791 = vst [vmem:[%s2719] ss:$4 sm:$0xff] %v2417
      %2792 = vst [vmem:[%s2721] ss:$4 sm:$0xff] %v2418
      %2793 = vst [vmem:[%s2723] ss:$4 sm:$0xff] %v2419
      %2794 = vst [vmem:[%s2725] ss:$4 sm:$0xff] %v2420
      %v2795 = vld.sshfl [vmem:[#allocation1] sm:$0xff pattern:$0x73625140]
      %v2796 = vld.sshfl [vmem:[#allocation1 + $0x20] sm:$0xff pattern:$0x73625140]
      %2797 = vst [vmem:[#allocation1] ss:$4 sm:$0xff] %v2421
      %2798 = vst [vmem:[%s2719] ss:$4 sm:$0xff] %v2422
      %2799 = vst [vmem:[%s2721] ss:$4 sm:$0xff] %v2423
      %2800 = vst [vmem:[%s2723] ss:$4 sm:$0xff] %v2424
      %2801 = vst [vmem:[%s2725] ss:$4 sm:$0xff] %v2425
      %2802 = vst [vmem:[%s2727] ss:$4 sm:$0xff] %v2426
      %2803 = vst [vmem:[%s2729] ss:$4 sm:$0xff] %v2427
      %2804 = vst [vmem:[%s2731] ss:$4 sm:$0xff] %v2428
      %v2805 = vld.sshfl [vmem:[#allocation1] sm:$0xff pattern:$0x73625140]
      %v2806 = vld.sshfl [vmem:[#allocation1 + $0x20] sm:$0xff pattern:$0x73625140]
      %2807 = vst [vmem:[#allocation1] ss:$4 sm:$0xff] %v2429
      %v2808 = vld.sshfl [vmem:[#allocation1] sm:$0xff pattern:$0x73625140]
      %2809 = vst [vmem:[%s2725] ss:$4 sm:$0xff] %v2430
      %2810 = vst [vmem:[%s2727] ss:$4 sm:$0xff] %v2431
      %2811 = vst [vmem:[%s2729] ss:$4 sm:$0xff] %v2432
      %2812 = vst [vmem:[%s2731] ss:$4 sm:$0xff] %v2433
      %v2813 = vld.sshfl [vmem:[#allocation1 + $0x20] sm:$0xff pattern:$0x73625140]
      %2814 = vst [vmem:[#allocation1] ss:$4 sm:$0xff] %v2434
      %2815 = vst [vmem:[%s2719] ss:$4 sm:$0xff] %v2435
      %2816 = vst [vmem:[%s2721] ss:$4 sm:$0xff] %v2436
      %2817 = vst [vmem:[%s2723] ss:$4 sm:$0xff] %v2437
      %2818 = vst [vmem:[%s2725] ss:$4 sm:$0xff] %v2438
      %v2819 = vld.sshfl [vmem:[#allocation1] sm:$0xff pattern:$0x73625140]
      %v2820 = vld.sshfl [vmem:[#allocation1 + $0x20] sm:$0xff pattern:$0x73625140]
      %2821 = vst [vmem:[#allocation1] ss:$4 sm:$0xff] %v2439
      %2822 = vst [vmem:[%s2719] ss:$4 sm:$0xff] %v2440
      %2823 = vst [vmem:[%s2721] ss:$4 sm:$0xff] %v2441
      %2824 = vst [vmem:[%s2723] ss:$4 sm:$0xff] %v2442
      %2825 = vst [vmem:[%s2725] ss:$4 sm:$0xff] %v2443
      %2826 = vst [vmem:[%s2727] ss:$4 sm:$0xff] %v2444
      %2827 = vst [vmem:[%s2729] ss:$4 sm:$0xff] %v2445
      %2828 = vst [vmem:[%s2731] ss:$4 sm:$0xff] %v2446
      %v2829 = vld.sshfl [vmem:[#allocation1] sm:$0xff pattern:$0x73625140]
      %v2830 = vld.sshfl [vmem:[#allocation1 + $0x20] sm:$0xff pattern:$0x73625140]
      %2831 = vst [vmem:[#allocation1] ss:$4 sm:$0xff] %v2447
      %v2832 = vld.sshfl [vmem:[#allocation1] sm:$0xff pattern:$0x73625140]
      %2833 = vst [vmem:[%s2725] ss:$4 sm:$0xff] %v2448
      %2834 = vst [vmem:[%s2727] ss:$4 sm:$0xff] %v2449
      %2835 = vst [vmem:[%s2729] ss:$4 sm:$0xff] %v2450
      %2836 = vst [vmem:[%s2731] ss:$4 sm:$0xff] %v2451
      %v2837 = vld.sshfl [vmem:[#allocation1 + $0x20] sm:$0xff pattern:$0x73625140]
      %2838 = vst [vmem:[#allocation1] ss:$4 sm:$0xff] %v2452
      %2839 = vst [vmem:[%s2719] ss:$4 sm:$0xff] %v2453
      %2840 = vst [vmem:[%s2721] ss:$4 sm:$0xff] %v2454
      %2841 = vst [vmem:[%s2723] ss:$4 sm:$0xff] %v2455
      %2842 = vst [vmem:[%s2725] ss:$4 sm:$0xff] %v2456
      %v2843 = vld.sshfl [vmem:[#allocation1] sm:$0xff pattern:$0x73625140]
      %v2844 = vld.sshfl [vmem:[#allocation1 + $0x20] sm:$0xff pattern:$0x73625140]
      %v2875 = vsel %vm2598, %v2733, 0.0
      %v2876 = vsel %vm2599, %v2734, 0.0
      %v2877 = vsel %vm2600, %v2736, 0.0
      %v2878 = vsel %vm2601, %v2741, 0.0
      %v2879 = vsel %vm2602, %v2747, 0.0
      %v2880 = vsel %vm2603, %v2748, 0.0
      %v2881 = vsel %vm2604, %v2757, 0.0
      %v2882 = vsel %vm2605, %v2758, 0.0
      %v2883 = vsel %vm2606, %v2760, 0.0
      %v2884 = vsel %vm2607, %v2765, 0.0
      %v2885 = vsel %vm2608, %v2771, 0.0
      %v2886 = vsel %vm2609, %v2772, 0.0
      %v2887 = vsel %vm2610, %v2781, 0.0
      %v2888 = vsel %vm2611, %v2782, 0.0
      %v2889 = vsel %vm2612, %v2784, 0.0
      %v2890 = vsel %vm2613, %v2789, 0.0
      %v2891 = vsel %vm2614, %v2795, 0.0
      %v2892 = vsel %vm2615, %v2796, 0.0
      %v2893 = vsel %vm2616, %v2805, 0.0
      %v2894 = vsel %vm2617, %v2806, 0.0
      %v2895 = vsel %vm2618, %v2808, 0.0
      %v2896 = vsel %vm2619, %v2813, 0.0
      %v2897 = vsel %vm2620, %v2819, 0.0
      %v2898 = vsel %vm2621, %v2820, 0.0
      %v2899 = vsel %vm2622, %v2829, 0.0
      %v2900 = vsel %vm2623, %v2830, 0.0
      %v2901 = vsel %vm2624, %v2832, 0.0
      %v2902 = vsel %vm2625, %v2837, 0.0
      %v2903 = vsel %vm2626, %v2843, 0.0
      %v2904 = vsel %vm2627, %v2844, 0.0
      %v2929 = vrot.slane %v2875, 1
      %v2930 = vrot.slane %v2876, 1
      %v2931 = vsel %vm315, %v2929, %v2930
      %v2932 = vrot.slane %v2877, 1
      %v2933 = vsel %vm315, %v2930, %v2932
      %v2934 = vrot.slane %v2878, 1
      %v2935 = vrot.slane %v2879, 1
      %v2936 = vsel %vm315, %v2934, %v2935
      %v2937 = vrot.slane %v2880, 1
      %v2938 = vsel %vm315, %v2935, %v2937
      %v2939 = vrot.slane %v2881, 1
      %v2940 = vrot.slane %v2882, 1
      %v2941 = vsel %vm315, %v2939, %v2940
      %v2942 = vrot.slane %v2883, 1
      %v2943 = vsel %vm315, %v2940, %v2942
      %v2944 = vrot.slane %v2884, 1
      %v2945 = vrot.slane %v2885, 1
      %v2946 = vsel %vm315, %v2944, %v2945
      %v2947 = vrot.slane %v2886, 1
      %v2948 = vsel %vm315, %v2945, %v2947
      %v2949 = vrot.slane %v2887, 1
      %v2950 = vrot.slane %v2888, 1
      %v2951 = vsel %vm315, %v2949, %v2950
      %v2952 = vrot.slane %v2889, 1
      %v2953 = vsel %vm315, %v2950, %v2952
      %v2954 = vrot.slane %v2890, 1
      %v2955 = vrot.slane %v2891, 1
      %v2956 = vsel %vm315, %v2954, %v2955
      %v2957 = vrot.slane %v2892, 1
      %v2958 = vsel %vm315, %v2955, %v2957
      %v2959 = vrot.slane %v2893, 1
      %v2960 = vrot.slane %v2894, 1
      %v2961 = vsel %vm315, %v2959, %v2960
      %v2962 = vrot.slane %v2895, 1
      %v2963 = vsel %vm315, %v2960, %v2962
      %v2964 = vrot.slane %v2896, 1
      %v2965 = vrot.slane %v2897, 1
      %v2966 = vsel %vm315, %v2964, %v2965
      %v2967 = vrot.slane %v2898, 1
      %v2968 = vsel %vm315, %v2965, %v2967
      %2969 = vrot.lane.b32.xlu0 %v2931, 8
      %v2970 = vpop.permute.xlu0 %2969
      %2971 = vrot.lane.b32.xlu0 %v2933, 8
      %v2972 = vpop.permute.xlu0 %2971
      %2973 = vrot.lane.b32.xlu0 %v2936, 8
      %v2974 = vpop.permute.xlu0 %2973
      %2975 = vrot.lane.b32.xlu0 %v2938, 8
      %v2976 = vpop.permute.xlu0 %2975
      %2977 = vrot.lane.b32.xlu0 %v2941, 8
      %v2978 = vpop.permute.xlu0 %2977
      %2979 = vrot.lane.b32.xlu0 %v2943, 8
      %v2980 = vpop.permute.xlu0 %2979
      %2981 = vrot.lane.b32.xlu0 %v2946, 8
      %v2982 = vpop.permute.xlu0 %2981
      %2983 = vrot.lane.b32.xlu0 %v2948, 8
      %v2984 = vpop.permute.xlu0 %2983
      %2985 = vrot.lane.b32.xlu0 %v2951, 8
      %v2986 = vpop.permute.xlu0 %2985
      %2987 = vrot.lane.b32.xlu0 %v2953, 8
      %v2988 = vpop.permute.xlu0 %2987
      %2989 = vrot.lane.b32.xlu0 %v2956, 8
      %v2990 = vpop.permute.xlu0 %2989
      %2991 = vrot.lane.b32.xlu0 %v2958, 8
      %v2992 = vpop.permute.xlu0 %2991
      %2993 = vrot.lane.b32.xlu0 %v2961, 8
      %v2994 = vpop.permute.xlu0 %2993
      %2995 = vrot.lane.b32.xlu0 %v2963, 8
      %v2996 = vpop.permute.xlu0 %2995
      %2997 = vrot.lane.b32.xlu0 %v2966, 8
      %v2998 = vpop.permute.xlu0 %2997
      %2999 = vrot.lane.b32.xlu0 %v2968, 8
      %v3000 = vpop.permute.xlu0 %2999
      %v3017 = vrot.slane %v2875, 2
      %v3018 = vrot.slane %v2876, 2
      %v3019 = vsel %vm456, %v3017, %v3018
      %v3020 = vrot.slane %v2877, 2
      %v3021 = vsel %vm456, %v3018, %v3020
      %v3022 = vrot.slane %v2878, 2
      %v3023 = vrot.slane %v2879, 2
      %v3024 = vsel %vm456, %v3022, %v3023
      %v3025 = vrot.slane %v2880, 2
      %v3026 = vsel %vm456, %v3023, %v3025
      %v3027 = vrot.slane %v2881, 2
      %v3028 = vrot.slane %v2882, 2
      %v3029 = vsel %vm456, %v3027, %v3028
      %v3030 = vrot.slane %v2883, 2
      %v3031 = vsel %vm456, %v3028, %v3030
      %v3032 = vrot.slane %v2884, 2
      %v3033 = vrot.slane %v2885, 2
      %v3034 = vsel %vm456, %v3032, %v3033
      %v3035 = vrot.slane %v2886, 2
      %v3036 = vsel %vm456, %v3033, %v3035
      %v3037 = vrot.slane %v2887, 2
      %v3038 = vrot.slane %v2888, 2
      %v3039 = vsel %vm456, %v3037, %v3038
      %v3040 = vrot.slane %v2889, 2
      %v3041 = vsel %vm456, %v3038, %v3040
      %v3042 = vrot.slane %v2890, 2
      %v3043 = vrot.slane %v2891, 2
      %v3044 = vsel %vm456, %v3042, %v3043
      %v3045 = vrot.slane %v2892, 2
      %v3046 = vsel %vm456, %v3043, %v3045
      %v3047 = vrot.slane %v2893, 2
      %v3048 = vrot.slane %v2894, 2
      %v3049 = vsel %vm456, %v3047, %v3048
      %v3050 = vrot.slane %v2895, 2
      %v3051 = vsel %vm456, %v3048, %v3050
      %v3052 = vrot.slane %v2896, 2
      %v3053 = vrot.slane %v2897, 2
      %v3054 = vsel %vm456, %v3052, %v3053
      %v3055 = vrot.slane %v2898, 2
      %v3056 = vsel %vm456, %v3053, %v3055
      %3057 = vrot.lane.b32.xlu0 %v3019, 16
      %v3058 = vpop.permute.xlu0 %3057
      %3059 = vrot.lane.b32.xlu0 %v3021, 16
      %v3060 = vpop.permute.xlu0 %3059
      %3061 = vrot.lane.b32.xlu0 %v3024, 16
      %v3062 = vpop.permute.xlu0 %3061
      %3063 = vrot.lane.b32.xlu0 %v3026, 16
      %v3064 = vpop.permute.xlu0 %3063
      %3065 = vrot.lane.b32.xlu0 %v3029, 16
      %v3066 = vpop.permute.xlu0 %3065
      %3067 = vrot.lane.b32.xlu0 %v3031, 16
      %v3068 = vpop.permute.xlu0 %3067
      %3069 = vrot.lane.b32.xlu0 %v3034, 16
      %v3070 = vpop.permute.xlu0 %3069
      %3071 = vrot.lane.b32.xlu0 %v3036, 16
      %v3072 = vpop.permute.xlu0 %3071
      %3073 = vrot.lane.b32.xlu0 %v3039, 16
      %v3074 = vpop.permute.xlu0 %3073
      %3075 = vrot.lane.b32.xlu0 %v3041, 16
      %v3076 = vpop.permute.xlu0 %3075
      %3077 = vrot.lane.b32.xlu0 %v3044, 16
      %v3078 = vpop.permute.xlu0 %3077
      %3079 = vrot.lane.b32.xlu0 %v3046, 16
      %v3080 = vpop.permute.xlu0 %3079
      %3081 = vrot.lane.b32.xlu0 %v3049, 16
      %v3082 = vpop.permute.xlu0 %3081
      %3083 = vrot.lane.b32.xlu0 %v3051, 16
      %v3084 = vpop.permute.xlu0 %3083
      %3085 = vrot.lane.b32.xlu0 %v3054, 16
      %v3086 = vpop.permute.xlu0 %3085
      %3087 = vrot.lane.b32.xlu0 %v3056, 16
      %v3088 = vpop.permute.xlu0 %3087
      %3107 = vrot.lane.b32.xlu0 %v2878, 24
      %v3108 = vpop.permute.xlu0 %3107
      %3109 = vrot.lane.b32.xlu0 %v2879, 24
      %v3110 = vpop.permute.xlu0 %3109
      %3111 = vrot.lane.b32.xlu0 %v2881, 24
      %v3112 = vpop.permute.xlu0 %3111
      %3113 = vrot.lane.b32.xlu0 %v2882, 24
      %v3114 = vpop.permute.xlu0 %3113
      %3115 = vrot.lane.b32.xlu0 %v2884, 24
      %v3116 = vpop.permute.xlu0 %3115
      %3117 = vrot.lane.b32.xlu0 %v2885, 24
      %v3118 = vpop.permute.xlu0 %3117
      %3119 = vrot.lane.b32.xlu0 %v2887, 24
      %v3120 = vpop.permute.xlu0 %3119
      %3121 = vrot.lane.b32.xlu0 %v2888, 24
      %v3122 = vpop.permute.xlu0 %3121
      %3123 = vrot.lane.b32.xlu0 %v2890, 24
      %v3124 = vpop.permute.xlu0 %3123
      %3125 = vrot.lane.b32.xlu0 %v2891, 24
      %v3126 = vpop.permute.xlu0 %3125
      %3127 = vrot.lane.b32.xlu0 %v2893, 24
      %v3128 = vpop.permute.xlu0 %3127
      %3129 = vrot.lane.b32.xlu0 %v2894, 24
      %v3130 = vpop.permute.xlu0 %3129
      %3131 = vrot.lane.b32.xlu0 %v2896, 24
      %v3132 = vpop.permute.xlu0 %3131
      %3133 = vrot.lane.b32.xlu0 %v2897, 24
      %v3134 = vpop.permute.xlu0 %3133
      %3135 = vrot.lane.b32.xlu0 %v2899, 24
      %v3136 = vpop.permute.xlu0 %3135
      %3137 = vrot.lane.b32.xlu0 %v2900, 24
      %v3138 = vpop.permute.xlu0 %3137
      %v3156 = vrot.slane %v2899, 1
      %v3157 = vrot.slane %v2900, 1
      %v3158 = vsel %vm315, %v3156, %v3157
      %v3159 = vrot.slane %v2901, 1
      %v3160 = vsel %vm315, %v3157, %v3159
      %3161 = vrot.lane.b32.xlu0 %v2936, 32
      %v3162 = vpop.permute.xlu0 %3161
      %3163 = vrot.lane.b32.xlu0 %v2938, 32
      %v3164 = vpop.permute.xlu0 %3163
      %3165 = vrot.lane.b32.xlu0 %v2941, 32
      %v3166 = vpop.permute.xlu0 %3165
      %3167 = vrot.lane.b32.xlu0 %v2943, 32
      %v3168 = vpop.permute.xlu0 %3167
      %3169 = vrot.lane.b32.xlu0 %v2946, 32
      %v3170 = vpop.permute.xlu0 %3169
      %3171 = vrot.lane.b32.xlu0 %v2948, 32
      %v3172 = vpop.permute.xlu0 %3171
      %3173 = vrot.lane.b32.xlu0 %v2951, 32
      %v3174 = vpop.permute.xlu0 %3173
      %3175 = vrot.lane.b32.xlu0 %v2953, 32
      %v3176 = vpop.permute.xlu0 %3175
      %3177 = vrot.lane.b32.xlu0 %v2956, 32
      %v3178 = vpop.permute.xlu0 %3177
      %3179 = vrot.lane.b32.xlu0 %v2958, 32
      %v3180 = vpop.permute.xlu0 %3179
      %3181 = vrot.lane.b32.xlu0 %v2961, 32
      %v3182 = vpop.permute.xlu0 %3181
      %3183 = vrot.lane.b32.xlu0 %v2963, 32
      %v3184 = vpop.permute.xlu0 %3183
      %3185 = vrot.lane.b32.xlu0 %v2966, 32
      %v3186 = vpop.permute.xlu0 %3185
      %3187 = vrot.lane.b32.xlu0 %v2968, 32
      %v3188 = vpop.permute.xlu0 %3187
      %3189 = vrot.lane.b32.xlu0 %v3158, 32
      %v3190 = vpop.permute.xlu0 %3189
      %3191 = vrot.lane.b32.xlu0 %v3160, 32
      %v3192 = vpop.permute.xlu0 %3191
      %v3209 = vrot.slane %v2899, 2
      %v3210 = vrot.slane %v2900, 2
      %v3211 = vsel %vm456, %v3209, %v3210
      %v3212 = vrot.slane %v2901, 2
      %v3213 = vsel %vm456, %v3210, %v3212
      %3214 = vrot.lane.b32.xlu0 %v3024, 40
      %v3215 = vpop.permute.xlu0 %3214
      %3216 = vrot.lane.b32.xlu0 %v3026, 40
      %v3217 = vpop.permute.xlu0 %3216
      %3218 = vrot.lane.b32.xlu0 %v3029, 40
      %v3219 = vpop.permute.xlu0 %3218
      %3220 = vrot.lane.b32.xlu0 %v3031, 40
      %v3221 = vpop.permute.xlu0 %3220
      %3222 = vrot.lane.b32.xlu0 %v3034, 40
      %v3223 = vpop.permute.xlu0 %3222
      %3224 = vrot.lane.b32.xlu0 %v3036, 40
      %v3225 = vpop.permute.xlu0 %3224
      %3226 = vrot.lane.b32.xlu0 %v3039, 40
      %v3227 = vpop.permute.xlu0 %3226
      %3228 = vrot.lane.b32.xlu0 %v3041, 40
      %v3229 = vpop.permute.xlu0 %3228
      %3230 = vrot.lane.b32.xlu0 %v3044, 40
      %v3231 = vpop.permute.xlu0 %3230
      %3232 = vrot.lane.b32.xlu0 %v3046, 40
      %v3233 = vpop.permute.xlu0 %3232
      %3234 = vrot.lane.b32.xlu0 %v3049, 40
      %v3235 = vpop.permute.xlu0 %3234
      %3236 = vrot.lane.b32.xlu0 %v3051, 40
      %v3237 = vpop.permute.xlu0 %3236
      %3238 = vrot.lane.b32.xlu0 %v3054, 40
      %v3239 = vpop.permute.xlu0 %3238
      %3240 = vrot.lane.b32.xlu0 %v3056, 40
      %v3241 = vpop.permute.xlu0 %3240
      %3242 = vrot.lane.b32.xlu0 %v3211, 40
      %v3243 = vpop.permute.xlu0 %3242
      %3244 = vrot.lane.b32.xlu0 %v3213, 40
      %v3245 = vpop.permute.xlu0 %3244
      %3264 = vrot.lane.b32.xlu0 %v2881, 48
      %v3265 = vpop.permute.xlu0 %3264
      %3266 = vrot.lane.b32.xlu0 %v2882, 48
      %v3267 = vpop.permute.xlu0 %3266
      %3268 = vrot.lane.b32.xlu0 %v2884, 48
      %v3269 = vpop.permute.xlu0 %3268
      %3270 = vrot.lane.b32.xlu0 %v2885, 48
      %v3271 = vpop.permute.xlu0 %3270
      %3272 = vrot.lane.b32.xlu0 %v2887, 48
      %v3273 = vpop.permute.xlu0 %3272
      %3274 = vrot.lane.b32.xlu0 %v2888, 48
      %v3275 = vpop.permute.xlu0 %3274
      %3276 = vrot.lane.b32.xlu0 %v2890, 48
      %v3277 = vpop.permute.xlu0 %3276
      %3278 = vrot.lane.b32.xlu0 %v2891, 48
      %v3279 = vpop.permute.xlu0 %3278
      %3280 = vrot.lane.b32.xlu0 %v2893, 48
      %v3281 = vpop.permute.xlu0 %3280
      %3282 = vrot.lane.b32.xlu0 %v2894, 48
      %v3283 = vpop.permute.xlu0 %3282
      %3284 = vrot.lane.b32.xlu0 %v2896, 48
      %v3285 = vpop.permute.xlu0 %3284
      %3286 = vrot.lane.b32.xlu0 %v2897, 48
      %v3287 = vpop.permute.xlu0 %3286
      %3288 = vrot.lane.b32.xlu0 %v2899, 48
      %v3289 = vpop.permute.xlu0 %3288
      %3290 = vrot.lane.b32.xlu0 %v2900, 48
      %v3291 = vpop.permute.xlu0 %3290
      %3292 = vrot.lane.b32.xlu0 %v2902, 48
      %v3293 = vpop.permute.xlu0 %3292
      %3294 = vrot.lane.b32.xlu0 %v2903, 48
      %v3295 = vpop.permute.xlu0 %3294
      %v3313 = vrot.slane %v2902, 1
      %v3314 = vrot.slane %v2903, 1
      %v3315 = vsel %vm315, %v3313, %v3314
      %v3316 = vrot.slane %v2904, 1
      %v3317 = vsel %vm315, %v3314, %v3316
      %3318 = vrot.lane.b32.xlu0 %v2941, 56
      %v3319 = vpop.permute.xlu0 %3318
      %3320 = vrot.lane.b32.xlu0 %v2943, 56
      %v3321 = vpop.permute.xlu0 %3320
      %3322 = vrot.lane.b32.xlu0 %v2946, 56
      %v3323 = vpop.permute.xlu0 %3322
      %3324 = vrot.lane.b32.xlu0 %v2948, 56
      %v3325 = vpop.permute.xlu0 %3324
      %3326 = vrot.lane.b32.xlu0 %v2951, 56
      %v3327 = vpop.permute.xlu0 %3326
      %3328 = vrot.lane.b32.xlu0 %v2953, 56
      %v3329 = vpop.permute.xlu0 %3328
      %3330 = vrot.lane.b32.xlu0 %v2956, 56
      %v3331 = vpop.permute.xlu0 %3330
      %3332 = vrot.lane.b32.xlu0 %v2958, 56
      %v3333 = vpop.permute.xlu0 %3332
      %3334 = vrot.lane.b32.xlu0 %v2961, 56
      %v3335 = vpop.permute.xlu0 %3334
      %3336 = vrot.lane.b32.xlu0 %v2963, 56
      %v3337 = vpop.permute.xlu0 %3336
      %3338 = vrot.lane.b32.xlu0 %v2966, 56
      %v3339 = vpop.permute.xlu0 %3338
      %3340 = vrot.lane.b32.xlu0 %v2968, 56
      %v3341 = vpop.permute.xlu0 %3340
      %3342 = vrot.lane.b32.xlu0 %v3158, 56
      %v3343 = vpop.permute.xlu0 %3342
      %3344 = vrot.lane.b32.xlu0 %v3160, 56
      %v3345 = vpop.permute.xlu0 %3344
      %3346 = vrot.lane.b32.xlu0 %v3315, 56
      %v3347 = vpop.permute.xlu0 %3346
      %3348 = vrot.lane.b32.xlu0 %v3317, 56
      %v3349 = vpop.permute.xlu0 %3348
      %v3366 = vrot.slane %v2902, 2
      %v3367 = vrot.slane %v2903, 2
      %v3368 = vsel %vm456, %v3366, %v3367
      %v3369 = vrot.slane %v2904, 2
      %v3370 = vsel %vm456, %v3367, %v3369
      %3371 = vrot.lane.b32.xlu0 %v3029, 64
      %v3372 = vpop.permute.xlu0 %3371
      %3373 = vrot.lane.b32.xlu0 %v3031, 64
      %v3374 = vpop.permute.xlu0 %3373
      %3375 = vrot.lane.b32.xlu0 %v3034, 64
      %v3376 = vpop.permute.xlu0 %3375
      %3377 = vrot.lane.b32.xlu0 %v3036, 64
      %v3378 = vpop.permute.xlu0 %3377
      %3379 = vrot.lane.b32.xlu0 %v3039, 64
      %v3380 = vpop.permute.xlu0 %3379
      %3381 = vrot.lane.b32.xlu0 %v3041, 64
      %v3382 = vpop.permute.xlu0 %3381
      %3383 = vrot.lane.b32.xlu0 %v3044, 64
      %v3384 = vpop.permute.xlu0 %3383
      %3385 = vrot.lane.b32.xlu0 %v3046, 64
      %v3386 = vpop.permute.xlu0 %3385
      %3387 = vrot.lane.b32.xlu0 %v3049, 64
      %v3388 = vpop.permute.xlu0 %3387
      %3389 = vrot.lane.b32.xlu0 %v3051, 64
      %v3390 = vpop.permute.xlu0 %3389
      %3391 = vrot.lane.b32.xlu0 %v3054, 64
      %v3392 = vpop.permute.xlu0 %3391
      %3393 = vrot.lane.b32.xlu0 %v3056, 64
      %v3394 = vpop.permute.xlu0 %3393
      %3395 = vrot.lane.b32.xlu0 %v3211, 64
      %v3396 = vpop.permute.xlu0 %3395
      %3397 = vrot.lane.b32.xlu0 %v3213, 64
      %v3398 = vpop.permute.xlu0 %3397
      %3399 = vrot.lane.b32.xlu0 %v3368, 64
      %v3400 = vpop.permute.xlu0 %3399
      %3401 = vrot.lane.b32.xlu0 %v3370, 64
      %v3402 = vpop.permute.xlu0 %3401
      %v3419 = vsel %vm1194, %v2875, %v2970
      %v3420 = vsel %vm1194, %v2876, %v2972
      %v3421 = vsel %vm1194, %v2878, %v2974
      %v3422 = vsel %vm1194, %v2879, %v2976
      %v3423 = vsel %vm1194, %v2881, %v2978
      %v3424 = vsel %vm1194, %v2882, %v2980
      %v3425 = vsel %vm1194, %v2884, %v2982
      %v3426 = vsel %vm1194, %v2885, %v2984
      %v3427 = vsel %vm1194, %v2887, %v2986
      %v3428 = vsel %vm1194, %v2888, %v2988
      %v3429 = vsel %vm1194, %v2890, %v2990
      %v3430 = vsel %vm1194, %v2891, %v2992
      %v3431 = vsel %vm1194, %v2893, %v2994
      %v3432 = vsel %vm1194, %v2894, %v2996
      %v3433 = vsel %vm1194, %v2896, %v2998
      %v3434 = vsel %vm1194, %v2897, %v3000
      %v3435 = vsel %vm1256, %v3419, %v3058
      %v3436 = vsel %vm1256, %v3420, %v3060
      %v3437 = vsel %vm1256, %v3421, %v3062
      %v3438 = vsel %vm1256, %v3422, %v3064
      %v3439 = vsel %vm1256, %v3423, %v3066
      %v3440 = vsel %vm1256, %v3424, %v3068
      %v3441 = vsel %vm1256, %v3425, %v3070
      %v3442 = vsel %vm1256, %v3426, %v3072
      %v3443 = vsel %vm1256, %v3427, %v3074
      %v3444 = vsel %vm1256, %v3428, %v3076
      %v3445 = vsel %vm1256, %v3429, %v3078
      %v3446 = vsel %vm1256, %v3430, %v3080
      %v3447 = vsel %vm1256, %v3431, %v3082
      %v3448 = vsel %vm1256, %v3432, %v3084
      %v3449 = vsel %vm1256, %v3433, %v3086
      %v3450 = vsel %vm1256, %v3434, %v3088
      %v3451 = vsel %vm1318, %v3435, %v3108
      %v3452 = vsel %vm1318, %v3436, %v3110
      %v3453 = vsel %vm1318, %v3437, %v3112
      %v3454 = vsel %vm1318, %v3438, %v3114
      %v3455 = vsel %vm1318, %v3439, %v3116
      %v3456 = vsel %vm1318, %v3440, %v3118
      %v3457 = vsel %vm1318, %v3441, %v3120
      %v3458 = vsel %vm1318, %v3442, %v3122
      %v3459 = vsel %vm1318, %v3443, %v3124
      %v3460 = vsel %vm1318, %v3444, %v3126
      %v3461 = vsel %vm1318, %v3445, %v3128
      %v3462 = vsel %vm1318, %v3446, %v3130
      %v3463 = vsel %vm1318, %v3447, %v3132
      %v3464 = vsel %vm1318, %v3448, %v3134
      %v3465 = vsel %vm1318, %v3449, %v3136
      %v3466 = vsel %vm1318, %v3450, %v3138
      %v3467 = vsel %vm1380, %v3451, %v3162
      %v3468 = vsel %vm1380, %v3452, %v3164
      %v3469 = vsel %vm1380, %v3453, %v3166
      %v3470 = vsel %vm1380, %v3454, %v3168
      %v3471 = vsel %vm1380, %v3455, %v3170
      %v3472 = vsel %vm1380, %v3456, %v3172
      %v3473 = vsel %vm1380, %v3457, %v3174
      %v3474 = vsel %vm1380, %v3458, %v3176
      %v3475 = vsel %vm1380, %v3459, %v3178
      %v3476 = vsel %vm1380, %v3460, %v3180
      %v3477 = vsel %vm1380, %v3461, %v3182
      %v3478 = vsel %vm1380, %v3462, %v3184
      %v3479 = vsel %vm1380, %v3463, %v3186
      %v3480 = vsel %vm1380, %v3464, %v3188
      %v3481 = vsel %vm1380, %v3465, %v3190
      %v3482 = vsel %vm1380, %v3466, %v3192
      %vm3483 = vcmask 326656
      %v3484 = vsel %vm3483, %v3467, %v3215
      %v3485 = vsel %vm3483, %v3468, %v3217
      %v3486 = vsel %vm3483, %v3469, %v3219
      %v3487 = vsel %vm3483, %v3470, %v3221
      %v3488 = vsel %vm3483, %v3471, %v3223
      %v3489 = vsel %vm3483, %v3472, %v3225
      %v3490 = vsel %vm3483, %v3473, %v3227
      %v3491 = vsel %vm3483, %v3474, %v3229
      %v3492 = vsel %vm3483, %v3475, %v3231
      %v3493 = vsel %vm3483, %v3476, %v3233
      %v3494 = vsel %vm3483, %v3477, %v3235
      %v3495 = vsel %vm3483, %v3478, %v3237
      %v3496 = vsel %vm3483, %v3479, %v3239
      %v3497 = vsel %vm3483, %v3480, %v3241
      %v3498 = vsel %vm3483, %v3481, %v3243
      %v3499 = vsel %vm3483, %v3482, %v3245
      %vm3500 = vcmask 392192
      %v3501 = vsel %vm3500, %v3484, %v3265
      %v3502 = vsel %vm3500, %v3485, %v3267
      %v3503 = vsel %vm3500, %v3486, %v3269
      %v3504 = vsel %vm3500, %v3487, %v3271
      %v3505 = vsel %vm3500, %v3488, %v3273
      %v3506 = vsel %vm3500, %v3489, %v3275
      %v3507 = vsel %vm3500, %v3490, %v3277
      %v3508 = vsel %vm3500, %v3491, %v3279
      %v3509 = vsel %vm3500, %v3492, %v3281
      %v3510 = vsel %vm3500, %v3493, %v3283
      %v3511 = vsel %vm3500, %v3494, %v3285
      %v3512 = vsel %vm3500, %v3495, %v3287
      %v3513 = vsel %vm3500, %v3496, %v3289
      %v3514 = vsel %vm3500, %v3497, %v3291
      %v3515 = vsel %vm3500, %v3498, %v3293
      %v3516 = vsel %vm3500, %v3499, %v3295
      %vm3517 = vcmask 457728
      %v3518 = vsel %vm3517, %v3501, %v3319
      %v3519 = vsel %vm3517, %v3502, %v3321
      %v3520 = vsel %vm3517, %v3503, %v3323
      %v3521 = vsel %vm3517, %v3504, %v3325
      %v3522 = vsel %vm3517, %v3505, %v3327
      %v3523 = vsel %vm3517, %v3506, %v3329
      %v3524 = vsel %vm3517, %v3507, %v3331
      %v3525 = vsel %vm3517, %v3508, %v3333
      %v3526 = vsel %vm3517, %v3509, %v3335
      %v3527 = vsel %vm3517, %v3510, %v3337
      %v3528 = vsel %vm3517, %v3511, %v3339
      %v3529 = vsel %vm3517, %v3512, %v3341
      %v3530 = vsel %vm3517, %v3513, %v3343
      %v3531 = vsel %vm3517, %v3514, %v3345
      %v3532 = vsel %vm3517, %v3515, %v3347
      %v3533 = vsel %vm3517, %v3516, %v3349
      %vm3534 = vcmask 523264
      %v3535 = vsel %vm3534, %v3518, %v3372
      %v3536 = vsel %vm3534, %v3519, %v3374
      %v3537 = vsel %vm3534, %v3520, %v3376
      %v3538 = vsel %vm3534, %v3521, %v3378
      %v3539 = vsel %vm3534, %v3522, %v3380
      %v3540 = vsel %vm3534, %v3523, %v3382
      %v3541 = vsel %vm3534, %v3524, %v3384
      %v3542 = vsel %vm3534, %v3525, %v3386
      %v3543 = vsel %vm3534, %v3526, %v3388
      %v3544 = vsel %vm3534, %v3527, %v3390
      %v3545 = vsel %vm3534, %v3528, %v3392
      %v3546 = vsel %vm3534, %v3529, %v3394
      %v3547 = vsel %vm3534, %v3530, %v3396
      %v3548 = vsel %vm3534, %v3531, %v3398
      %v3549 = vsel %vm3534, %v3532, %v3400
      %v3550 = vsel %vm3534, %v3533, %v3402
      %v3551 = vpack.c.bf16 %v3535, %v3535
      %v3552 = vpack.c.bf16 %v3536, %v3536
      %v3553 = vpack.c.bf16 %v3537, %v3537
      %v3554 = vpack.c.bf16 %v3538, %v3538
      %v3555 = vpack.c.bf16 %v3539, %v3539
      %v3556 = vpack.c.bf16 %v3540, %v3540
      %v3557 = vpack.c.bf16 %v3541, %v3541
      %v3558 = vpack.c.bf16 %v3542, %v3542
      %v3559 = vpack.c.bf16 %v3543, %v3543
      %v3560 = vpack.c.bf16 %v3544, %v3544
      %v3561 = vpack.c.bf16 %v3545, %v3545
      %v3562 = vpack.c.bf16 %v3546, %v3546
      %v3563 = vpack.c.bf16 %v3547, %v3547
      %v3564 = vpack.c.bf16 %v3548, %v3548
      %v3565 = vpack.c.bf16 %v3549, %v3549
      %v3566 = vpack.c.bf16 %v3550, %v3550
      %v3567 = vld [vmem:[%s3] sm:$0xf]
      %v3568 = vld [vmem:[%s3 + $0x4] sm:$0xf]
      %v3569 = vld [vmem:[%s3 + $0x8] sm:$0xf]
      %v3570 = vld [vmem:[%s3 + $0xc] sm:$0xf]
      %v3571 = vld [vmem:[%s3 + $0x10] sm:$0xf]
      %v3572 = vld [vmem:[%s3 + $0x14] sm:$0xf]
      %v3573 = vld [vmem:[%s3 + $0x18] sm:$0xf]
      %v3574 = vld [vmem:[%s3 + $0x1c] sm:$0xf]
      %v3575 = vld [vmem:[%s3 + $0x20] sm:$0xf]
      %v3576 = vld [vmem:[%s4] sm:$0x1]
      %v3578 = vperm.slane %v3576, 0
      %v3596 = vunpack.c.l.b16 %v3551
      %v3597 = vunpack.c.l.b16 %v3552
      %v3598 = vunpack.c.l.b16 %v3553
      %v3599 = vunpack.c.l.b16 %v3554
      %v3600 = vunpack.c.l.b16 %v3555
      %v3601 = vunpack.c.l.b16 %v3556
      %v3602 = vunpack.c.l.b16 %v3557
      %v3603 = vunpack.c.l.b16 %v3558
      %v3604 = vunpack.c.l.b16 %v3559
      %v3605 = vunpack.c.l.b16 %v3560
      %v3606 = vunpack.c.l.b16 %v3561
      %v3607 = vunpack.c.l.b16 %v3562
      %v3608 = vunpack.c.l.b16 %v3563
      %v3609 = vunpack.c.l.b16 %v3564
      %v3610 = vunpack.c.l.b16 %v3565
      %v3611 = vunpack.c.l.b16 %v3566
      %v3612 = vpack.c.b16 %v3597, %v3596
      %v3613 = vpack.c.b16 %v3599, %v3598
      %v3614 = vpack.c.b16 %v3601, %v3600
      %v3615 = vpack.c.b16 %v3603, %v3602
      %v3616 = vpack.c.b16 %v3605, %v3604
      %v3617 = vpack.c.b16 %v3607, %v3606
      %v3618 = vpack.c.b16 %v3609, %v3608
      %v3619 = vpack.c.b16 %v3611, %v3610
      %v3629 = vunpack.c.l.b16 %v3567
      %v3630 = vunpack.c.l.b16 %v3568
      %v3631 = vunpack.c.l.b16 %v3569
      %v3632 = vunpack.c.l.b16 %v3570
      %v3633 = vunpack.c.l.b16 %v3571
      %v3634 = vunpack.c.l.b16 %v3572
      %v3635 = vunpack.c.l.b16 %v3573
      %v3636 = vunpack.c.l.b16 %v3574
      %v3637 = vunpack.c.l.b16 %v3575
      %v3638 = vpack.c.b16 %v3630, %v3629
      %v3639 = vpack.c.b16 %v3632, %v3631
      %v3640 = vpack.c.b16 %v3634, %v3633
      %v3641 = vpack.c.b16 %v3636, %v3635
      %v3642 = vpack.c.b16 %v3637, %v3637
      %vm3647 = vcmask 588800
      %v3649 = vsel %vm3647, %v3612, 0
      %v3652 = vsel %vm3647, %v3613, 0
      %v3655 = vsel %vm3647, %v3614, 0
      %v3658 = vsel %vm3647, %v3615, 0
      %v3661 = vsel %vm3647, %v3616, 0
      %v3664 = vsel %vm3647, %v3617, 0
      %v3667 = vsel %vm3647, %v3618, 0
      %v3670 = vsel %vm3647, %v3619, 0
      %vm3672 = vcmask 1043456
      %v3674 = vsel %vm3672, %v3642, 0
      %3676 = vmatpush.bf16.msra.mxu0 0
      %3677 = vmatpush.bf16.msra.mxu0 0
      %3678 = vmatpush.bf16.msra.mxu0 0
      %3679 = vmatpush.bf16.msra.mxu0 %v3674
      %3680 = vmatpush.bf16.msra.mxu0 %v3641
      %3681 = vmatpush.bf16.msra.mxu0 %v3640
      %3682 = vmatpush.bf16.msra.mxu0 %v3639
      %3683 = vmatpush.bf16.msra.mxu0 %v3638
      %3684 = vmatmul.bf16.gmra.mxu0 %v3649
      %v3685 = vpop.f32.mrf.mxu0
      %v3686 = vadd.f32 %v3578, %v3685
      %v3687 = vpop.f32.mrf.mxu0
      %v3688 = vadd.f32 %v3578, %v3687
      %3689 = vmatmul.bf16.gmra.mxu0 %v3652
      %v3690 = vpop.f32.mrf.mxu0
      %v3691 = vadd.f32 %v3578, %v3690
      %v3692 = vpop.f32.mrf.mxu0
      %v3693 = vadd.f32 %v3578, %v3692
      %3694 = vmatmul.bf16.gmra.mxu0 %v3655
      %v3695 = vpop.f32.mrf.mxu0
      %v3696 = vadd.f32 %v3578, %v3695
      %v3697 = vpop.f32.mrf.mxu0
      %v3698 = vadd.f32 %v3578, %v3697
      %3699 = vmatmul.bf16.gmra.mxu0 %v3658
      %v3700 = vpop.f32.mrf.mxu0
      %v3701 = vadd.f32 %v3578, %v3700
      %v3702 = vpop.f32.mrf.mxu0
      %v3703 = vadd.f32 %v3578, %v3702
      %3704 = vmatmul.bf16.gmra.mxu0 %v3661
      %v3705 = vpop.f32.mrf.mxu0
      %v3706 = vadd.f32 %v3578, %v3705
      %v3707 = vpop.f32.mrf.mxu0
      %v3708 = vadd.f32 %v3578, %v3707
      %3709 = vmatmul.bf16.gmra.mxu0 %v3664
      %v3710 = vpop.f32.mrf.mxu0
      %v3711 = vadd.f32 %v3578, %v3710
      %v3712 = vpop.f32.mrf.mxu0
      %v3713 = vadd.f32 %v3578, %v3712
      %3714 = vmatmul.bf16.gmra.mxu0 %v3667
      %v3715 = vpop.f32.mrf.mxu0
      %v3716 = vadd.f32 %v3578, %v3715
      %v3717 = vpop.f32.mrf.mxu0
      %v3718 = vadd.f32 %v3578, %v3717
      %3719 = vmatmul.bf16.gmra.mxu0 %v3670
      %v3720 = vpop.f32.mrf.mxu0
      %v3721 = vadd.f32 %v3578, %v3720
      %v3722 = vpop.f32.mrf.mxu0
      %v3723 = vadd.f32 %v3578, %v3722
      %3724 = vdwg.mxu0
      %v3725 = vmax.f32 %v3686, 0.0
      %v3726 = vmax.f32 %v3688, 0.0
      %v3727 = vmax.f32 %v3691, 0.0
      %v3728 = vmax.f32 %v3693, 0.0
      %v3729 = vmax.f32 %v3696, 0.0
      %v3730 = vmax.f32 %v3698, 0.0
      %v3731 = vmax.f32 %v3701, 0.0
      %v3732 = vmax.f32 %v3703, 0.0
      %v3733 = vmax.f32 %v3706, 0.0
      %v3734 = vmax.f32 %v3708, 0.0
      %v3735 = vmax.f32 %v3711, 0.0
      %v3736 = vmax.f32 %v3713, 0.0
      %v3737 = vmax.f32 %v3716, 0.0
      %v3738 = vmax.f32 %v3718, 0.0
      %v3739 = vmax.f32 %v3721, 0.0
      %v3740 = vmax.f32 %v3723, 0.0
      %v3749 = vrot.slane %v3727, 7
      %v3750 = vsel %vm1513, %v3749, %v3725
      %v3751 = vrot.slane %v3729, 6
      %v3752 = vsel %vm1517, %v3751, %v3750
      %v3753 = vrot.slane %v3731, 5
      %v3754 = vsel %vm1521, %v3753, %v3752
      %v3755 = vrot.slane %v3733, 4
      %vm3756 = vcmask 1044484
      %v3757 = vsel %vm3756, %v3755, %v3754
      %v3758 = vrot.slane %v3735, 3
      %vm3759 = vcmask 1045509
      %v3760 = vsel %vm3759, %v3758, %v3757
      %v3761 = vrot.slane %v3737, 2
      %vm3762 = vcmask 1046534
      %v3763 = vsel %vm3762, %v3761, %v3760
      %v3764 = vrot.slane %v3739, 1
      %vm3765 = vcmask 1047559
      %v3766 = vsel %vm3765, %v3764, %v3763
      %v3768 = vrot.slane %v3725, 1
      %v3769 = vsel %vm1513, %v3727, %v3768
      %v3770 = vrot.slane %v3729, 7
      %v3771 = vsel %vm1517, %v3770, %v3769
      %v3772 = vrot.slane %v3731, 6
      %v3773 = vsel %vm1521, %v3772, %v3771
      %v3774 = vrot.slane %v3733, 5
      %v3775 = vsel %vm3756, %v3774, %v3773
      %v3776 = vrot.slane %v3735, 4
      %v3777 = vsel %vm3759, %v3776, %v3775
      %v3778 = vrot.slane %v3737, 3
      %v3779 = vsel %vm3762, %v3778, %v3777
      %v3780 = vrot.slane %v3739, 2
      %v3781 = vsel %vm3765, %v3780, %v3779
      %3782 = vrot.lane.b32.xlu0 %v3781, 8
      %v3783 = vpop.permute.xlu0 %3782
      %v3785 = vrot.slane %v3725, 2
      %v3786 = vrot.slane %v3727, 1
      %v3787 = vsel %vm1513, %v3786, %v3785
      %v3788 = vsel %vm1517, %v3729, %v3787
      %v3789 = vrot.slane %v3731, 7
      %v3790 = vsel %vm1521, %v3789, %v3788
      %v3791 = vrot.slane %v3733, 6
      %v3792 = vsel %vm3756, %v3791, %v3790
      %v3793 = vrot.slane %v3735, 5
      %v3794 = vsel %vm3759, %v3793, %v3792
      %v3795 = vrot.slane %v3737, 4
      %v3796 = vsel %vm3762, %v3795, %v3794
      %v3797 = vrot.slane %v3739, 3
      %v3798 = vsel %vm3765, %v3797, %v3796
      %3799 = vrot.lane.b32.xlu0 %v3798, 16
      %v3800 = vpop.permute.xlu0 %3799
      %v3802 = vrot.slane %v3725, 3
      %v3803 = vrot.slane %v3727, 2
      %v3804 = vsel %vm1513, %v3803, %v3802
      %v3805 = vrot.slane %v3729, 1
      %v3806 = vsel %vm1517, %v3805, %v3804
      %v3807 = vsel %vm1521, %v3731, %v3806
      %v3808 = vrot.slane %v3733, 7
      %v3809 = vsel %vm3756, %v3808, %v3807
      %v3810 = vrot.slane %v3735, 6
      %v3811 = vsel %vm3759, %v3810, %v3809
      %v3812 = vrot.slane %v3737, 5
      %v3813 = vsel %vm3762, %v3812, %v3811
      %v3814 = vrot.slane %v3739, 4
      %v3815 = vsel %vm3765, %v3814, %v3813
      %3816 = vrot.lane.b32.xlu0 %v3815, 24
      %v3817 = vpop.permute.xlu0 %3816
      %v3819 = vrot.slane %v3725, 4
      %v3820 = vrot.slane %v3727, 3
      %v3821 = vsel %vm1513, %v3820, %v3819
      %v3822 = vrot.slane %v3729, 2
      %v3823 = vsel %vm1517, %v3822, %v3821
      %v3824 = vrot.slane %v3731, 1
      %v3825 = vsel %vm1521, %v3824, %v3823
      %v3826 = vsel %vm3756, %v3733, %v3825
      %v3827 = vrot.slane %v3735, 7
      %v3828 = vsel %vm3759, %v3827, %v3826
      %v3829 = vrot.slane %v3737, 6
      %v3830 = vsel %vm3762, %v3829, %v3828
      %v3831 = vrot.slane %v3739, 5
      %v3832 = vsel %vm3765, %v3831, %v3830
      %3833 = vrot.lane.b32.xlu0 %v3832, 32
      %v3834 = vpop.permute.xlu0 %3833
      %v3836 = vrot.slane %v3725, 5
      %v3837 = vrot.slane %v3727, 4
      %v3838 = vsel %vm1513, %v3837, %v3836
      %v3839 = vrot.slane %v3729, 3
      %v3840 = vsel %vm1517, %v3839, %v3838
      %v3841 = vrot.slane %v3731, 2
      %v3842 = vsel %vm1521, %v3841, %v3840
      %v3843 = vrot.slane %v3733, 1
      %v3844 = vsel %vm3756, %v3843, %v3842
      %v3845 = vsel %vm3759, %v3735, %v3844
      %v3846 = vrot.slane %v3737, 7
      %v3847 = vsel %vm3762, %v3846, %v3845
      %v3848 = vrot.slane %v3739, 6
      %v3849 = vsel %vm3765, %v3848, %v3847
      %3850 = vrot.lane.b32.xlu0 %v3849, 40
      %v3851 = vpop.permute.xlu0 %3850
      %v3853 = vrot.slane %v3725, 6
      %v3854 = vrot.slane %v3727, 5
      %v3855 = vsel %vm1513, %v3854, %v3853
      %v3856 = vrot.slane %v3729, 4
      %v3857 = vsel %vm1517, %v3856, %v3855
      %v3858 = vrot.slane %v3731, 3
      %v3859 = vsel %vm1521, %v3858, %v3857
      %v3860 = vrot.slane %v3733, 2
      %v3861 = vsel %vm3756, %v3860, %v3859
      %v3862 = vrot.slane %v3735, 1
      %v3863 = vsel %vm3759, %v3862, %v3861
      %v3864 = vsel %vm3762, %v3737, %v3863
      %v3865 = vrot.slane %v3739, 7
      %v3866 = vsel %vm3765, %v3865, %v3864
      %3867 = vrot.lane.b32.xlu0 %v3866, 48
      %v3868 = vpop.permute.xlu0 %3867
      %v3870 = vrot.slane %v3725, 7
      %v3871 = vrot.slane %v3727, 6
      %v3872 = vsel %vm1513, %v3871, %v3870
      %v3873 = vrot.slane %v3729, 5
      %v3874 = vsel %vm1517, %v3873, %v3872
      %v3875 = vrot.slane %v3731, 4
      %v3876 = vsel %vm1521, %v3875, %v3874
      %v3877 = vrot.slane %v3733, 3
      %v3878 = vsel %vm3756, %v3877, %v3876
      %v3879 = vrot.slane %v3735, 2
      %v3880 = vsel %vm3759, %v3879, %v3878
      %v3881 = vrot.slane %v3737, 1
      %v3882 = vsel %vm3762, %v3881, %v3880
      %v3883 = vsel %vm3765, %v3739, %v3882
      %3884 = vrot.lane.b32.xlu0 %v3883, 56
      %v3885 = vpop.permute.xlu0 %3884
      %v3895 = vrot.slane %v3728, 7
      %v3896 = vsel %vm1513, %v3895, %v3726
      %v3897 = vrot.slane %v3730, 6
      %v3898 = vsel %vm1517, %v3897, %v3896
      %v3899 = vrot.slane %v3732, 5
      %v3900 = vsel %vm1521, %v3899, %v3898
      %v3901 = vrot.slane %v3734, 4
      %v3902 = vsel %vm3756, %v3901, %v3900
      %v3903 = vrot.slane %v3736, 3
      %v3904 = vsel %vm3759, %v3903, %v3902
      %v3905 = vrot.slane %v3738, 2
      %v3906 = vsel %vm3762, %v3905, %v3904
      %v3907 = vrot.slane %v3740, 1
      %v3908 = vsel %vm3765, %v3907, %v3906
      %3909 = vrot.lane.b32.xlu0 %v3908, 64
      %v3910 = vpop.permute.xlu0 %3909
      %v3912 = vrot.slane %v3726, 1
      %v3913 = vsel %vm1513, %v3728, %v3912
      %v3914 = vrot.slane %v3730, 7
      %v3915 = vsel %vm1517, %v3914, %v3913
      %v3916 = vrot.slane %v3732, 6
      %v3917 = vsel %vm1521, %v3916, %v3915
      %v3918 = vrot.slane %v3734, 5
      %v3919 = vsel %vm3756, %v3918, %v3917
      %v3920 = vrot.slane %v3736, 4
      %v3921 = vsel %vm3759, %v3920, %v3919
      %v3922 = vrot.slane %v3738, 3
      %v3923 = vsel %vm3762, %v3922, %v3921
      %v3924 = vrot.slane %v3740, 2
      %v3925 = vsel %vm3765, %v3924, %v3923
      %3926 = vrot.lane.b32.xlu0 %v3925, 72
      %v3927 = vpop.permute.xlu0 %3926
      %v3929 = vrot.slane %v3726, 2
      %v3930 = vrot.slane %v3728, 1
      %v3931 = vsel %vm1513, %v3930, %v3929
      %v3932 = vsel %vm1517, %v3730, %v3931
      %v3933 = vrot.slane %v3732, 7
      %v3934 = vsel %vm1521, %v3933, %v3932
      %v3935 = vrot.slane %v3734, 6
      %v3936 = vsel %vm3756, %v3935, %v3934
      %v3937 = vrot.slane %v3736, 5
      %v3938 = vsel %vm3759, %v3937, %v3936
      %v3939 = vrot.slane %v3738, 4
      %v3940 = vsel %vm3762, %v3939, %v3938
      %v3941 = vrot.slane %v3740, 3
      %v3942 = vsel %vm3765, %v3941, %v3940
      %3943 = vrot.lane.b32.xlu0 %v3942, 80
      %v3944 = vpop.permute.xlu0 %3943
      %v3946 = vrot.slane %v3726, 3
      %v3947 = vrot.slane %v3728, 2
      %v3948 = vsel %vm1513, %v3947, %v3946
      %v3949 = vrot.slane %v3730, 1
      %v3950 = vsel %vm1517, %v3949, %v3948
      %v3951 = vsel %vm1521, %v3732, %v3950
      %v3952 = vrot.slane %v3734, 7
      %v3953 = vsel %vm3756, %v3952, %v3951
      %v3954 = vrot.slane %v3736, 6
      %v3955 = vsel %vm3759, %v3954, %v3953
      %v3956 = vrot.slane %v3738, 5
      %v3957 = vsel %vm3762, %v3956, %v3955
      %v3958 = vrot.slane %v3740, 4
      %v3959 = vsel %vm3765, %v3958, %v3957
      %3960 = vrot.lane.b32.xlu0 %v3959, 88
      %v3961 = vpop.permute.xlu0 %3960
      %v3963 = vrot.slane %v3726, 4
      %v3964 = vrot.slane %v3728, 3
      %v3965 = vsel %vm1513, %v3964, %v3963
      %v3966 = vrot.slane %v3730, 2
      %v3967 = vsel %vm1517, %v3966, %v3965
      %v3968 = vrot.slane %v3732, 1
      %v3969 = vsel %vm1521, %v3968, %v3967
      %v3970 = vsel %vm3756, %v3734, %v3969
      %v3971 = vrot.slane %v3736, 7
      %v3972 = vsel %vm3759, %v3971, %v3970
      %v3973 = vrot.slane %v3738, 6
      %v3974 = vsel %vm3762, %v3973, %v3972
      %v3975 = vrot.slane %v3740, 5
      %v3976 = vsel %vm3765, %v3975, %v3974
      %3977 = vrot.lane.b32.xlu0 %v3976, 96
      %v3978 = vpop.permute.xlu0 %3977
      %v3980 = vrot.slane %v3726, 5
      %v3981 = vrot.slane %v3728, 4
      %v3982 = vsel %vm1513, %v3981, %v3980
      %v3983 = vrot.slane %v3730, 3
      %v3984 = vsel %vm1517, %v3983, %v3982
      %v3985 = vrot.slane %v3732, 2
      %v3986 = vsel %vm1521, %v3985, %v3984
      %v3987 = vrot.slane %v3734, 1
      %v3988 = vsel %vm3756, %v3987, %v3986
      %v3989 = vsel %vm3759, %v3736, %v3988
      %v3990 = vrot.slane %v3738, 7
      %v3991 = vsel %vm3762, %v3990, %v3989
      %v3992 = vrot.slane %v3740, 6
      %v3993 = vsel %vm3765, %v3992, %v3991
      %3994 = vrot.lane.b32.xlu0 %v3993, 104
      %v3995 = vpop.permute.xlu0 %3994
      %v3997 = vrot.slane %v3726, 6
      %v3998 = vrot.slane %v3728, 5
      %v3999 = vsel %vm1513, %v3998, %v3997
      %v4000 = vrot.slane %v3730, 4
      %v4001 = vsel %vm1517, %v4000, %v3999
      %v4002 = vrot.slane %v3732, 3
      %v4003 = vsel %vm1521, %v4002, %v4001
      %v4004 = vrot.slane %v3734, 2
      %v4005 = vsel %vm3756, %v4004, %v4003
      %v4006 = vrot.slane %v3736, 1
      %v4007 = vsel %vm3759, %v4006, %v4005
      %v4008 = vsel %vm3762, %v3738, %v4007
      %v4009 = vrot.slane %v3740, 7
      %v4010 = vsel %vm3765, %v4009, %v4008
      %4011 = vrot.lane.b32.xlu0 %v4010, 112
      %v4012 = vpop.permute.xlu0 %4011
      %v4014 = vrot.slane %v3726, 7
      %v4015 = vrot.slane %v3728, 6
      %v4016 = vsel %vm1513, %v4015, %v4014
      %v4017 = vrot.slane %v3730, 5
      %v4018 = vsel %vm1517, %v4017, %v4016
      %v4019 = vrot.slane %v3732, 4
      %v4020 = vsel %vm1521, %v4019, %v4018
      %v4021 = vrot.slane %v3734, 3
      %v4022 = vsel %vm3756, %v4021, %v4020
      %v4023 = vrot.slane %v3736, 2
      %v4024 = vsel %vm3759, %v4023, %v4022
      %v4025 = vrot.slane %v3738, 1
      %v4026 = vsel %vm3762, %v4025, %v4024
      %v4027 = vsel %vm3765, %v3740, %v4026
      %4028 = vrot.lane.b32.xlu0 %v4027, 120
      %v4029 = vpop.permute.xlu0 %4028
      %v4031 = vsel %vm1194, %v3766, %v3783
      %v4032 = vsel %vm1256, %v4031, %v3800
      %v4033 = vsel %vm1318, %v4032, %v3817
      %v4034 = vsel %vm1380, %v4033, %v3834
      %v4035 = vsel %vm3483, %v4034, %v3851
      %v4036 = vsel %vm3500, %v4035, %v3868
      %v4037 = vsel %vm3517, %v4036, %v3885
      %v4038 = vsel %vm3534, %v4037, %v3910
      %v4039 = vsel %vm3647, %v4038, %v3927
      %vm4040 = vcmask 654336
      %v4041 = vsel %vm4040, %v4039, %v3944
      %vm4042 = vcmask 719872
      %v4043 = vsel %vm4042, %v4041, %v3961
      %vm4044 = vcmask 785408
      %v4045 = vsel %vm4044, %v4043, %v3978
      %vm4046 = vcmask 850944
      %v4047 = vsel %vm4046, %v4045, %v3995
      %vm4048 = vcmask 916480
      %v4049 = vsel %vm4048, %v4047, %v4012
      %vm4050 = vcmask 982016
      %v4051 = vsel %vm4050, %v4049, %v4029
      %4052 = vst [vmem:[%s244] sm:$0xff] %v4051
      %p4053 = scmp.lt.s32.totalorder %s20, 1
      %s4054 = scalar_select %p4053, %s20, 1
      %p4055 = scmp.lt.s32.totalorder %s21, 1
      %s4056 = scalar_select %p4055, %s21, 1
      %s4057 = smul.addr %s4054, 2
      %s4058 = sadd.s32 %s4056, %s4057
      %s4059 = smul.addr %s4058, 8
      %s4060 = scalar_lea.vmem %s5, %s4059
      // Predicated region
      $region41: #{double_conv.1} parent=39 // pred_check
        %p4061 = pneg %p158
      $region42: #{double_conv.1} parent=39 // pred_check_branch
        %4063 = sbr.rel (%p4061) target = $region44
      $region43: #{double_conv.1} parent=39 // pred_region
        _
      $region44: #{double_conv.1} parent=39 // pred_fallthru
        _
    $region40: #{double_conv.1} parent=5 // pred_fallthru
      _
    %p4064 = scmp.le.s32.totalorder 2, %s11
    // Predicated region
    $region45: #{double_conv.1} parent=5 // pred_check
      %p4065 = pneg %p4064
    $region46: #{double_conv.1} parent=5 // pred_check_branch
      %4067 = sbr.rel (%p4065) target = $region48
    $region47: #{double_conv.1} parent=5 // pred_region
      %s4068 = ssub.s32 %s11, 2
      // Predicated region
      $region49: #{double_conv.1} parent=47 // pred_check
        %p4069 = pneg %p164
      $region50: #{double_conv.1} parent=47 // pred_check_branch
        %4071 = sbr.rel (%p4069) target = $region52
      $region51: #{double_conv.1} parent=47 // pred_region
        %p4072 = scmp.lt.s32.totalorder %s22, 1
        %s4073 = scalar_select %p4072, %s22, 1
        %p4074 = scmp.lt.s32.totalorder %s23, 1
        %s4075 = scalar_select %p4074, %s23, 1
        %s4076 = smul.addr %s4073, 2
        %s4077 = sadd.s32 %s4075, %s4076
        %s4078 = smul.addr %s4077, 8
        %s4079 = scalar_lea.vmem %s5, %s4078
      $region52: #{double_conv.1} parent=47 // pred_fallthru
        _
    $region48: #{double_conv.1} parent=5 // pred_fallthru
      _
  $region6: #{double_conv.1} parent=0 // loop_footer
    %s15 = sadd.s32 1, %s11
  $region7: #{double_conv.1} parent=0 // loop_footer_branch
    %10 = sbr.rel target = $region3
  $region8: #{double_conv.1} parent=0 // loop_exit
    _

</llo_original>
